<compile_context>
chip_gen: v5e
topology: v5e:2x2
jax: 0.10.0
libtpu: 0.0.40
codegen_flags: <defaults>
</compile_context>

<pallas_src>
import jax
import jax.numpy as jnp
from jax.experimental import pallas as pl
from jax.experimental.pallas import tpu as pltpu


IN_PLANES = 2048   # self.in_planes
PLANCES = 768      # self.plances
PATCH = 4          # patch size of the stand-in backbone stem
BN_EPS = 1e-5
_CHUNK = 256       # in-kernel M sub-tile (MXU/VPU overlap across chunks)


def _round_up(x, m):
    return (x + m - 1) // m * m


# ----------------------------------------------------------------------------
# Fused kernel: per M row-tile, sub-tiled over M in 256-row chunks:
#   h_j = relu(X_j @ W1 + b1)     (chunk, 2048) f32 -> bf16, stays in VMEM
#   o_j = relu(h_j @ W2 + b2)     (chunk, 768)  -> store
# No K grid axis, no cross-iteration accumulator, no full-tile h barrier.
# ----------------------------------------------------------------------------
def _dsta_fused_kernel(x_ref, w1_ref, b1_ref, w2_ref, b2_ref, o_ref):
    tm = x_ref.shape[0]
    for start in range(0, tm, _CHUNK):          # static, fully unrolled
        size = min(_CHUNK, tm - start)          # ragged last chunk is fine
        xs = x_ref[pl.ds(start, size), :]
        # stem 1x1-conv-as-matmul: bf16 x bf16 -> f32 accum, + bias, ReLU
        h = jnp.dot(xs, w1_ref[...], preferred_element_type=jnp.float32)
        h = jnp.maximum(h + b1_ref[...], 0.0).astype(jnp.bfloat16)
        # down_channel: 1x1 conv (2048->768) with folded BN scale, + bias, ReLU
        y = jnp.dot(h, w2_ref[...], preferred_element_type=jnp.float32)
        o_ref[pl.ds(start, size), :] = (
            jnp.maximum(y + b2_ref[...], 0.0).astype(o_ref.dtype))


def _choose_tm(m_rows):
    """Row-tile size: >= 2 tiles for M > 32 (both v7x TCs busy), tiles grow to
    ~1024 rows for large M, 16-aligned so row padding stays minimal."""
    if m_rows <= 32:
        return _round_up(max(m_rows, 16), 16)
    n_tiles = max(2, pl.cdiv(m_rows, 1024))
    return _round_up(pl.cdiv(m_rows, n_tiles), 16)


def dsta_fused_head(patches, w1, b1, w2, b2, *, out_dtype=jnp.bfloat16):
    """relu( relu(patches @ w1 + b1) @ w2 + b2 ) -> (M, 768) in `out_dtype`.

    patches: (M, K) float; cast to bf16 (K stays at its true 48, no lane pad).
    w1: (K, 2048)   bf16  (stem scale pre-folded)
    b1: (1, 2048)   f32
    w2: (2048, 768) bf16  (BN scale pre-folded)
    b2: (1, 768)    f32
    """
    M, K = patches.shape
    K1, C1 = w1.shape
    C1b, C2 = w2.shape
    assert K1 == K and C1 == IN_PLANES and C2 == PLANCES and C1b == C1
    assert b1.shape == (1, C1) and b2.shape == (1, C2)

    tm = _choose_tm(M)
    m_pad = _round_up(M, tm)

    x = patches.astype(jnp.bfloat16)
    if m_pad != M:
        # Cheap: only (m_pad - M) rows of a 48-wide bf16 array.
        x = jnp.pad(x, ((0, m_pad - M), (0, 0)))

    out_bytes = jnp.dtype(out_dtype).itemsize
    flops = 2 * m_pad * (K * C1 + C1 * C2)
    bytes_accessed = (m_pad * K * 2 + m_pad * C2 * out_bytes
                      + K * C1 * 2 + C1 * 4 + C1 * C2 * 2 + C2 * 4)

    out = pl.pallas_call(
        _dsta_fused_kernel,
        out_shape=jax.ShapeDtypeStruct((m_pad, C2), out_dtype),
        grid_spec=pltpu.PrefetchScalarGridSpec(
            num_scalar_prefetch=0,
            grid=(m_pad // tm,),
            in_specs=[
                pl.BlockSpec((tm, K), lambda i: (i, 0)),    # X row tile (K = full dim)
                pl.BlockSpec((K, C1), lambda i: (0, 0)),    # W1: resident in VMEM
                pl.BlockSpec((1, C1), lambda i: (0, 0)),    # b1: resident
                pl.BlockSpec((C1, C2), lambda i: (0, 0)),   # W2: resident (3 MiB bf16)
                pl.BlockSpec((1, C2), lambda i: (0, 0)),    # b2: resident
            ],
            out_specs=pl.BlockSpec((tm, C2), lambda i: (i, 0)),
        ),
        compiler_params=pltpu.CompilerParams(
            dimension_semantics=("parallel",),
            # Explicit: tm up to ~1024 needs more than v5e's 16 MiB scoped default;
            # 32 MiB is safely under every generation's physical VMEM.
            vmem_limit_bytes=32 * 1024 * 1024,
        ),
        cost_estimate=pl.CostEstimate(
            flops=int(flops), transcendentals=0, bytes_accessed=int(bytes_accessed)),
    )(x, w1, b1, w2, b2)

    return out if m_pad == M else out[:M]


# ----------------------------------------------------------------------------
# Parameters (deterministic synthetic values; scales folded, weights bf16)
# ----------------------------------------------------------------------------
def init_params(c_in=3):
    key = jax.random.PRNGKey(42)
    k_stem, k_conv = jax.random.split(key, 2)
    k = c_in * PATCH * PATCH

    # Stand-in backbone stem: (c*P*P) -> 2048 projection.
    stem_w = jax.random.normal(k_stem, (k, IN_PLANES), jnp.float32) * 0.05
    stem_scale = jnp.ones((1, IN_PLANES), jnp.float32)
    stem_bias = jnp.zeros((1, IN_PLANES), jnp.float32)

    # down_channel: Conv2d(2048, 768, k=1, bias=False) weight (out, in, 1, 1)
    # reshaped to matmul form (in, out).
    conv_w = jax.random.normal(k_conv, (PLANCES, IN_PLANES), jnp.float32) * 0.02
    dc_w = conv_w.T  # (2048, 768)

    # BatchNorm2d(768) eval-mode parameters folded into per-channel scale/bias.
    ch = jnp.arange(PLANCES, dtype=jnp.float32)
    gamma = 1.0 + 0.05 * jnp.cos(ch * 0.1)
    beta = 0.02 * jnp.sin(ch * 0.1)
    running_mean = 0.01 * jnp.cos(ch * 0.05)
    running_var = 1.0 + 0.1 * jnp.abs(jnp.sin(ch * 0.07))
    bn_scale = gamma / jnp.sqrt(running_var + BN_EPS)
    bn_bias = beta - running_mean * bn_scale

    # Fold scales into weight columns (host-side, once); cast MXU operands to
    # bf16 (accumulation stays f32 in-kernel).  No K padding.
    w1 = (stem_w * stem_scale).astype(jnp.bfloat16)                   # (48, 2048)
    w2 = (dc_w * bn_scale.reshape(1, PLANCES)).astype(jnp.bfloat16)   # (2048, 768)

    return {
        "w1": w1,                                # (48, 2048) bf16
        "b1": stem_bias,                         # (1, 2048) f32
        "w2": w2,                                # (2048, 768) bf16
        "b2": bn_bias.reshape(1, PLANCES),       # (1, 768) f32
    }


# ----------------------------------------------------------------------------
# DSTA forward
# ----------------------------------------------------------------------------
def dsta_forward(x, params, *, channels_last=True, out_dtype=jnp.bfloat16):
    """x: (b, t, c, h, w) -> feature map.

    Default (fast path): (b*t, h/4, w/4, 768) bf16 channels-last.
    channels_last=False, out_dtype=jnp.float32 gives NCHW f32 parity with the
    PyTorch head (adds one XLA transpose pass over the output).
    """
    b, t, c, h, w = x.shape
    n = b * t
    x = x.astype(jnp.bfloat16)                       # cast fused into the patch pass
    x = x.reshape(n, c, h, w)                        # x.view(b*t, c, h, w)

    # --- stand-in backbone (see TODO at top): 4x4 patch-embed -> 2048 ch ------
    # TODO(synk): the 6-D transpose is an XLA-side layout op; for realistic
    # resolutions, feed NHWC and fold the patching into the kernel index_map.
    hp, wp = h // PATCH, w // PATCH
    patches = x.reshape(n, c, hp, PATCH, wp, PATCH)
    patches = patches.transpose(0, 2, 4, 1, 3, 5)    # (n, hp, wp, c, P, P)
    patches = patches.reshape(n * hp * wp, c * PATCH * PATCH)

    # --- fused: stem matmul + ReLU + down_channel(2048->768) + BN + ReLU ------
    out = dsta_fused_head(patches, params["w1"], params["b1"],
                          params["w2"], params["b2"], out_dtype=out_dtype)

    out = out.reshape(n, hp, wp, PLANCES)            # channels-last feature map
    if channels_last:
        return out
    return out.transpose(0, 3, 1, 2)                 # NCHW parity with PyTorch head


if __name__ == "__main__":
    # Small deterministic example input consistent with (b, t, c, h, w).
    b, t, c, h, w = 2, 2, 3, 16, 16
    x = jax.random.normal(jax.random.PRNGKey(0), (b, t, c, h, w), jnp.float32)
    params = init_params(c_in=c)

    # Fast default path: channels-last, bf16 output (no post-kernel transpose).
    feat = jax.block_until_ready(jax.jit(dsta_forward)(x, params))
    assert feat.shape == (b * t, h // PATCH, w // PATCH, PLANCES), feat.shape
    assert feat.dtype == jnp.bfloat16
    assert bool(jnp.all(jnp.isfinite(feat.astype(jnp.float32))))
    assert bool(jnp.all(feat >= 0))                  # ReLU epilogue

    # PyTorch-layout parity path: NCHW, f32.
    fwd_nchw = jax.jit(lambda xx, pp: dsta_forward(
        xx, pp, channels_last=False, out_dtype=jnp.float32))
    feat_nchw = jax.block_until_ready(fwd_nchw(x, params))
    assert feat_nchw.shape == (b * t, PLANCES, h // PATCH, w // PATCH)
    assert feat_nchw.dtype == jnp.float32
    diff = jnp.max(jnp.abs(feat_nchw.transpose(0, 2, 3, 1)
                           - feat.astype(jnp.float32)))
    assert bool(diff < 5e-2), float(diff)

    print("KERNEL_OK")
</pallas_src>

<mosaic_0001>
module attributes {stable_mosaic.version = 11 : i64} {
  func.func @_dsta_fused_kernel(%arg0: i32, %arg1: memref<32x48xbf16, #tpu.memory_space<vmem>>, %arg2: memref<48x2048xbf16, #tpu.memory_space<vmem>>, %arg3: memref<1x2048xf32, #tpu.memory_space<vmem>>, %arg4: memref<2048x768xbf16, #tpu.memory_space<vmem>>, %arg5: memref<1x768xf32, #tpu.memory_space<vmem>>, %arg6: memref<32x768xbf16, #tpu.memory_space<vmem>>) attributes {dimension_semantics = [#tpu.dimension_semantics<parallel>], iteration_bounds = array<i64: 2>, scalar_prefetch = 0 : i64, scratch_operands = 0 : i64, tpu.core_type = #tpu.core_type<tc>, window_params = [{transform_indices = @transform_0, window_bounds = array<i64: 32, 48>}, {pipeline_mode = #tpu.pipeline_mode<synchronous>, transform_indices = @transform_1, window_bounds = array<i64: 48, 2048>}, {pipeline_mode = #tpu.pipeline_mode<synchronous>, transform_indices = @transform_2, window_bounds = array<i64: 1, 2048>}, {pipeline_mode = #tpu.pipeline_mode<synchronous>, transform_indices = @transform_3, window_bounds = array<i64: 2048, 768>}, {pipeline_mode = #tpu.pipeline_mode<synchronous>, transform_indices = @transform_4, window_bounds = array<i64: 1, 768>}, {transform_indices = @transform_5, window_bounds = array<i64: 32, 768>}]} {
    %c0 = arith.constant 0 : index
    %c0_0 = arith.constant 0 : index
    %0 = vector.load %arg1[%c0, %c0_0] : memref<32x48xbf16, #tpu.memory_space<vmem>>, vector<32x48xbf16>
    %c0_1 = arith.constant 0 : index
    %c0_2 = arith.constant 0 : index
    %1 = vector.load %arg2[%c0_1, %c0_2] : memref<48x2048xbf16, #tpu.memory_space<vmem>>, vector<48x2048xbf16>
    %cst = arith.constant dense<0.000000e+00> : vector<32x2048xf32>
    %2 = tpu.matmul %0, %1, %cst {dimension_numbers = #tpu.dot_dimension_numbers<[1], [0], [0], [1], [0, 0, 1, 1], [], []>} : vector<32x48xbf16>, vector<48x2048xbf16>, vector<32x2048xf32> -> vector<32x2048xf32>
    %c0_3 = arith.constant 0 : index
    %c0_4 = arith.constant 0 : index
    %3 = vector.load %arg3[%c0_3, %c0_4] : memref<1x2048xf32, #tpu.memory_space<vmem>>, vector<1x2048xf32>
    %4 = vector.broadcast %3 : vector<1x2048xf32> to vector<32x2048xf32>
    %5 = arith.addf %2, %4 : vector<32x2048xf32>
    %cst_5 = arith.constant 0.000000e+00 : f32
    %6 = vector.broadcast %cst_5 : f32 to vector<32x2048xf32>
    %7 = arith.maximumf %5, %6 : vector<32x2048xf32>
    %8 = arith.truncf %7 : vector<32x2048xf32> to vector<32x2048xbf16>
    %c0_6 = arith.constant 0 : index
    %c0_7 = arith.constant 0 : index
    %9 = vector.load %arg4[%c0_6, %c0_7] : memref<2048x768xbf16, #tpu.memory_space<vmem>>, vector<2048x768xbf16>
    %cst_8 = arith.constant dense<0.000000e+00> : vector<32x768xf32>
    %10 = tpu.matmul %8, %9, %cst_8 {dimension_numbers = #tpu.dot_dimension_numbers<[1], [0], [0], [1], [0, 0, 1, 1], [], []>} : vector<32x2048xbf16>, vector<2048x768xbf16>, vector<32x768xf32> -> vector<32x768xf32>
    %c0_9 = arith.constant 0 : index
    %c0_10 = arith.constant 0 : index
    %11 = vector.load %arg5[%c0_9, %c0_10] : memref<1x768xf32, #tpu.memory_space<vmem>>, vector<1x768xf32>
    %12 = vector.broadcast %11 : vector<1x768xf32> to vector<32x768xf32>
    %13 = arith.addf %10, %12 : vector<32x768xf32>
    %cst_11 = arith.constant 0.000000e+00 : f32
    %14 = vector.broadcast %cst_11 : f32 to vector<32x768xf32>
    %15 = arith.maximumf %13, %14 : vector<32x768xf32>
    %16 = arith.truncf %15 : vector<32x768xf32> to vector<32x768xbf16>
    %c0_12 = arith.constant 0 : index
    %c0_13 = arith.constant 0 : index
    %17 = vector.load %arg6[%c0_12, %c0_13] : memref<32x768xbf16, #tpu.memory_space<vmem>>, vector<32x768xbf16>
    tpu.vector_store %arg6[%c0_12, %c0_13], %16 {strides = array<i32>} : memref<32x768xbf16, #tpu.memory_space<vmem>>, vector<32x768xbf16>,
    return
  }
  func.func @transform_0(%arg0: i32) -> (i32, i32) {
    %c0_i32 = arith.constant 0 : i32
    %c0_i32_0 = arith.constant 0 : i32
    return %arg0, %c0_i32 : i32, i32
  }
  func.func @transform_1(%arg0: i32) -> (i32, i32) {
    %c0_i32 = arith.constant 0 : i32
    %c0_i32_0 = arith.constant 0 : i32
    %c0_i32_1 = arith.constant 0 : i32
    return %c0_i32, %c0_i32_0 : i32, i32
  }
  func.func @transform_2(%arg0: i32) -> (i32, i32) {
    %c0_i32 = arith.constant 0 : i32
    %c0_i32_0 = arith.constant 0 : i32
    %c0_i32_1 = arith.constant 0 : i32
    return %c0_i32, %c0_i32_0 : i32, i32
  }
  func.func @transform_3(%arg0: i32) -> (i32, i32) {
    %c0_i32 = arith.constant 0 : i32
    %c0_i32_0 = arith.constant 0 : i32
    %c0_i32_1 = arith.constant 0 : i32
    return %c0_i32, %c0_i32_0 : i32, i32
  }
  func.func @transform_4(%arg0: i32) -> (i32, i32) {
    %c0_i32 = arith.constant 0 : i32
    %c0_i32_0 = arith.constant 0 : i32
    %c0_i32_1 = arith.constant 0 : i32
    return %c0_i32, %c0_i32_0 : i32, i32
  }
  func.func @transform_5(%arg0: i32) -> (i32, i32) {
    %c0_i32 = arith.constant 0 : i32
    %c0_i32_0 = arith.constant 0 : i32
    return %arg0, %c0_i32 : i32, i32
  }
}

</mosaic_0001>

<llo_original>
// kernel: dsta_forward.1
$region0: #{dsta_forward.1}
  #allocation0 [shape = 'u32[]', space=smem, size = 0x4, offset = 0x4, fixed_abs, tag = 'smem constant byte address 0x4 - core index']
  #allocation1 [shape = 'u32[72,128]{1,0:T(1,128)}', space=vmem, size = 0x9000, scoped, tag = 'internal scratch']
  %s0 = inlined_call_operand.vmem [shape: bf16[64,48], index: 0, kind: input, shape index: {}]
  %s1 = inlined_call_operand.hbm [shape: bf16[48,2048], index: 1, kind: input, shape index: {}]
  %s2 = inlined_call_operand.hbm [shape: f32[1,2048], index: 2, kind: input, shape index: {}]
  %s3 = inlined_call_operand.hbm [shape: bf16[2048,768], index: 3, kind: input, shape index: {}]
  %s4 = inlined_call_operand.hbm [shape: f32[1,768], index: 4, kind: input, shape index: {}]
  %s5 = inlined_call_operand.vmem [shape: bf16[64,768], index: 5, kind: output, shape index: {}]
  %s6 = sld [smem:[#allocation0]]
  $region69: #{dsta_forward.1} parent=0
    _
  %s8 = ssub.s32 1, %s6
  %s9 = scalar_select 0, %s8, %s6
  $region1: #{dsta_forward.1} parent=0
    #allocation2 [shape = 'u8[196608]{0}', space=vmem, size = 0x30000, scoped, tag = 'input window, operand 1, single buffered']
    #allocation3 [shape = 's32[2]{0}', space=sflag, size = 0x8, scoped, tag = 'scoped memory for dsta_forward.1']
    #allocation4 [shape = 'u8[8192]{0}', space=vmem, size = 0x2000, scoped, tag = 'input window, operand 2, single buffered']
    #allocation5 [shape = 's32[1]{0}', space=sflag, size = 0x4, scoped, tag = 'scoped memory for dsta_forward.1']
    #allocation6 [shape = 'u8[3145728]{0}', space=vmem, size = 0x300000, scoped, tag = 'input window, operand 3, single buffered']
    #allocation7 [shape = 'u8[3072]{0}', space=vmem, size = 0xc00, scoped, tag = 'input window, operand 4, single buffered']
    #allocation8 [shape = 's32[1]{0}', space=sflag, size = 0x4, scoped, tag = 'scoped memory for dsta_forward.1']
    %10 = vsyncpa [#allocation3], 0
    %11 = vsyncpa [#allocation5], 0
    %12 = vsyncpa [#allocation8], 0
    loop: start=0, step=1, limit=4
    $region2: #{dsta_forward.1} parent=1 // loop_pre_header
      _
    $region3: #{dsta_forward.1} parent=1 // loop_header
      %s14 = sphi 0, %s18
      %p15 = scmp.ge.s32.totalorder %s14, 4
      %s24 = sphi 0, %s26
      %s27 = sphi 0, %s24
      %s28 = sphi 0, %s27
      %s44 = sphi 0, %s28
      %s48 = sphi 0, %s48
      %s50 = sphi 0, %s48
      %s51 = sphi 0, %s50
      %s65 = sphi 0, %s51
      %s69 = sphi 0, %s69
      %s71 = sphi 0, %s69
      %s72 = sphi 0, %s71
      %s86 = sphi 0, %s72
      %s90 = sphi 0, %s90
      %s92 = sphi 0, %s90
      %s93 = sphi 0, %s92
      %s107 = sphi 0, %s93
      %s111 = sphi 0, %s111
      %s113 = sphi 0, %s111
      %s114 = sphi 0, %s113
      %s128 = sphi 0, %s114
      %s134 = sphi 0, %s136
      %s137 = sphi 0, %s134
      %s138 = sphi 0, %s137
      %s154 = sphi 0, %s138
    $region4: #{dsta_forward.1} parent=1 // loop_header_branch
      %17 = sbr.rel (%p15) target = $region8
    $region5: #{dsta_forward.1} parent=1 // loop_body
      %s19 = ssub.s32 %s14, 1
      %s20 = ssub.s32 %s14, 2
      %s21 = sadd.s32 %s14, 1
      %s22 = ssub.s32 %s14, %s21
      %p23 = scmp.eq.s32.totalorder %s22, 0
      %s25 = sadd.s32 %s24, 1
      %s26 = scalar_select %p23, %s24, %s25
      %p29 = pneg %p23
      %p30 = scmp.eq.s32.totalorder %s14, 1
      %p31 = por %p29, %p30
      %p32 = scmp.ne.s32.totalorder %s24, %s27
      %p33 = scmp.eq.s32.totalorder %s14, 0
      %p34 = por %p32, %p33
      %p35 = scmp.ne.s32.totalorder %s24, %s27
      %p36 = scmp.eq.s32.totalorder %s19, 1
      %p37 = por %p35, %p36
      %p38 = scmp.ne.s32.totalorder %s27, %s28
      %p39 = scmp.eq.s32.totalorder %s19, 0
      %p40 = por %p38, %p39
      %p41 = scmp.ne.s32.totalorder %s27, %s28
      %p42 = scmp.eq.s32.totalorder %s20, 1
      %p43 = por %p41, %p42
      %p45 = scmp.ne.s32.totalorder %s28, %s44
      %p46 = scmp.eq.s32.totalorder %s20, 0
      %p47 = por %p45, %p46
      %s49 = sadd.s32 %s48, 1
      %p52 = scmp.eq.s32.totalorder %s14, 1
      %p53 = scmp.ne.s32.totalorder %s48, %s50
      %p54 = scmp.eq.s32.totalorder %s14, 0
      %p55 = por %p53, %p54
      %p56 = scmp.ne.s32.totalorder %s48, %s50
      %p57 = scmp.eq.s32.totalorder %s19, 1
      %p58 = por %p56, %p57
      %p59 = scmp.ne.s32.totalorder %s50, %s51
      %p60 = scmp.eq.s32.totalorder %s19, 0
      %p61 = por %p59, %p60
      %p62 = scmp.ne.s32.totalorder %s50, %s51
      %p63 = scmp.eq.s32.totalorder %s20, 1
      %p64 = por %p62, %p63
      %p66 = scmp.ne.s32.totalorder %s51, %s65
      %p67 = scmp.eq.s32.totalorder %s20, 0
      %p68 = por %p66, %p67
      %s70 = sadd.s32 %s69, 1
      %p73 = scmp.eq.s32.totalorder %s14, 1
      %p74 = scmp.ne.s32.totalorder %s69, %s71
      %p75 = scmp.eq.s32.totalorder %s14, 0
      %p76 = por %p74, %p75
      %p77 = scmp.ne.s32.totalorder %s69, %s71
      %p78 = scmp.eq.s32.totalorder %s19, 1
      %p79 = por %p77, %p78
      %p80 = scmp.ne.s32.totalorder %s71, %s72
      %p81 = scmp.eq.s32.totalorder %s19, 0
      %p82 = por %p80, %p81
      %p83 = scmp.ne.s32.totalorder %s71, %s72
      %p84 = scmp.eq.s32.totalorder %s20, 1
      %p85 = por %p83, %p84
      %p87 = scmp.ne.s32.totalorder %s72, %s86
      %p88 = scmp.eq.s32.totalorder %s20, 0
      %p89 = por %p87, %p88
      %s91 = sadd.s32 %s90, 1
      %p94 = scmp.eq.s32.totalorder %s14, 1
      %p95 = scmp.ne.s32.totalorder %s90, %s92
      %p96 = scmp.eq.s32.totalorder %s14, 0
      %p97 = por %p95, %p96
      %p98 = scmp.ne.s32.totalorder %s90, %s92
      %p99 = scmp.eq.s32.totalorder %s19, 1
      %p100 = por %p98, %p99
      %p101 = scmp.ne.s32.totalorder %s92, %s93
      %p102 = scmp.eq.s32.totalorder %s19, 0
      %p103 = por %p101, %p102
      %p104 = scmp.ne.s32.totalorder %s92, %s93
      %p105 = scmp.eq.s32.totalorder %s20, 1
      %p106 = por %p104, %p105
      %p108 = scmp.ne.s32.totalorder %s93, %s107
      %p109 = scmp.eq.s32.totalorder %s20, 0
      %p110 = por %p108, %p109
      %s112 = sadd.s32 %s111, 1
      %p115 = scmp.eq.s32.totalorder %s14, 1
      %p116 = scmp.ne.s32.totalorder %s111, %s113
      %p117 = scmp.eq.s32.totalorder %s14, 0
      %p118 = por %p116, %p117
      %p119 = scmp.ne.s32.totalorder %s111, %s113
      %p120 = scmp.eq.s32.totalorder %s19, 1
      %p121 = por %p119, %p120
      %p122 = scmp.ne.s32.totalorder %s113, %s114
      %p123 = scmp.eq.s32.totalorder %s19, 0
      %p124 = por %p122, %p123
      %p125 = scmp.ne.s32.totalorder %s113, %s114
      %p126 = scmp.eq.s32.totalorder %s20, 1
      %p127 = por %p125, %p126
      %p129 = scmp.ne.s32.totalorder %s114, %s128
      %p130 = scmp.eq.s32.totalorder %s20, 0
      %p131 = por %p129, %p130
      %s132 = ssub.s32 %s14, %s21
      %p133 = scmp.eq.s32.totalorder %s132, 0
      %s135 = sadd.s32 %s134, 1
      %s136 = scalar_select %p133, %s134, %s135
      %p139 = pneg %p133
      %p140 = scmp.eq.s32.totalorder %s14, 1
      %p141 = por %p139, %p140
      %p142 = scmp.ne.s32.totalorder %s134, %s137
      %p143 = scmp.eq.s32.totalorder %s14, 0
      %p144 = por %p142, %p143
      %p145 = scmp.ne.s32.totalorder %s134, %s137
      %p146 = scmp.eq.s32.totalorder %s19, 1
      %p147 = por %p145, %p146
      %p148 = scmp.ne.s32.totalorder %s137, %s138
      %p149 = scmp.eq.s32.totalorder %s19, 0
      %p150 = por %p148, %p149
      %p151 = scmp.ne.s32.totalorder %s137, %s138
      %p152 = scmp.eq.s32.totalorder %s20, 1
      %p153 = por %p151, %p152
      %p155 = scmp.ne.s32.totalorder %s138, %s154
      %p156 = scmp.eq.s32.totalorder %s20, 0
      %p157 = por %p155, %p156
      %p158 = scmp.le.s32.totalorder 1, %s14
      %p159 = scmp.lt.s32.totalorder %s14, 3
      %p160 = pnand %p158, %p159
      %p161 = pneg %p160
      // Predicated region
      $region9: #{dsta_forward.1} parent=5 // pred_check
        _
      $region10: #{dsta_forward.1} parent=5 // pred_check_branch
        %163 = sbr.rel (%p160) target = $region12
      $region11: #{dsta_forward.1} parent=5 // pred_region
        %s164 = ssub.s32 %s14, 1
        // Predicated region
        $region13: #{dsta_forward.1} parent=11 // pred_check
          %p165 = pneg %p61
        $region14: #{dsta_forward.1} parent=11 // pred_check_branch
          %167 = sbr.rel (%p165) target = $region16
        $region15: #{dsta_forward.1} parent=11 // pred_region
          %169 = vsyncadd [#allocation3], 0
          %s170 = sshll.u32 %s1, 4
          %s171 = int_to_ptr.hbm [resolvable:$true] %s170
          %s172 = sshll.u32 [#allocation2], 4
          %s173 = int_to_ptr.vmem [resolvable:$true] %s172
          %178 = dma.hbm_to_vmem [thread:$0]  %s171, 6144, %s173, [#allocation3], 1024, 1024, 64
        $region16: #{dsta_forward.1} parent=11 // pred_fallthru
          _
        // Predicated region
        $region17: #{dsta_forward.1} parent=11 // pred_check
          %p179 = pneg %p82
        $region18: #{dsta_forward.1} parent=11 // pred_check_branch
          %181 = sbr.rel (%p179) target = $region20
        $region19: #{dsta_forward.1} parent=11 // pred_region
          %183 = vsyncadd [#allocation5], 0
          %s185 = sshll.u32 %s2, 4
          %s186 = int_to_ptr.hbm [resolvable:$true] %s185
          %s187 = sshll.u32 [#allocation4], 4
          %s188 = int_to_ptr.vmem [resolvable:$true] %s187
          %190 = dma.hbm_to_vmem [thread:$0]  %s186, 256, %s188, [#allocation5]
        $region20: #{dsta_forward.1} parent=11 // pred_fallthru
          _
        // Predicated region
        $region21: #{dsta_forward.1} parent=11 // pred_check
          %p191 = pneg %p103
        $region22: #{dsta_forward.1} parent=11 // pred_check_branch
          %193 = sbr.rel (%p191) target = $region24
        $region23: #{dsta_forward.1} parent=11 // pred_region
          %195 = vsyncadd [#allocation5], 0
          %s196 = sshll.u32 %s3, 4
          %s197 = int_to_ptr.hbm [resolvable:$true] %s196
          %s198 = sshll.u32 [#allocation6], 4
          %s199 = int_to_ptr.vmem [resolvable:$true] %s198
          %204 = dma.hbm_to_vmem [thread:$0]  %s197, 98304, %s199, [#allocation5], 384, 384, 24
        $region24: #{dsta_forward.1} parent=11 // pred_fallthru
          _
        // Predicated region
        $region25: #{dsta_forward.1} parent=11 // pred_check
          %p205 = pneg %p124
        $region26: #{dsta_forward.1} parent=11 // pred_check_branch
          %207 = sbr.rel (%p205) target = $region28
        $region27: #{dsta_forward.1} parent=11 // pred_region
          %209 = vsyncadd [#allocation8], 0
          %s211 = sshll.u32 %s4, 4
          %s212 = int_to_ptr.hbm [resolvable:$true] %s211
          %s213 = sshll.u32 [#allocation7], 4
          %s214 = int_to_ptr.vmem [resolvable:$true] %s213
          %216 = dma.hbm_to_vmem [thread:$0]  %s212, 96, %s214, [#allocation8]
        $region28: #{dsta_forward.1} parent=11 // pred_fallthru
          _
      $region12: #{dsta_forward.1} parent=5 // pred_fallthru
        _
      %p217 = scmp.lt.s32.totalorder %s14, 2
      // Predicated region
      $region29: #{dsta_forward.1} parent=5 // pred_check
        %p218 = pneg %p217
      $region30: #{dsta_forward.1} parent=5 // pred_check_branch
        %220 = sbr.rel (%p218) target = $region32
      $region31: #{dsta_forward.1} parent=5 // pred_region
        // Predicated region
        $region33: #{dsta_forward.1} parent=31 // pred_check
          %p221 = pneg %p34
        $region34: #{dsta_forward.1} parent=31 // pred_check_branch
          %223 = sbr.rel (%p221) target = $region36
        $region35: #{dsta_forward.1} parent=31 // pred_region
          %s224 = smul.u32 4, %s14
          %p225 = scmp.lt.s32.totalorder %s224, 7
          %s226 = scalar_select %p225, %s224, 7
          %s227 = smul.addr %s226, 4
          %s228 = scalar_lea.vmem %s0, %s227
          %s229 = smul.u32 4, %s14
        $region36: #{dsta_forward.1} parent=31 // pred_fallthru
          _
      $region32: #{dsta_forward.1} parent=5 // pred_fallthru
        _
      %p230 = scmp.le.s32.totalorder 1, %s14
      %p231 = scmp.lt.s32.totalorder %s14, 3
      %p232 = pnand %p230, %p231
      %p233 = pneg %p232
      // Predicated region
      $region37: #{dsta_forward.1} parent=5 // pred_check
        _
      $region38: #{dsta_forward.1} parent=5 // pred_check_branch
        %235 = sbr.rel (%p232) target = $region40
      $region39: #{dsta_forward.1} parent=5 // pred_region
        %s236 = ssub.s32 %s14, 1
        // Predicated region
        $region41: #{dsta_forward.1} parent=39 // pred_check
          %p237 = pneg %p61
        $region42: #{dsta_forward.1} parent=39 // pred_check_branch
          %239 = sbr.rel (%p237) target = $region44
        $region43: #{dsta_forward.1} parent=39 // pred_region
          %241 = dma.done [#allocation3], 6144
        $region44: #{dsta_forward.1} parent=39 // pred_fallthru
          _
        // Predicated region
        $region45: #{dsta_forward.1} parent=39 // pred_check
          %p242 = pneg %p82
        $region46: #{dsta_forward.1} parent=39 // pred_check_branch
          %244 = sbr.rel (%p242) target = $region48
        $region47: #{dsta_forward.1} parent=39 // pred_region
          %246 = dma.done [#allocation5], 256
        $region48: #{dsta_forward.1} parent=39 // pred_fallthru
          _
        // Predicated region
        $region49: #{dsta_forward.1} parent=39 // pred_check
          %p247 = pneg %p103
        $region50: #{dsta_forward.1} parent=39 // pred_check_branch
          %249 = sbr.rel (%p247) target = $region52
        $region51: #{dsta_forward.1} parent=39 // pred_region
          %251 = dma.done [#allocation5], 98304
        $region52: #{dsta_forward.1} parent=39 // pred_fallthru
          _
        // Predicated region
        $region53: #{dsta_forward.1} parent=39 // pred_check
          %p252 = pneg %p124
        $region54: #{dsta_forward.1} parent=39 // pred_check_branch
          %254 = sbr.rel (%p252) target = $region56
        $region55: #{dsta_forward.1} parent=39 // pred_region
          %256 = dma.done [#allocation8], 96
        $region56: #{dsta_forward.1} parent=39 // pred_fallthru
          _
        %s257 = smul.u32 4, %s19
        %p258 = scmp.lt.s32.totalorder %s257, 7
        %s259 = scalar_select %p258, %s257, 7
        %s260 = smul.addr %s259, 4
        %s261 = scalar_lea.vmem %s0, %s260
        %p262 = pneg %p40
        %p263 = pneg %p37
        %p264 = pneg %p61
        %p265 = pneg %p58
        %p266 = pneg %p82
        %p267 = pneg %p79
        %p268 = pneg %p103
        %p269 = pneg %p100
        %p270 = pneg %p124
        %p271 = pneg %p121
        %p272 = pneg %p150
        %p273 = pneg %p147
        %s274 = smul.u32 4, %s19
        %p275 = scmp.lt.s32.totalorder %s274, 7
        %s276 = scalar_select %p275, %s274, 7
        %s277 = smul.addr %s276, 6
        %s278 = smul.addr %s277, 4
        %s279 = scalar_lea.vmem %s5, %s278
        %s280 = smul.u32 4, %s19
        %p281 = scmp.lt.s32.totalorder %s280, 7
        %s282 = scalar_select %p281, %s280, 7
        %s283 = smul.addr %s282, 4
        %s284 = scalar_lea.vmem %s0, %s283
        %s285 = smul.u32 4, %s19
        %s286 = smul.u32 4, %s19
        %p287 = scmp.lt.s32.totalorder %s286, 7
        %s288 = scalar_select %p287, %s286, 7
        %s289 = smul.addr %s288, 6
        %s290 = smul.addr %s289, 4
        %s291 = scalar_lea.vmem %s5, %s290
        %s292 = smul.u32 4, %s19
        %v294 = vld [vmem:[%s284] sm:$0xf]
        %v295 = vld [vmem:[%s284 + $0x4] sm:$0xf]
        %v296 = vld [vmem:[%s284 + $0x8] sm:$0xf]
        %v297 = vld [vmem:[%s284 + $0xc] sm:$0xf]
        %v298 = vld [vmem:[#allocation2] sm:$0xff]
        %v299 = vld [vmem:[#allocation2 + $0x8] sm:$0xff]
        %v300 = vld [vmem:[#allocation2 + $0x10] sm:$0xff]
        %v301 = vld [vmem:[#allocation2 + $0x18] sm:$0xff]
        %v302 = vld [vmem:[#allocation2 + $0x20] sm:$0xff]
        %v303 = vld [vmem:[#allocation2 + $0x28] sm:$0xff]
        %v304 = vld [vmem:[#allocation2 + $0x30] sm:$0xff]
        %v305 = vld [vmem:[#allocation2 + $0x38] sm:$0xff]
        %v306 = vld [vmem:[#allocation2 + $0x40] sm:$0xff]
        %v307 = vld [vmem:[#allocation2 + $0x48] sm:$0xff]
        %v308 = vld [vmem:[#allocation2 + $0x50] sm:$0xff]
        %v309 = vld [vmem:[#allocation2 + $0x58] sm:$0xff]
        %v310 = vld [vmem:[#allocation2 + $0x60] sm:$0xff]
        %v311 = vld [vmem:[#allocation2 + $0x68] sm:$0xff]
        %v312 = vld [vmem:[#allocation2 + $0x70] sm:$0xff]
        %v313 = vld [vmem:[#allocation2 + $0x78] sm:$0xff]
        %v314 = vld [vmem:[#allocation2 + $0x80] sm:$0xff]
        %v315 = vld [vmem:[#allocation2 + $0x88] sm:$0xff]
        %v316 = vld [vmem:[#allocation2 + $0x90] sm:$0xff]
        %v317 = vld [vmem:[#allocation2 + $0x98] sm:$0xff]
        %v318 = vld [vmem:[#allocation2 + $0xa0] sm:$0xff]
        %v319 = vld [vmem:[#allocation2 + $0xa8] sm:$0xff]
        %v320 = vld [vmem:[#allocation2 + $0xb0] sm:$0xff]
        %v321 = vld [vmem:[#allocation2 + $0xb8] sm:$0xff]
        %v322 = vld [vmem:[#allocation2 + $0xc0] sm:$0xff]
        %v323 = vld [vmem:[#allocation2 + $0xc8] sm:$0xff]
        %v324 = vld [vmem:[#allocation2 + $0xd0] sm:$0xff]
        %v325 = vld [vmem:[#allocation2 + $0xd8] sm:$0xff]
        %v326 = vld [vmem:[#allocation2 + $0xe0] sm:$0xff]
        %v327 = vld [vmem:[#allocation2 + $0xe8] sm:$0xff]
        %v328 = vld [vmem:[#allocation2 + $0xf0] sm:$0xff]
        %v329 = vld [vmem:[#allocation2 + $0xf8] sm:$0xff]
        %v330 = vld [vmem:[#allocation2 + $0x100] sm:$0xff]
        %v331 = vld [vmem:[#allocation2 + $0x108] sm:$0xff]
        %v332 = vld [vmem:[#allocation2 + $0x110] sm:$0xff]
        %v333 = vld [vmem:[#allocation2 + $0x118] sm:$0xff]
        %v334 = vld [vmem:[#allocation2 + $0x120] sm:$0xff]
        %v335 = vld [vmem:[#allocation2 + $0x128] sm:$0xff]
        %v336 = vld [vmem:[#allocation2 + $0x130] sm:$0xff]
        %v337 = vld [vmem:[#allocation2 + $0x138] sm:$0xff]
        %v338 = vld [vmem:[#allocation2 + $0x140] sm:$0xff]
        %v339 = vld [vmem:[#allocation2 + $0x148] sm:$0xff]
        %v340 = vld [vmem:[#allocation2 + $0x150] sm:$0xff]
        %v341 = vld [vmem:[#allocation2 + $0x158] sm:$0xff]
        %v342 = vld [vmem:[#allocation2 + $0x160] sm:$0xff]
        %v343 = vld [vmem:[#allocation2 + $0x168] sm:$0xff]
        %v344 = vld [vmem:[#allocation2 + $0x170] sm:$0xff]
        %v345 = vld [vmem:[#allocation2 + $0x178] sm:$0xff]
        %v346 = vld [vmem:[#allocation4] sm:$0xff]
        %v347 = vld [vmem:[#allocation4 + $0x8] sm:$0xff]
        %v350 = vperm.slane %v346, 0
        %v351 = vperm.slane %v346, 1
        %v352 = vperm.slane %v346, 2
        %v353 = vperm.slane %v346, 3
        %v354 = vperm.slane %v346, 4
        %v355 = vperm.slane %v346, 5
        %v356 = vperm.slane %v346, 6
        %v357 = vperm.slane %v346, 7
        %v358 = vperm.slane %v347, 0
        %v359 = vperm.slane %v347, 1
        %v360 = vperm.slane %v347, 2
        %v361 = vperm.slane %v347, 3
        %v362 = vperm.slane %v347, 4
        %v363 = vperm.slane %v347, 5
        %v364 = vperm.slane %v347, 6
        %v365 = vperm.slane %v347, 7
        %v386 = vunpack.c.l.b16 %v294
        %v387 = vunpack.c.l.b16 %v295
        %v388 = vunpack.c.l.b16 %v296
        %v389 = vunpack.c.l.b16 %v297
        %v390 = vpack.c.b16 %v387, %v386
        %v391 = vpack.c.b16 %v389, %v388
        %v440 = vunpack.c.l.b16 %v298
        %v441 = vunpack.c.h.b16 %v298
        %v442 = vunpack.c.l.b16 %v299
        %v443 = vunpack.c.h.b16 %v299
        %v444 = vunpack.c.l.b16 %v300
        %v445 = vunpack.c.h.b16 %v300
        %v446 = vunpack.c.l.b16 %v301
        %v447 = vunpack.c.h.b16 %v301
        %v448 = vunpack.c.l.b16 %v302
        %v449 = vunpack.c.h.b16 %v302
        %v450 = vunpack.c.l.b16 %v303
        %v451 = vunpack.c.h.b16 %v303
        %v452 = vunpack.c.l.b16 %v304
        %v453 = vunpack.c.h.b16 %v304
        %v454 = vunpack.c.l.b16 %v305
        %v455 = vunpack.c.h.b16 %v305
        %v456 = vunpack.c.l.b16 %v306
        %v457 = vunpack.c.h.b16 %v306
        %v458 = vunpack.c.l.b16 %v307
        %v459 = vunpack.c.h.b16 %v307
        %v460 = vunpack.c.l.b16 %v308
        %v461 = vunpack.c.h.b16 %v308
        %v462 = vunpack.c.l.b16 %v309
        %v463 = vunpack.c.h.b16 %v309
        %v464 = vunpack.c.l.b16 %v310
        %v465 = vunpack.c.h.b16 %v310
        %v466 = vunpack.c.l.b16 %v311
        %v467 = vunpack.c.h.b16 %v311
        %v468 = vunpack.c.l.b16 %v312
        %v469 = vunpack.c.h.b16 %v312
        %v470 = vunpack.c.l.b16 %v313
        %v471 = vunpack.c.h.b16 %v313
        %v472 = vunpack.c.l.b16 %v314
        %v473 = vunpack.c.h.b16 %v314
        %v474 = vunpack.c.l.b16 %v315
        %v475 = vunpack.c.h.b16 %v315
        %v476 = vunpack.c.l.b16 %v316
        %v477 = vunpack.c.h.b16 %v316
        %v478 = vunpack.c.l.b16 %v317
        %v479 = vunpack.c.h.b16 %v317
        %v480 = vunpack.c.l.b16 %v318
        %v481 = vunpack.c.h.b16 %v318
        %v482 = vunpack.c.l.b16 %v319
        %v483 = vunpack.c.h.b16 %v319
        %v484 = vunpack.c.l.b16 %v320
        %v485 = vunpack.c.h.b16 %v320
        %v486 = vunpack.c.l.b16 %v321
        %v487 = vunpack.c.h.b16 %v321
        %v488 = vunpack.c.l.b16 %v322
        %v489 = vunpack.c.h.b16 %v322
        %v490 = vunpack.c.l.b16 %v323
        %v491 = vunpack.c.h.b16 %v323
        %v492 = vunpack.c.l.b16 %v324
        %v493 = vunpack.c.h.b16 %v324
        %v494 = vunpack.c.l.b16 %v325
        %v495 = vunpack.c.h.b16 %v325
        %v496 = vunpack.c.l.b16 %v326
        %v497 = vunpack.c.h.b16 %v326
        %v498 = vunpack.c.l.b16 %v327
        %v499 = vunpack.c.h.b16 %v327
        %v500 = vunpack.c.l.b16 %v328
        %v501 = vunpack.c.h.b16 %v328
        %v502 = vunpack.c.l.b16 %v329
        %v503 = vunpack.c.h.b16 %v329
        %v504 = vunpack.c.l.b16 %v330
        %v505 = vunpack.c.h.b16 %v330
        %v506 = vunpack.c.l.b16 %v331
        %v507 = vunpack.c.h.b16 %v331
        %v508 = vunpack.c.l.b16 %v332
        %v509 = vunpack.c.h.b16 %v332
        %v510 = vunpack.c.l.b16 %v333
        %v511 = vunpack.c.h.b16 %v333
        %v512 = vunpack.c.l.b16 %v334
        %v513 = vunpack.c.h.b16 %v334
        %v514 = vunpack.c.l.b16 %v335
        %v515 = vunpack.c.h.b16 %v335
        %v516 = vunpack.c.l.b16 %v336
        %v517 = vunpack.c.h.b16 %v336
        %v518 = vunpack.c.l.b16 %v337
        %v519 = vunpack.c.h.b16 %v337
        %v520 = vunpack.c.l.b16 %v338
        %v521 = vunpack.c.h.b16 %v338
        %v522 = vunpack.c.l.b16 %v339
        %v523 = vunpack.c.h.b16 %v339
        %v524 = vunpack.c.l.b16 %v340
        %v525 = vunpack.c.h.b16 %v340
        %v526 = vunpack.c.l.b16 %v341
        %v527 = vunpack.c.h.b16 %v341
        %v528 = vunpack.c.l.b16 %v342
        %v529 = vunpack.c.h.b16 %v342
        %v530 = vunpack.c.l.b16 %v343
        %v531 = vunpack.c.h.b16 %v343
        %v532 = vunpack.c.l.b16 %v344
        %v533 = vunpack.c.h.b16 %v344
        %v534 = vunpack.c.l.b16 %v345
        %v535 = vunpack.c.h.b16 %v345
        %v536 = vpack.c.b16 %v456, %v440
        %v537 = vpack.c.b16 %v457, %v441
        %v538 = vpack.c.b16 %v458, %v442
        %v539 = vpack.c.b16 %v459, %v443
        %v540 = vpack.c.b16 %v460, %v444
        %v541 = vpack.c.b16 %v461, %v445
        %v542 = vpack.c.b16 %v462, %v446
        %v543 = vpack.c.b16 %v463, %v447
        %v544 = vpack.c.b16 %v464, %v448
        %v545 = vpack.c.b16 %v465, %v449
        %v546 = vpack.c.b16 %v466, %v450
        %v547 = vpack.c.b16 %v467, %v451
        %v548 = vpack.c.b16 %v468, %v452
        %v549 = vpack.c.b16 %v469, %v453
        %v550 = vpack.c.b16 %v470, %v454
        %v551 = vpack.c.b16 %v471, %v455
        %v552 = vpack.c.b16 %v488, %v472
        %v553 = vpack.c.b16 %v489, %v473
        %v554 = vpack.c.b16 %v490, %v474
        %v555 = vpack.c.b16 %v491, %v475
        %v556 = vpack.c.b16 %v492, %v476
        %v557 = vpack.c.b16 %v493, %v477
        %v558 = vpack.c.b16 %v494, %v478
        %v559 = vpack.c.b16 %v495, %v479
        %v560 = vpack.c.b16 %v496, %v480
        %v561 = vpack.c.b16 %v497, %v481
        %v562 = vpack.c.b16 %v498, %v482
        %v563 = vpack.c.b16 %v499, %v483
        %v564 = vpack.c.b16 %v500, %v484
        %v565 = vpack.c.b16 %v501, %v485
        %v566 = vpack.c.b16 %v502, %v486
        %v567 = vpack.c.b16 %v503, %v487
        %v568 = vpack.c.b16 %v520, %v504
        %v569 = vpack.c.b16 %v521, %v505
        %v570 = vpack.c.b16 %v522, %v506
        %v571 = vpack.c.b16 %v523, %v507
        %v572 = vpack.c.b16 %v524, %v508
        %v573 = vpack.c.b16 %v525, %v509
        %v574 = vpack.c.b16 %v526, %v510
        %v575 = vpack.c.b16 %v527, %v511
        %v576 = vpack.c.b16 %v528, %v512
        %v577 = vpack.c.b16 %v529, %v513
        %v578 = vpack.c.b16 %v530, %v514
        %v579 = vpack.c.b16 %v531, %v515
        %v580 = vpack.c.b16 %v532, %v516
        %v581 = vpack.c.b16 %v533, %v517
        %v582 = vpack.c.b16 %v534, %v518
        %v583 = vpack.c.b16 %v535, %v519
        %vm632 = vcmask 392192
        %v634 = vsel %vm632, %v390, 0
        %v637 = vsel %vm632, %v391, 0
        %639 = vmatpush.bf16.msra.mxu0 0
        %640 = vmatpush.bf16.msra.mxu0 0
        %641 = vmatpush.bf16.msra.mxu0 0
        %642 = vmatpush.bf16.msra.mxu0 0
        %643 = vmatpush.bf16.msra.mxu0 0
        %644 = vmatpush.bf16.msra.mxu0 %v568
        %645 = vmatpush.bf16.msra.mxu0 %v552
        %646 = vmatpush.bf16.msra.mxu0 %v536
        %647 = vmatmul.bf16.gmra.mxu0 %v634
        %v648 = vpop.f32.mrf.mxu0
        %v649 = vadd.f32 %v350, %v648
        %v650 = vpop.f32.mrf.mxu0
        %v651 = vadd.f32 %v350, %v650
        %652 = vmatmul.bf16.gmra.mxu0 %v637
        %v653 = vpop.f32.mrf.mxu0
        %v654 = vadd.f32 %v350, %v653
        %v655 = vpop.f32.mrf.mxu0
        %v656 = vadd.f32 %v350, %v655
        %657 = vdwg.mxu0
        %658 = vmatpush.bf16.msra.mxu0 0
        %659 = vmatpush.bf16.msra.mxu0 0
        %660 = vmatpush.bf16.msra.mxu0 0
        %661 = vmatpush.bf16.msra.mxu0 0
        %662 = vmatpush.bf16.msra.mxu0 0
        %663 = vmatpush.bf16.msra.mxu0 %v569
        %664 = vmatpush.bf16.msra.mxu0 %v553
        %665 = vmatpush.bf16.msra.mxu0 %v537
        %666 = vmatmul.bf16.gmra.mxu0 %v634
        %v667 = vpop.f32.mrf.mxu0
        %v668 = vadd.f32 %v351, %v667
        %v669 = vpop.f32.mrf.mxu0
        %v670 = vadd.f32 %v351, %v669
        %671 = vmatmul.bf16.gmra.mxu0 %v637
        %v672 = vpop.f32.mrf.mxu0
        %v673 = vadd.f32 %v351, %v672
        %v674 = vpop.f32.mrf.mxu0
        %v675 = vadd.f32 %v351, %v674
        %676 = vdwg.mxu0
        %677 = vmatpush.bf16.msra.mxu0 0
        %678 = vmatpush.bf16.msra.mxu0 0
        %679 = vmatpush.bf16.msra.mxu0 0
        %680 = vmatpush.bf16.msra.mxu0 0
        %681 = vmatpush.bf16.msra.mxu0 0
        %682 = vmatpush.bf16.msra.mxu0 %v570
        %683 = vmatpush.bf16.msra.mxu0 %v554
        %684 = vmatpush.bf16.msra.mxu0 %v538
        %685 = vmatmul.bf16.gmra.mxu0 %v634
        %v686 = vpop.f32.mrf.mxu0
        %v687 = vadd.f32 %v352, %v686
        %v688 = vpop.f32.mrf.mxu0
        %v689 = vadd.f32 %v352, %v688
        %690 = vmatmul.bf16.gmra.mxu0 %v637
        %v691 = vpop.f32.mrf.mxu0
        %v692 = vadd.f32 %v352, %v691
        %v693 = vpop.f32.mrf.mxu0
        %v694 = vadd.f32 %v352, %v693
        %695 = vdwg.mxu0
        %696 = vmatpush.bf16.msra.mxu0 0
        %697 = vmatpush.bf16.msra.mxu0 0
        %698 = vmatpush.bf16.msra.mxu0 0
        %699 = vmatpush.bf16.msra.mxu0 0
        %700 = vmatpush.bf16.msra.mxu0 0
        %701 = vmatpush.bf16.msra.mxu0 %v571
        %702 = vmatpush.bf16.msra.mxu0 %v555
        %703 = vmatpush.bf16.msra.mxu0 %v539
        %704 = vmatmul.bf16.gmra.mxu0 %v634
        %v705 = vpop.f32.mrf.mxu0
        %v706 = vadd.f32 %v353, %v705
        %v707 = vpop.f32.mrf.mxu0
        %v708 = vadd.f32 %v353, %v707
        %709 = vmatmul.bf16.gmra.mxu0 %v637
        %v710 = vpop.f32.mrf.mxu0
        %v711 = vadd.f32 %v353, %v710
        %v712 = vpop.f32.mrf.mxu0
        %v713 = vadd.f32 %v353, %v712
        %714 = vdwg.mxu0
        %715 = vmatpush.bf16.msra.mxu0 0
        %716 = vmatpush.bf16.msra.mxu0 0
        %717 = vmatpush.bf16.msra.mxu0 0
        %718 = vmatpush.bf16.msra.mxu0 0
        %719 = vmatpush.bf16.msra.mxu0 0
        %720 = vmatpush.bf16.msra.mxu0 %v572
        %721 = vmatpush.bf16.msra.mxu0 %v556
        %722 = vmatpush.bf16.msra.mxu0 %v540
        %723 = vmatmul.bf16.gmra.mxu0 %v634
        %v724 = vpop.f32.mrf.mxu0
        %v725 = vadd.f32 %v354, %v724
        %v726 = vpop.f32.mrf.mxu0
        %v727 = vadd.f32 %v354, %v726
        %728 = vmatmul.bf16.gmra.mxu0 %v637
        %v729 = vpop.f32.mrf.mxu0
        %v730 = vadd.f32 %v354, %v729
        %v731 = vpop.f32.mrf.mxu0
        %v732 = vadd.f32 %v354, %v731
        %733 = vdwg.mxu0
        %734 = vmatpush.bf16.msra.mxu0 0
        %735 = vmatpush.bf16.msra.mxu0 0
        %736 = vmatpush.bf16.msra.mxu0 0
        %737 = vmatpush.bf16.msra.mxu0 0
        %738 = vmatpush.bf16.msra.mxu0 0
        %739 = vmatpush.bf16.msra.mxu0 %v573
        %740 = vmatpush.bf16.msra.mxu0 %v557
        %741 = vmatpush.bf16.msra.mxu0 %v541
        %742 = vmatmul.bf16.gmra.mxu0 %v634
        %v743 = vpop.f32.mrf.mxu0
        %v744 = vadd.f32 %v355, %v743
        %v745 = vpop.f32.mrf.mxu0
        %v746 = vadd.f32 %v355, %v745
        %747 = vmatmul.bf16.gmra.mxu0 %v637
        %v748 = vpop.f32.mrf.mxu0
        %v749 = vadd.f32 %v355, %v748
        %v750 = vpop.f32.mrf.mxu0
        %v751 = vadd.f32 %v355, %v750
        %752 = vdwg.mxu0
        %753 = vmatpush.bf16.msra.mxu0 0
        %754 = vmatpush.bf16.msra.mxu0 0
        %755 = vmatpush.bf16.msra.mxu0 0
        %756 = vmatpush.bf16.msra.mxu0 0
        %757 = vmatpush.bf16.msra.mxu0 0
        %758 = vmatpush.bf16.msra.mxu0 %v574
        %759 = vmatpush.bf16.msra.mxu0 %v558
        %760 = vmatpush.bf16.msra.mxu0 %v542
        %761 = vmatmul.bf16.gmra.mxu0 %v634
        %v762 = vpop.f32.mrf.mxu0
        %v763 = vadd.f32 %v356, %v762
        %v764 = vpop.f32.mrf.mxu0
        %v765 = vadd.f32 %v356, %v764
        %766 = vmatmul.bf16.gmra.mxu0 %v637
        %v767 = vpop.f32.mrf.mxu0
        %v768 = vadd.f32 %v356, %v767
        %v769 = vpop.f32.mrf.mxu0
        %v770 = vadd.f32 %v356, %v769
        %771 = vdwg.mxu0
        %772 = vmatpush.bf16.msra.mxu0 0
        %773 = vmatpush.bf16.msra.mxu0 0
        %774 = vmatpush.bf16.msra.mxu0 0
        %775 = vmatpush.bf16.msra.mxu0 0
        %776 = vmatpush.bf16.msra.mxu0 0
        %777 = vmatpush.bf16.msra.mxu0 %v575
        %778 = vmatpush.bf16.msra.mxu0 %v559
        %779 = vmatpush.bf16.msra.mxu0 %v543
        %780 = vmatmul.bf16.gmra.mxu0 %v634
        %v781 = vpop.f32.mrf.mxu0
        %v782 = vadd.f32 %v357, %v781
        %v783 = vpop.f32.mrf.mxu0
        %v784 = vadd.f32 %v357, %v783
        %785 = vmatmul.bf16.gmra.mxu0 %v637
        %v786 = vpop.f32.mrf.mxu0
        %v787 = vadd.f32 %v357, %v786
        %v788 = vpop.f32.mrf.mxu0
        %v789 = vadd.f32 %v357, %v788
        %790 = vdwg.mxu0
        %791 = vmatpush.bf16.msra.mxu0 0
        %792 = vmatpush.bf16.msra.mxu0 0
        %793 = vmatpush.bf16.msra.mxu0 0
        %794 = vmatpush.bf16.msra.mxu0 0
        %795 = vmatpush.bf16.msra.mxu0 0
        %796 = vmatpush.bf16.msra.mxu0 %v576
        %797 = vmatpush.bf16.msra.mxu0 %v560
        %798 = vmatpush.bf16.msra.mxu0 %v544
        %799 = vmatmul.bf16.gmra.mxu0 %v634
        %v800 = vpop.f32.mrf.mxu0
        %v801 = vadd.f32 %v358, %v800
        %v802 = vpop.f32.mrf.mxu0
        %v803 = vadd.f32 %v358, %v802
        %804 = vmatmul.bf16.gmra.mxu0 %v637
        %v805 = vpop.f32.mrf.mxu0
        %v806 = vadd.f32 %v358, %v805
        %v807 = vpop.f32.mrf.mxu0
        %v808 = vadd.f32 %v358, %v807
        %809 = vdwg.mxu0
        %810 = vmatpush.bf16.msra.mxu0 0
        %811 = vmatpush.bf16.msra.mxu0 0
        %812 = vmatpush.bf16.msra.mxu0 0
        %813 = vmatpush.bf16.msra.mxu0 0
        %814 = vmatpush.bf16.msra.mxu0 0
        %815 = vmatpush.bf16.msra.mxu0 %v577
        %816 = vmatpush.bf16.msra.mxu0 %v561
        %817 = vmatpush.bf16.msra.mxu0 %v545
        %818 = vmatmul.bf16.gmra.mxu0 %v634
        %v819 = vpop.f32.mrf.mxu0
        %v820 = vadd.f32 %v359, %v819
        %v821 = vpop.f32.mrf.mxu0
        %v822 = vadd.f32 %v359, %v821
        %823 = vmatmul.bf16.gmra.mxu0 %v637
        %v824 = vpop.f32.mrf.mxu0
        %v825 = vadd.f32 %v359, %v824
        %v826 = vpop.f32.mrf.mxu0
        %v827 = vadd.f32 %v359, %v826
        %828 = vdwg.mxu0
        %829 = vmatpush.bf16.msra.mxu0 0
        %830 = vmatpush.bf16.msra.mxu0 0
        %831 = vmatpush.bf16.msra.mxu0 0
        %832 = vmatpush.bf16.msra.mxu0 0
        %833 = vmatpush.bf16.msra.mxu0 0
        %834 = vmatpush.bf16.msra.mxu0 %v578
        %835 = vmatpush.bf16.msra.mxu0 %v562
        %836 = vmatpush.bf16.msra.mxu0 %v546
        %837 = vmatmul.bf16.gmra.mxu0 %v634
        %v838 = vpop.f32.mrf.mxu0
        %v839 = vadd.f32 %v360, %v838
        %v840 = vpop.f32.mrf.mxu0
        %v841 = vadd.f32 %v360, %v840
        %842 = vmatmul.bf16.gmra.mxu0 %v637
        %v843 = vpop.f32.mrf.mxu0
        %v844 = vadd.f32 %v360, %v843
        %v845 = vpop.f32.mrf.mxu0
        %v846 = vadd.f32 %v360, %v845
        %847 = vdwg.mxu0
        %848 = vmatpush.bf16.msra.mxu0 0
        %849 = vmatpush.bf16.msra.mxu0 0
        %850 = vmatpush.bf16.msra.mxu0 0
        %851 = vmatpush.bf16.msra.mxu0 0
        %852 = vmatpush.bf16.msra.mxu0 0
        %853 = vmatpush.bf16.msra.mxu0 %v579
        %854 = vmatpush.bf16.msra.mxu0 %v563
        %855 = vmatpush.bf16.msra.mxu0 %v547
        %856 = vmatmul.bf16.gmra.mxu0 %v634
        %v857 = vpop.f32.mrf.mxu0
        %v858 = vadd.f32 %v361, %v857
        %v859 = vpop.f32.mrf.mxu0
        %v860 = vadd.f32 %v361, %v859
        %861 = vmatmul.bf16.gmra.mxu0 %v637
        %v862 = vpop.f32.mrf.mxu0
        %v863 = vadd.f32 %v361, %v862
        %v864 = vpop.f32.mrf.mxu0
        %v865 = vadd.f32 %v361, %v864
        %866 = vdwg.mxu0
        %867 = vmatpush.bf16.msra.mxu0 0
        %868 = vmatpush.bf16.msra.mxu0 0
        %869 = vmatpush.bf16.msra.mxu0 0
        %870 = vmatpush.bf16.msra.mxu0 0
        %871 = vmatpush.bf16.msra.mxu0 0
        %872 = vmatpush.bf16.msra.mxu0 %v580
        %873 = vmatpush.bf16.msra.mxu0 %v564
        %874 = vmatpush.bf16.msra.mxu0 %v548
        %875 = vmatmul.bf16.gmra.mxu0 %v634
        %v876 = vpop.f32.mrf.mxu0
        %v877 = vadd.f32 %v362, %v876
        %v878 = vpop.f32.mrf.mxu0
        %v879 = vadd.f32 %v362, %v878
        %880 = vmatmul.bf16.gmra.mxu0 %v637
        %v881 = vpop.f32.mrf.mxu0
        %v882 = vadd.f32 %v362, %v881
        %v883 = vpop.f32.mrf.mxu0
        %v884 = vadd.f32 %v362, %v883
        %885 = vdwg.mxu0
        %886 = vmatpush.bf16.msra.mxu0 0
        %887 = vmatpush.bf16.msra.mxu0 0
        %888 = vmatpush.bf16.msra.mxu0 0
        %889 = vmatpush.bf16.msra.mxu0 0
        %890 = vmatpush.bf16.msra.mxu0 0
        %891 = vmatpush.bf16.msra.mxu0 %v581
        %892 = vmatpush.bf16.msra.mxu0 %v565
        %893 = vmatpush.bf16.msra.mxu0 %v549
        %894 = vmatmul.bf16.gmra.mxu0 %v634
        %v895 = vpop.f32.mrf.mxu0
        %v896 = vadd.f32 %v363, %v895
        %v897 = vpop.f32.mrf.mxu0
        %v898 = vadd.f32 %v363, %v897
        %899 = vmatmul.bf16.gmra.mxu0 %v637
        %v900 = vpop.f32.mrf.mxu0
        %v901 = vadd.f32 %v363, %v900
        %v902 = vpop.f32.mrf.mxu0
        %v903 = vadd.f32 %v363, %v902
        %904 = vdwg.mxu0
        %905 = vmatpush.bf16.msra.mxu0 0
        %906 = vmatpush.bf16.msra.mxu0 0
        %907 = vmatpush.bf16.msra.mxu0 0
        %908 = vmatpush.bf16.msra.mxu0 0
        %909 = vmatpush.bf16.msra.mxu0 0
        %910 = vmatpush.bf16.msra.mxu0 %v582
        %911 = vmatpush.bf16.msra.mxu0 %v566
        %912 = vmatpush.bf16.msra.mxu0 %v550
        %913 = vmatmul.bf16.gmra.mxu0 %v634
        %v914 = vpop.f32.mrf.mxu0
        %v915 = vadd.f32 %v364, %v914
        %v916 = vpop.f32.mrf.mxu0
        %v917 = vadd.f32 %v364, %v916
        %918 = vmatmul.bf16.gmra.mxu0 %v637
        %v919 = vpop.f32.mrf.mxu0
        %v920 = vadd.f32 %v364, %v919
        %v921 = vpop.f32.mrf.mxu0
        %v922 = vadd.f32 %v364, %v921
        %923 = vdwg.mxu0
        %924 = vmatpush.bf16.msra.mxu0 0
        %925 = vmatpush.bf16.msra.mxu0 0
        %926 = vmatpush.bf16.msra.mxu0 0
        %927 = vmatpush.bf16.msra.mxu0 0
        %928 = vmatpush.bf16.msra.mxu0 0
        %929 = vmatpush.bf16.msra.mxu0 %v583
        %930 = vmatpush.bf16.msra.mxu0 %v567
        %931 = vmatpush.bf16.msra.mxu0 %v551
        %932 = vmatmul.bf16.gmra.mxu0 %v634
        %v933 = vpop.f32.mrf.mxu0
        %v934 = vadd.f32 %v365, %v933
        %v935 = vpop.f32.mrf.mxu0
        %v936 = vadd.f32 %v365, %v935
        %937 = vmatmul.bf16.gmra.mxu0 %v637
        %v938 = vpop.f32.mrf.mxu0
        %v939 = vadd.f32 %v365, %v938
        %v940 = vpop.f32.mrf.mxu0
        %v941 = vadd.f32 %v365, %v940
        %942 = vdwg.mxu0
        %v943 = vmax.f32 %v649, 0.0
        %v944 = vmax.f32 %v668, 0.0
        %v945 = vmax.f32 %v687, 0.0
        %v946 = vmax.f32 %v706, 0.0
        %v947 = vmax.f32 %v725, 0.0
        %v948 = vmax.f32 %v744, 0.0
        %v949 = vmax.f32 %v763, 0.0
        %v950 = vmax.f32 %v782, 0.0
        %v951 = vmax.f32 %v801, 0.0
        %v952 = vmax.f32 %v820, 0.0
        %v953 = vmax.f32 %v839, 0.0
        %v954 = vmax.f32 %v858, 0.0
        %v955 = vmax.f32 %v877, 0.0
        %v956 = vmax.f32 %v896, 0.0
        %v957 = vmax.f32 %v915, 0.0
        %v958 = vmax.f32 %v934, 0.0
        %v959 = vmax.f32 %v651, 0.0
        %v960 = vmax.f32 %v670, 0.0
        %v961 = vmax.f32 %v689, 0.0
        %v962 = vmax.f32 %v708, 0.0
        %v963 = vmax.f32 %v727, 0.0
        %v964 = vmax.f32 %v746, 0.0
        %v965 = vmax.f32 %v765, 0.0
        %v966 = vmax.f32 %v784, 0.0
        %v967 = vmax.f32 %v803, 0.0
        %v968 = vmax.f32 %v822, 0.0
        %v969 = vmax.f32 %v841, 0.0
        %v970 = vmax.f32 %v860, 0.0
        %v971 = vmax.f32 %v879, 0.0
        %v972 = vmax.f32 %v898, 0.0
        %v973 = vmax.f32 %v917, 0.0
        %v974 = vmax.f32 %v936, 0.0
        %v975 = vmax.f32 %v654, 0.0
        %v976 = vmax.f32 %v673, 0.0
        %v977 = vmax.f32 %v692, 0.0
        %v978 = vmax.f32 %v711, 0.0
        %v979 = vmax.f32 %v730, 0.0
        %v980 = vmax.f32 %v749, 0.0
        %v981 = vmax.f32 %v768, 0.0
        %v982 = vmax.f32 %v787, 0.0
        %v983 = vmax.f32 %v806, 0.0
        %v984 = vmax.f32 %v825, 0.0
        %v985 = vmax.f32 %v844, 0.0
        %v986 = vmax.f32 %v863, 0.0
        %v987 = vmax.f32 %v882, 0.0
        %v988 = vmax.f32 %v901, 0.0
        %v989 = vmax.f32 %v920, 0.0
        %v990 = vmax.f32 %v939, 0.0
        %v991 = vmax.f32 %v656, 0.0
        %v992 = vmax.f32 %v675, 0.0
        %v993 = vmax.f32 %v694, 0.0
        %v994 = vmax.f32 %v713, 0.0
        %v995 = vmax.f32 %v732, 0.0
        %v996 = vmax.f32 %v751, 0.0
        %v997 = vmax.f32 %v770, 0.0
        %v998 = vmax.f32 %v789, 0.0
        %v999 = vmax.f32 %v808, 0.0
        %v1000 = vmax.f32 %v827, 0.0
        %v1001 = vmax.f32 %v846, 0.0
        %v1002 = vmax.f32 %v865, 0.0
        %v1003 = vmax.f32 %v884, 0.0
        %v1004 = vmax.f32 %v903, 0.0
        %v1005 = vmax.f32 %v922, 0.0
        %v1006 = vmax.f32 %v941, 0.0
        %v1007 = vpack.c.bf16 %v959, %v943
        %v1008 = vpack.c.bf16 %v960, %v944
        %v1009 = vpack.c.bf16 %v961, %v945
        %v1010 = vpack.c.bf16 %v962, %v946
        %v1011 = vpack.c.bf16 %v963, %v947
        %v1012 = vpack.c.bf16 %v964, %v948
        %v1013 = vpack.c.bf16 %v965, %v949
        %v1014 = vpack.c.bf16 %v966, %v950
        %v1015 = vpack.c.bf16 %v967, %v951
        %v1016 = vpack.c.bf16 %v968, %v952
        %v1017 = vpack.c.bf16 %v969, %v953
        %v1018 = vpack.c.bf16 %v970, %v954
        %v1019 = vpack.c.bf16 %v971, %v955
        %v1020 = vpack.c.bf16 %v972, %v956
        %v1021 = vpack.c.bf16 %v973, %v957
        %v1022 = vpack.c.bf16 %v974, %v958
        %v1023 = vpack.c.bf16 %v991, %v975
        %v1024 = vpack.c.bf16 %v992, %v976
        %v1025 = vpack.c.bf16 %v993, %v977
        %v1026 = vpack.c.bf16 %v994, %v978
        %v1027 = vpack.c.bf16 %v995, %v979
        %v1028 = vpack.c.bf16 %v996, %v980
        %v1029 = vpack.c.bf16 %v997, %v981
        %v1030 = vpack.c.bf16 %v998, %v982
        %v1031 = vpack.c.bf16 %v999, %v983
        %v1032 = vpack.c.bf16 %v1000, %v984
        %v1033 = vpack.c.bf16 %v1001, %v985
        %v1034 = vpack.c.bf16 %v1002, %v986
        %v1035 = vpack.c.bf16 %v1003, %v987
        %v1036 = vpack.c.bf16 %v1004, %v988
        %v1037 = vpack.c.bf16 %v1005, %v989
        %v1038 = vpack.c.bf16 %v1006, %v990
        %v1039 = vld [vmem:[#allocation6] sm:$0xff]
        %v1040 = vld [vmem:[#allocation6 + $0x8] sm:$0xff]
        %v1041 = vld [vmem:[#allocation6 + $0x10] sm:$0xff]
        %v1042 = vld [vmem:[#allocation6 + $0x18] sm:$0xff]
        %v1043 = vld [vmem:[#allocation6 + $0x20] sm:$0xff]
        %v1044 = vld [vmem:[#allocation6 + $0x28] sm:$0xff]
        %v1045 = vld [vmem:[#allocation6 + $0x30] sm:$0xff]
        %v1046 = vld [vmem:[#allocation6 + $0x38] sm:$0xff]
        %v1047 = vld [vmem:[#allocation6 + $0x40] sm:$0xff]
        %v1048 = vld [vmem:[#allocation6 + $0x48] sm:$0xff]
        %v1049 = vld [vmem:[#allocation6 + $0x50] sm:$0xff]
        %v1050 = vld [vmem:[#allocation6 + $0x58] sm:$0xff]
        %v1051 = vld [vmem:[#allocation6 + $0x60] sm:$0xff]
        %v1052 = vld [vmem:[#allocation6 + $0x68] sm:$0xff]
        %v1053 = vld [vmem:[#allocation6 + $0x70] sm:$0xff]
        %v1054 = vld [vmem:[#allocation6 + $0x78] sm:$0xff]
        %v1055 = vld [vmem:[#allocation6 + $0x80] sm:$0xff]
        %v1056 = vld [vmem:[#allocation6 + $0x88] sm:$0xff]
        %v1057 = vld [vmem:[#allocation6 + $0x90] sm:$0xff]
        %v1058 = vld [vmem:[#allocation6 + $0x98] sm:$0xff]
        %v1059 = vld [vmem:[#allocation6 + $0xa0] sm:$0xff]
        %v1060 = vld [vmem:[#allocation6 + $0xa8] sm:$0xff]
        %v1061 = vld [vmem:[#allocation6 + $0xb0] sm:$0xff]
        %v1062 = vld [vmem:[#allocation6 + $0xb8] sm:$0xff]
        %v1063 = vld [vmem:[#allocation6 + $0xc0] sm:$0xff]
        %v1064 = vld [vmem:[#allocation6 + $0xc8] sm:$0xff]
        %v1065 = vld [vmem:[#allocation6 + $0xd0] sm:$0xff]
        %v1066 = vld [vmem:[#allocation6 + $0xd8] sm:$0xff]
        %v1067 = vld [vmem:[#allocation6 + $0xe0] sm:$0xff]
        %v1068 = vld [vmem:[#allocation6 + $0xe8] sm:$0xff]
        %v1069 = vld [vmem:[#allocation6 + $0xf0] sm:$0xff]
        %v1070 = vld [vmem:[#allocation6 + $0xf8] sm:$0xff]
        %v1071 = vld [vmem:[#allocation6 + $0x100] sm:$0xff]
        %v1072 = vld [vmem:[#allocation6 + $0x108] sm:$0xff]
        %v1073 = vld [vmem:[#allocation6 + $0x110] sm:$0xff]
        %v1074 = vld [vmem:[#allocation6 + $0x118] sm:$0xff]
        %v1075 = vld [vmem:[#allocation6 + $0x120] sm:$0xff]
        %v1076 = vld [vmem:[#allocation6 + $0x128] sm:$0xff]
        %v1077 = vld [vmem:[#allocation6 + $0x130] sm:$0xff]
        %v1078 = vld [vmem:[#allocation6 + $0x138] sm:$0xff]
        %v1079 = vld [vmem:[#allocation6 + $0x140] sm:$0xff]
        %v1080 = vld [vmem:[#allocation6 + $0x148] sm:$0xff]
        %v1081 = vld [vmem:[#allocation6 + $0x150] sm:$0xff]
        %v1082 = vld [vmem:[#allocation6 + $0x158] sm:$0xff]
        %v1083 = vld [vmem:[#allocation6 + $0x160] sm:$0xff]
        %v1084 = vld [vmem:[#allocation6 + $0x168] sm:$0xff]
        %v1085 = vld [vmem:[#allocation6 + $0x170] sm:$0xff]
        %v1086 = vld [vmem:[#allocation6 + $0x178] sm:$0xff]
        %v1087 = vld [vmem:[#allocation6 + $0x180] sm:$0xff]
        %v1088 = vld [vmem:[#allocation6 + $0x188] sm:$0xff]
        %v1089 = vld [vmem:[#allocation6 + $0x190] sm:$0xff]
        %v1090 = vld [vmem:[#allocation6 + $0x198] sm:$0xff]
        %v1091 = vld [vmem:[#allocation6 + $0x1a0] sm:$0xff]
        %v1092 = vld [vmem:[#allocation6 + $0x1a8] sm:$0xff]
        %v1093 = vld [vmem:[#allocation6 + $0x1b0] sm:$0xff]
        %v1094 = vld [vmem:[#allocation6 + $0x1b8] sm:$0xff]
        %v1095 = vld [vmem:[#allocation6 + $0x1c0] sm:$0xff]
        %v1096 = vld [vmem:[#allocation6 + $0x1c8] sm:$0xff]
        %v1097 = vld [vmem:[#allocation6 + $0x1d0] sm:$0xff]
        %v1098 = vld [vmem:[#allocation6 + $0x1d8] sm:$0xff]
        %v1099 = vld [vmem:[#allocation6 + $0x1e0] sm:$0xff]
        %v1100 = vld [vmem:[#allocation6 + $0x1e8] sm:$0xff]
        %v1101 = vld [vmem:[#allocation6 + $0x1f0] sm:$0xff]
        %v1102 = vld [vmem:[#allocation6 + $0x1f8] sm:$0xff]
        %v1103 = vld [vmem:[#allocation6 + $0x200] sm:$0xff]
        %v1104 = vld [vmem:[#allocation6 + $0x208] sm:$0xff]
        %v1105 = vld [vmem:[#allocation6 + $0x210] sm:$0xff]
        %v1106 = vld [vmem:[#allocation6 + $0x218] sm:$0xff]
        %v1107 = vld [vmem:[#allocation6 + $0x220] sm:$0xff]
        %v1108 = vld [vmem:[#allocation6 + $0x228] sm:$0xff]
        %v1109 = vld [vmem:[#allocation6 + $0x230] sm:$0xff]
        %v1110 = vld [vmem:[#allocation6 + $0x238] sm:$0xff]
        %v1111 = vld [vmem:[#allocation6 + $0x240] sm:$0xff]
        %v1112 = vld [vmem:[#allocation6 + $0x248] sm:$0xff]
        %v1113 = vld [vmem:[#allocation6 + $0x250] sm:$0xff]
        %v1114 = vld [vmem:[#allocation6 + $0x258] sm:$0xff]
        %v1115 = vld [vmem:[#allocation6 + $0x260] sm:$0xff]
        %v1116 = vld [vmem:[#allocation6 + $0x268] sm:$0xff]
        %v1117 = vld [vmem:[#allocation6 + $0x270] sm:$0xff]
        %v1118 = vld [vmem:[#allocation6 + $0x278] sm:$0xff]
        %v1119 = vld [vmem:[#allocation6 + $0x280] sm:$0xff]
        %v1120 = vld [vmem:[#allocation6 + $0x288] sm:$0xff]
        %v1121 = vld [vmem:[#allocation6 + $0x290] sm:$0xff]
        %v1122 = vld [vmem:[#allocation6 + $0x298] sm:$0xff]
        %v1123 = vld [vmem:[#allocation6 + $0x2a0] sm:$0xff]
        %v1124 = vld [vmem:[#allocation6 + $0x2a8] sm:$0xff]
        %v1125 = vld [vmem:[#allocation6 + $0x2b0] sm:$0xff]
        %v1126 = vld [vmem:[#allocation6 + $0x2b8] sm:$0xff]
        %v1127 = vld [vmem:[#allocation6 + $0x2c0] sm:$0xff]
        %v1128 = vld [vmem:[#allocation6 + $0x2c8] sm:$0xff]
        %v1129 = vld [vmem:[#allocation6 + $0x2d0] sm:$0xff]
        %v1130 = vld [vmem:[#allocation6 + $0x2d8] sm:$0xff]
        %v1131 = vld [vmem:[#allocation6 + $0x2e0] sm:$0xff]
        %v1132 = vld [vmem:[#allocation6 + $0x2e8] sm:$0xff]
        %v1133 = vld [vmem:[#allocation6 + $0x2f0] sm:$0xff]
        %v1134 = vld [vmem:[#allocation6 + $0x2f8] sm:$0xff]
        %v1135 = vld [vmem:[#allocation6 + $0x300] sm:$0xff]
        %v1136 = vld [vmem:[#allocation6 + $0x308] sm:$0xff]
        %v1137 = vld [vmem:[#allocation6 + $0x310] sm:$0xff]
        %v1138 = vld [vmem:[#allocation6 + $0x318] sm:$0xff]
        %v1139 = vld [vmem:[#allocation6 + $0x320] sm:$0xff]
        %v1140 = vld [vmem:[#allocation6 + $0x328] sm:$0xff]
        %v1141 = vld [vmem:[#allocation6 + $0x330] sm:$0xff]
        %v1142 = vld [vmem:[#allocation6 + $0x338] sm:$0xff]
        %v1143 = vld [vmem:[#allocation6 + $0x340] sm:$0xff]
        %v1144 = vld [vmem:[#allocation6 + $0x348] sm:$0xff]
        %v1145 = vld [vmem:[#allocation6 + $0x350] sm:$0xff]
        %v1146 = vld [vmem:[#allocation6 + $0x358] sm:$0xff]
        %v1147 = vld [vmem:[#allocation6 + $0x360] sm:$0xff]
        %v1148 = vld [vmem:[#allocation6 + $0x368] sm:$0xff]
        %v1149 = vld [vmem:[#allocation6 + $0x370] sm:$0xff]
        %v1150 = vld [vmem:[#allocation6 + $0x378] sm:$0xff]
        %v1151 = vld [vmem:[#allocation6 + $0x380] sm:$0xff]
        %v1152 = vld [vmem:[#allocation6 + $0x388] sm:$0xff]
        %v1153 = vld [vmem:[#allocation6 + $0x390] sm:$0xff]
        %v1154 = vld [vmem:[#allocation6 + $0x398] sm:$0xff]
        %v1155 = vld [vmem:[#allocation6 + $0x3a0] sm:$0xff]
        %v1156 = vld [vmem:[#allocation6 + $0x3a8] sm:$0xff]
        %v1157 = vld [vmem:[#allocation6 + $0x3b0] sm:$0xff]
        %v1158 = vld [vmem:[#allocation6 + $0x3b8] sm:$0xff]
        %v1159 = vld [vmem:[#allocation6 + $0x3c0] sm:$0xff]
        %v1160 = vld [vmem:[#allocation6 + $0x3c8] sm:$0xff]
        %v1161 = vld [vmem:[#allocation6 + $0x3d0] sm:$0xff]
        %v1162 = vld [vmem:[#allocation6 + $0x3d8] sm:$0xff]
        %v1163 = vld [vmem:[#allocation6 + $0x3e0] sm:$0xff]
        %v1164 = vld [vmem:[#allocation6 + $0x3e8] sm:$0xff]
        %v1165 = vld [vmem:[#allocation6 + $0x3f0] sm:$0xff]
        %v1166 = vld [vmem:[#allocation6 + $0x3f8] sm:$0xff]
        %v1167 = vld [vmem:[#allocation6 + $0x400] sm:$0xff]
        %v1168 = vld [vmem:[#allocation6 + $0x408] sm:$0xff]
        %v1169 = vld [vmem:[#allocation6 + $0x410] sm:$0xff]
        %v1170 = vld [vmem:[#allocation6 + $0x418] sm:$0xff]
        %v1171 = vld [vmem:[#allocation6 + $0x420] sm:$0xff]
        %v1172 = vld [vmem:[#allocation6 + $0x428] sm:$0xff]
        %v1173 = vld [vmem:[#allocation6 + $0x430] sm:$0xff]
        %v1174 = vld [vmem:[#allocation6 + $0x438] sm:$0xff]
        %v1175 = vld [vmem:[#allocation6 + $0x440] sm:$0xff]
        %v1176 = vld [vmem:[#allocation6 + $0x448] sm:$0xff]
        %v1177 = vld [vmem:[#allocation6 + $0x450] sm:$0xff]
        %v1178 = vld [vmem:[#allocation6 + $0x458] sm:$0xff]
        %v1179 = vld [vmem:[#allocation6 + $0x460] sm:$0xff]
        %v1180 = vld [vmem:[#allocation6 + $0x468] sm:$0xff]
        %v1181 = vld [vmem:[#allocation6 + $0x470] sm:$0xff]
        %v1182 = vld [vmem:[#allocation6 + $0x478] sm:$0xff]
        %v1183 = vld [vmem:[#allocation6 + $0x480] sm:$0xff]
        %v1184 = vld [vmem:[#allocation6 + $0x488] sm:$0xff]
        %v1185 = vld [vmem:[#allocation6 + $0x490] sm:$0xff]
        %v1186 = vld [vmem:[#allocation6 + $0x498] sm:$0xff]
        %v1187 = vld [vmem:[#allocation6 + $0x4a0] sm:$0xff]
        %v1188 = vld [vmem:[#allocation6 + $0x4a8] sm:$0xff]
        %v1189 = vld [vmem:[#allocation6 + $0x4b0] sm:$0xff]
        %v1190 = vld [vmem:[#allocation6 + $0x4b8] sm:$0xff]
        %v1191 = vld [vmem:[#allocation6 + $0x4c0] sm:$0xff]
        %v1192 = vld [vmem:[#allocation6 + $0x4c8] sm:$0xff]
        %v1193 = vld [vmem:[#allocation6 + $0x4d0] sm:$0xff]
        %v1194 = vld [vmem:[#allocation6 + $0x4d8] sm:$0xff]
        %v1195 = vld [vmem:[#allocation6 + $0x4e0] sm:$0xff]
        %v1196 = vld [vmem:[#allocation6 + $0x4e8] sm:$0xff]
        %v1197 = vld [vmem:[#allocation6 + $0x4f0] sm:$0xff]
        %v1198 = vld [vmem:[#allocation6 + $0x4f8] sm:$0xff]
        %v1199 = vld [vmem:[#allocation6 + $0x500] sm:$0xff]
        %v1200 = vld [vmem:[#allocation6 + $0x508] sm:$0xff]
        %v1201 = vld [vmem:[#allocation6 + $0x510] sm:$0xff]
        %v1202 = vld [vmem:[#allocation6 + $0x518] sm:$0xff]
        %v1203 = vld [vmem:[#allocation6 + $0x520] sm:$0xff]
        %v1204 = vld [vmem:[#allocation6 + $0x528] sm:$0xff]
        %v1205 = vld [vmem:[#allocation6 + $0x530] sm:$0xff]
        %v1206 = vld [vmem:[#allocation6 + $0x538] sm:$0xff]
        %v1207 = vld [vmem:[#allocation6 + $0x540] sm:$0xff]
        %v1208 = vld [vmem:[#allocation6 + $0x548] sm:$0xff]
        %v1209 = vld [vmem:[#allocation6 + $0x550] sm:$0xff]
        %v1210 = vld [vmem:[#allocation6 + $0x558] sm:$0xff]
        %v1211 = vld [vmem:[#allocation6 + $0x560] sm:$0xff]
        %v1212 = vld [vmem:[#allocation6 + $0x568] sm:$0xff]
        %v1213 = vld [vmem:[#allocation6 + $0x570] sm:$0xff]
        %v1214 = vld [vmem:[#allocation6 + $0x578] sm:$0xff]
        %v1215 = vld [vmem:[#allocation6 + $0x580] sm:$0xff]
        %v1216 = vld [vmem:[#allocation6 + $0x588] sm:$0xff]
        %v1217 = vld [vmem:[#allocation6 + $0x590] sm:$0xff]
        %v1218 = vld [vmem:[#allocation6 + $0x598] sm:$0xff]
        %v1219 = vld [vmem:[#allocation6 + $0x5a0] sm:$0xff]
        %v1220 = vld [vmem:[#allocation6 + $0x5a8] sm:$0xff]
        %v1221 = vld [vmem:[#allocation6 + $0x5b0] sm:$0xff]
        %v1222 = vld [vmem:[#allocation6 + $0x5b8] sm:$0xff]
        %v1223 = vld [vmem:[#allocation6 + $0x5c0] sm:$0xff]
        %v1224 = vld [vmem:[#allocation6 + $0x5c8] sm:$0xff]
        %v1225 = vld [vmem:[#allocation6 + $0x5d0] sm:$0xff]
        %v1226 = vld [vmem:[#allocation6 + $0x5d8] sm:$0xff]
        %v1227 = vld [vmem:[#allocation6 + $0x5e0] sm:$0xff]
        %v1228 = vld [vmem:[#allocation6 + $0x5e8] sm:$0xff]
        %v1229 = vld [vmem:[#allocation6 + $0x5f0] sm:$0xff]
        %v1230 = vld [vmem:[#allocation6 + $0x5f8] sm:$0xff]
        %v1231 = vld [vmem:[#allocation6 + $0x600] sm:$0xff]
        %v1232 = vld [vmem:[#allocation6 + $0x608] sm:$0xff]
        %v1233 = vld [vmem:[#allocation6 + $0x610] sm:$0xff]
        %v1234 = vld [vmem:[#allocation6 + $0x618] sm:$0xff]
        %v1235 = vld [vmem:[#allocation6 + $0x620] sm:$0xff]
        %v1236 = vld [vmem:[#allocation6 + $0x628] sm:$0xff]
        %v1237 = vld [vmem:[#allocation6 + $0x630] sm:$0xff]
        %v1238 = vld [vmem:[#allocation6 + $0x638] sm:$0xff]
        %v1239 = vld [vmem:[#allocation6 + $0x640] sm:$0xff]
        %v1240 = vld [vmem:[#allocation6 + $0x648] sm:$0xff]
        %v1241 = vld [vmem:[#allocation6 + $0x650] sm:$0xff]
        %v1242 = vld [vmem:[#allocation6 + $0x658] sm:$0xff]
        %v1243 = vld [vmem:[#allocation6 + $0x660] sm:$0xff]
        %v1244 = vld [vmem:[#allocation6 + $0x668] sm:$0xff]
        %v1245 = vld [vmem:[#allocation6 + $0x670] sm:$0xff]
        %v1246 = vld [vmem:[#allocation6 + $0x678] sm:$0xff]
        %v1247 = vld [vmem:[#allocation6 + $0x680] sm:$0xff]
        %v1248 = vld [vmem:[#allocation6 + $0x688] sm:$0xff]
        %v1249 = vld [vmem:[#allocation6 + $0x690] sm:$0xff]
        %v1250 = vld [vmem:[#allocation6 + $0x698] sm:$0xff]
        %v1251 = vld [vmem:[#allocation6 + $0x6a0] sm:$0xff]
        %v1252 = vld [vmem:[#allocation6 + $0x6a8] sm:$0xff]
        %v1253 = vld [vmem:[#allocation6 + $0x6b0] sm:$0xff]
        %v1254 = vld [vmem:[#allocation6 + $0x6b8] sm:$0xff]
        %v1255 = vld [vmem:[#allocation6 + $0x6c0] sm:$0xff]
        %v1256 = vld [vmem:[#allocation6 + $0x6c8] sm:$0xff]
        %v1257 = vld [vmem:[#allocation6 + $0x6d0] sm:$0xff]
        %v1258 = vld [vmem:[#allocation6 + $0x6d8] sm:$0xff]
        %v1259 = vld [vmem:[#allocation6 + $0x6e0] sm:$0xff]
        %v1260 = vld [vmem:[#allocation6 + $0x6e8] sm:$0xff]
        %v1261 = vld [vmem:[#allocation6 + $0x6f0] sm:$0xff]
        %v1262 = vld [vmem:[#allocation6 + $0x6f8] sm:$0xff]
        %v1263 = vld [vmem:[#allocation6 + $0x700] sm:$0xff]
        %v1264 = vld [vmem:[#allocation6 + $0x708] sm:$0xff]
        %v1265 = vld [vmem:[#allocation6 + $0x710] sm:$0xff]
        %v1266 = vld [vmem:[#allocation6 + $0x718] sm:$0xff]
        %v1267 = vld [vmem:[#allocation6 + $0x720] sm:$0xff]
        %v1268 = vld [vmem:[#allocation6 + $0x728] sm:$0xff]
        %v1269 = vld [vmem:[#allocation6 + $0x730] sm:$0xff]
        %v1270 = vld [vmem:[#allocation6 + $0x738] sm:$0xff]
        %v1271 = vld [vmem:[#allocation6 + $0x740] sm:$0xff]
        %v1272 = vld [vmem:[#allocation6 + $0x748] sm:$0xff]
        %v1273 = vld [vmem:[#allocation6 + $0x750] sm:$0xff]
        %v1274 = vld [vmem:[#allocation6 + $0x758] sm:$0xff]
        %v1275 = vld [vmem:[#allocation6 + $0x760] sm:$0xff]
        %v1276 = vld [vmem:[#allocation6 + $0x768] sm:$0xff]
        %v1277 = vld [vmem:[#allocation6 + $0x770] sm:$0xff]
        %v1278 = vld [vmem:[#allocation6 + $0x778] sm:$0xff]
        %v1279 = vld [vmem:[#allocation6 + $0x780] sm:$0xff]
        %v1280 = vld [vmem:[#allocation6 + $0x788] sm:$0xff]
        %v1281 = vld [vmem:[#allocation6 + $0x790] sm:$0xff]
        %v1282 = vld [vmem:[#allocation6 + $0x798] sm:$0xff]
        %v1283 = vld [vmem:[#allocation6 + $0x7a0] sm:$0xff]
        %v1284 = vld [vmem:[#allocation6 + $0x7a8] sm:$0xff]
        %v1285 = vld [vmem:[#allocation6 + $0x7b0] sm:$0xff]
        %v1286 = vld [vmem:[#allocation6 + $0x7b8] sm:$0xff]
        %v1287 = vld [vmem:[#allocation6 + $0x7c0] sm:$0xff]
        %v1288 = vld [vmem:[#allocation6 + $0x7c8] sm:$0xff]
        %v1289 = vld [vmem:[#allocation6 + $0x7d0] sm:$0xff]
        %v1290 = vld [vmem:[#allocation6 + $0x7d8] sm:$0xff]
        %v1291 = vld [vmem:[#allocation6 + $0x7e0] sm:$0xff]
        %v1292 = vld [vmem:[#allocation6 + $0x7e8] sm:$0xff]
        %v1293 = vld [vmem:[#allocation6 + $0x7f0] sm:$0xff]
        %v1294 = vld [vmem:[#allocation6 + $0x7f8] sm:$0xff]
        %v1295 = vld [vmem:[#allocation6 + $0x800] sm:$0xff]
        %v1296 = vld [vmem:[#allocation6 + $0x808] sm:$0xff]
        %v1297 = vld [vmem:[#allocation6 + $0x810] sm:$0xff]
        %v1298 = vld [vmem:[#allocation6 + $0x818] sm:$0xff]
        %v1299 = vld [vmem:[#allocation6 + $0x820] sm:$0xff]
        %v1300 = vld [vmem:[#allocation6 + $0x828] sm:$0xff]
        %v1301 = vld [vmem:[#allocation6 + $0x830] sm:$0xff]
        %v1302 = vld [vmem:[#allocation6 + $0x838] sm:$0xff]
        %v1303 = vld [vmem:[#allocation6 + $0x840] sm:$0xff]
        %v1304 = vld [vmem:[#allocation6 + $0x848] sm:$0xff]
        %v1305 = vld [vmem:[#allocation6 + $0x850] sm:$0xff]
        %v1306 = vld [vmem:[#allocation6 + $0x858] sm:$0xff]
        %v1307 = vld [vmem:[#allocation6 + $0x860] sm:$0xff]
        %v1308 = vld [vmem:[#allocation6 + $0x868] sm:$0xff]
        %v1309 = vld [vmem:[#allocation6 + $0x870] sm:$0xff]
        %v1310 = vld [vmem:[#allocation6 + $0x878] sm:$0xff]
        %v1311 = vld [vmem:[#allocation6 + $0x880] sm:$0xff]
        %v1312 = vld [vmem:[#allocation6 + $0x888] sm:$0xff]
        %v1313 = vld [vmem:[#allocation6 + $0x890] sm:$0xff]
        %v1314 = vld [vmem:[#allocation6 + $0x898] sm:$0xff]
        %v1315 = vld [vmem:[#allocation6 + $0x8a0] sm:$0xff]
        %v1316 = vld [vmem:[#allocation6 + $0x8a8] sm:$0xff]
        %v1317 = vld [vmem:[#allocation6 + $0x8b0] sm:$0xff]
        %v1318 = vld [vmem:[#allocation6 + $0x8b8] sm:$0xff]
        %v1319 = vld [vmem:[#allocation6 + $0x8c0] sm:$0xff]
        %v1320 = vld [vmem:[#allocation6 + $0x8c8] sm:$0xff]
        %v1321 = vld [vmem:[#allocation6 + $0x8d0] sm:$0xff]
        %v1322 = vld [vmem:[#allocation6 + $0x8d8] sm:$0xff]
        %v1323 = vld [vmem:[#allocation6 + $0x8e0] sm:$0xff]
        %v1324 = vld [vmem:[#allocation6 + $0x8e8] sm:$0xff]
        %v1325 = vld [vmem:[#allocation6 + $0x8f0] sm:$0xff]
        %v1326 = vld [vmem:[#allocation6 + $0x8f8] sm:$0xff]
        %v1327 = vld [vmem:[#allocation6 + $0x900] sm:$0xff]
        %v1328 = vld [vmem:[#allocation6 + $0x908] sm:$0xff]
        %v1329 = vld [vmem:[#allocation6 + $0x910] sm:$0xff]
        %v1330 = vld [vmem:[#allocation6 + $0x918] sm:$0xff]
        %v1331 = vld [vmem:[#allocation6 + $0x920] sm:$0xff]
        %v1332 = vld [vmem:[#allocation6 + $0x928] sm:$0xff]
        %v1333 = vld [vmem:[#allocation6 + $0x930] sm:$0xff]
        %v1334 = vld [vmem:[#allocation6 + $0x938] sm:$0xff]
        %v1335 = vld [vmem:[#allocation6 + $0x940] sm:$0xff]
        %v1336 = vld [vmem:[#allocation6 + $0x948] sm:$0xff]
        %v1337 = vld [vmem:[#allocation6 + $0x950] sm:$0xff]
        %v1338 = vld [vmem:[#allocation6 + $0x958] sm:$0xff]
        %v1339 = vld [vmem:[#allocation6 + $0x960] sm:$0xff]
        %v1340 = vld [vmem:[#allocation6 + $0x968] sm:$0xff]
        %v1341 = vld [vmem:[#allocation6 + $0x970] sm:$0xff]
        %v1342 = vld [vmem:[#allocation6 + $0x978] sm:$0xff]
        %v1343 = vld [vmem:[#allocation6 + $0x980] sm:$0xff]
        %v1344 = vld [vmem:[#allocation6 + $0x988] sm:$0xff]
        %v1345 = vld [vmem:[#allocation6 + $0x990] sm:$0xff]
        %v1346 = vld [vmem:[#allocation6 + $0x998] sm:$0xff]
        %v1347 = vld [vmem:[#allocation6 + $0x9a0] sm:$0xff]
        %v1348 = vld [vmem:[#allocation6 + $0x9a8] sm:$0xff]
        %v1349 = vld [vmem:[#allocation6 + $0x9b0] sm:$0xff]
        %v1350 = vld [vmem:[#allocation6 + $0x9b8] sm:$0xff]
        %v1351 = vld [vmem:[#allocation6 + $0x9c0] sm:$0xff]
        %v1352 = vld [vmem:[#allocation6 + $0x9c8] sm:$0xff]
        %v1353 = vld [vmem:[#allocation6 + $0x9d0] sm:$0xff]
        %v1354 = vld [vmem:[#allocation6 + $0x9d8] sm:$0xff]
        %v1355 = vld [vmem:[#allocation6 + $0x9e0] sm:$0xff]
        %v1356 = vld [vmem:[#allocation6 + $0x9e8] sm:$0xff]
        %v1357 = vld [vmem:[#allocation6 + $0x9f0] sm:$0xff]
        %v1358 = vld [vmem:[#allocation6 + $0x9f8] sm:$0xff]
        %v1359 = vld [vmem:[#allocation6 + $0xa00] sm:$0xff]
        %v1360 = vld [vmem:[#allocation6 + $0xa08] sm:$0xff]
        %v1361 = vld [vmem:[#allocation6 + $0xa10] sm:$0xff]
        %v1362 = vld [vmem:[#allocation6 + $0xa18] sm:$0xff]
        %v1363 = vld [vmem:[#allocation6 + $0xa20] sm:$0xff]
        %v1364 = vld [vmem:[#allocation6 + $0xa28] sm:$0xff]
        %v1365 = vld [vmem:[#allocation6 + $0xa30] sm:$0xff]
        %v1366 = vld [vmem:[#allocation6 + $0xa38] sm:$0xff]
        %v1367 = vld [vmem:[#allocation6 + $0xa40] sm:$0xff]
        %v1368 = vld [vmem:[#allocation6 + $0xa48] sm:$0xff]
        %v1369 = vld [vmem:[#allocation6 + $0xa50] sm:$0xff]
        %v1370 = vld [vmem:[#allocation6 + $0xa58] sm:$0xff]
        %v1371 = vld [vmem:[#allocation6 + $0xa60] sm:$0xff]
        %v1372 = vld [vmem:[#allocation6 + $0xa68] sm:$0xff]
        %v1373 = vld [vmem:[#allocation6 + $0xa70] sm:$0xff]
        %v1374 = vld [vmem:[#allocation6 + $0xa78] sm:$0xff]
        %v1375 = vld [vmem:[#allocation6 + $0xa80] sm:$0xff]
        %v1376 = vld [vmem:[#allocation6 + $0xa88] sm:$0xff]
        %v1377 = vld [vmem:[#allocation6 + $0xa90] sm:$0xff]
        %v1378 = vld [vmem:[#allocation6 + $0xa98] sm:$0xff]
        %v1379 = vld [vmem:[#allocation6 + $0xaa0] sm:$0xff]
        %v1380 = vld [vmem:[#allocation6 + $0xaa8] sm:$0xff]
        %v1381 = vld [vmem:[#allocation6 + $0xab0] sm:$0xff]
        %v1382 = vld [vmem:[#allocation6 + $0xab8] sm:$0xff]
        %v1383 = vld [vmem:[#allocation6 + $0xac0] sm:$0xff]
        %v1384 = vld [vmem:[#allocation6 + $0xac8] sm:$0xff]
        %v1385 = vld [vmem:[#allocation6 + $0xad0] sm:$0xff]
        %v1386 = vld [vmem:[#allocation6 + $0xad8] sm:$0xff]
        %v1387 = vld [vmem:[#allocation6 + $0xae0] sm:$0xff]
        %v1388 = vld [vmem:[#allocation6 + $0xae8] sm:$0xff]
        %v1389 = vld [vmem:[#allocation6 + $0xaf0] sm:$0xff]
        %v1390 = vld [vmem:[#allocation6 + $0xaf8] sm:$0xff]
        %v1391 = vld [vmem:[#allocation6 + $0xb00] sm:$0xff]
        %v1392 = vld [vmem:[#allocation6 + $0xb08] sm:$0xff]
        %v1393 = vld [vmem:[#allocation6 + $0xb10] sm:$0xff]
        %v1394 = vld [vmem:[#allocation6 + $0xb18] sm:$0xff]
        %v1395 = vld [vmem:[#allocation6 + $0xb20] sm:$0xff]
        %v1396 = vld [vmem:[#allocation6 + $0xb28] sm:$0xff]
        %v1397 = vld [vmem:[#allocation6 + $0xb30] sm:$0xff]
        %v1398 = vld [vmem:[#allocation6 + $0xb38] sm:$0xff]
        %v1399 = vld [vmem:[#allocation6 + $0xb40] sm:$0xff]
        %v1400 = vld [vmem:[#allocation6 + $0xb48] sm:$0xff]
        %v1401 = vld [vmem:[#allocation6 + $0xb50] sm:$0xff]
        %v1402 = vld [vmem:[#allocation6 + $0xb58] sm:$0xff]
        %v1403 = vld [vmem:[#allocation6 + $0xb60] sm:$0xff]
        %v1404 = vld [vmem:[#allocation6 + $0xb68] sm:$0xff]
        %v1405 = vld [vmem:[#allocation6 + $0xb70] sm:$0xff]
        %v1406 = vld [vmem:[#allocation6 + $0xb78] sm:$0xff]
        %v1407 = vld [vmem:[#allocation6 + $0xb80] sm:$0xff]
        %v1408 = vld [vmem:[#allocation6 + $0xb88] sm:$0xff]
        %v1409 = vld [vmem:[#allocation6 + $0xb90] sm:$0xff]
        %v1410 = vld [vmem:[#allocation6 + $0xb98] sm:$0xff]
        %v1411 = vld [vmem:[#allocation6 + $0xba0] sm:$0xff]
        %v1412 = vld [vmem:[#allocation6 + $0xba8] sm:$0xff]
        %v1413 = vld [vmem:[#allocation6 + $0xbb0] sm:$0xff]
        %v1414 = vld [vmem:[#allocation6 + $0xbb8] sm:$0xff]
        %v1415 = vld [vmem:[#allocation6 + $0xbc0] sm:$0xff]
        %v1416 = vld [vmem:[#allocation6 + $0xbc8] sm:$0xff]
        %v1417 = vld [vmem:[#allocation6 + $0xbd0] sm:$0xff]
        %v1418 = vld [vmem:[#allocation6 + $0xbd8] sm:$0xff]
        %v1419 = vld [vmem:[#allocation6 + $0xbe0] sm:$0xff]
        %v1420 = vld [vmem:[#allocation6 + $0xbe8] sm:$0xff]
        %v1421 = vld [vmem:[#allocation6 + $0xbf0] sm:$0xff]
        %v1422 = vld [vmem:[#allocation6 + $0xbf8] sm:$0xff]
        %v1423 = vld [vmem:[#allocation6 + $0xc00] sm:$0xff]
        %v1424 = vld [vmem:[#allocation6 + $0xc08] sm:$0xff]
        %v1425 = vld [vmem:[#allocation6 + $0xc10] sm:$0xff]
        %v1426 = vld [vmem:[#allocation6 + $0xc18] sm:$0xff]
        %v1427 = vld [vmem:[#allocation6 + $0xc20] sm:$0xff]
        %v1428 = vld [vmem:[#allocation6 + $0xc28] sm:$0xff]
        %v1429 = vld [vmem:[#allocation6 + $0xc30] sm:$0xff]
        %v1430 = vld [vmem:[#allocation6 + $0xc38] sm:$0xff]
        %v1431 = vld [vmem:[#allocation6 + $0xc40] sm:$0xff]
        %v1432 = vld [vmem:[#allocation6 + $0xc48] sm:$0xff]
        %v1433 = vld [vmem:[#allocation6 + $0xc50] sm:$0xff]
        %v1434 = vld [vmem:[#allocation6 + $0xc58] sm:$0xff]
        %v1435 = vld [vmem:[#allocation6 + $0xc60] sm:$0xff]
        %v1436 = vld [vmem:[#allocation6 + $0xc68] sm:$0xff]
        %v1437 = vld [vmem:[#allocation6 + $0xc70] sm:$0xff]
        %v1438 = vld [vmem:[#allocation6 + $0xc78] sm:$0xff]
        %v1439 = vld [vmem:[#allocation6 + $0xc80] sm:$0xff]
        %v1440 = vld [vmem:[#allocation6 + $0xc88] sm:$0xff]
        %v1441 = vld [vmem:[#allocation6 + $0xc90] sm:$0xff]
        %v1442 = vld [vmem:[#allocation6 + $0xc98] sm:$0xff]
        %v1443 = vld [vmem:[#allocation6 + $0xca0] sm:$0xff]
        %v1444 = vld [vmem:[#allocation6 + $0xca8] sm:$0xff]
        %v1445 = vld [vmem:[#allocation6 + $0xcb0] sm:$0xff]
        %v1446 = vld [vmem:[#allocation6 + $0xcb8] sm:$0xff]
        %v1447 = vld [vmem:[#allocation6 + $0xcc0] sm:$0xff]
        %v1448 = vld [vmem:[#allocation6 + $0xcc8] sm:$0xff]
        %v1449 = vld [vmem:[#allocation6 + $0xcd0] sm:$0xff]
        %v1450 = vld [vmem:[#allocation6 + $0xcd8] sm:$0xff]
        %v1451 = vld [vmem:[#allocation6 + $0xce0] sm:$0xff]
        %v1452 = vld [vmem:[#allocation6 + $0xce8] sm:$0xff]
        %v1453 = vld [vmem:[#allocation6 + $0xcf0] sm:$0xff]
        %v1454 = vld [vmem:[#allocation6 + $0xcf8] sm:$0xff]
        %v1455 = vld [vmem:[#allocation6 + $0xd00] sm:$0xff]
        %v1456 = vld [vmem:[#allocation6 + $0xd08] sm:$0xff]
        %v1457 = vld [vmem:[#allocation6 + $0xd10] sm:$0xff]
        %v1458 = vld [vmem:[#allocation6 + $0xd18] sm:$0xff]
        %v1459 = vld [vmem:[#allocation6 + $0xd20] sm:$0xff]
        %v1460 = vld [vmem:[#allocation6 + $0xd28] sm:$0xff]
        %v1461 = vld [vmem:[#allocation6 + $0xd30] sm:$0xff]
        %v1462 = vld [vmem:[#allocation6 + $0xd38] sm:$0xff]
        %v1463 = vld [vmem:[#allocation6 + $0xd40] sm:$0xff]
        %v1464 = vld [vmem:[#allocation6 + $0xd48] sm:$0xff]
        %v1465 = vld [vmem:[#allocation6 + $0xd50] sm:$0xff]
        %v1466 = vld [vmem:[#allocation6 + $0xd58] sm:$0xff]
        %v1467 = vld [vmem:[#allocation6 + $0xd60] sm:$0xff]
        %v1468 = vld [vmem:[#allocation6 + $0xd68] sm:$0xff]
        %v1469 = vld [vmem:[#allocation6 + $0xd70] sm:$0xff]
        %v1470 = vld [vmem:[#allocation6 + $0xd78] sm:$0xff]
        %v1471 = vld [vmem:[#allocation6 + $0xd80] sm:$0xff]
        %v1472 = vld [vmem:[#allocation6 + $0xd88] sm:$0xff]
        %v1473 = vld [vmem:[#allocation6 + $0xd90] sm:$0xff]
        %v1474 = vld [vmem:[#allocation6 + $0xd98] sm:$0xff]
        %v1475 = vld [vmem:[#allocation6 + $0xda0] sm:$0xff]
        %v1476 = vld [vmem:[#allocation6 + $0xda8] sm:$0xff]
        %v1477 = vld [vmem:[#allocation6 + $0xdb0] sm:$0xff]
        %v1478 = vld [vmem:[#allocation6 + $0xdb8] sm:$0xff]
        %v1479 = vld [vmem:[#allocation6 + $0xdc0] sm:$0xff]
        %v1480 = vld [vmem:[#allocation6 + $0xdc8] sm:$0xff]
        %v1481 = vld [vmem:[#allocation6 + $0xdd0] sm:$0xff]
        %v1482 = vld [vmem:[#allocation6 + $0xdd8] sm:$0xff]
        %v1483 = vld [vmem:[#allocation6 + $0xde0] sm:$0xff]
        %v1484 = vld [vmem:[#allocation6 + $0xde8] sm:$0xff]
        %v1485 = vld [vmem:[#allocation6 + $0xdf0] sm:$0xff]
        %v1486 = vld [vmem:[#allocation6 + $0xdf8] sm:$0xff]
        %v1487 = vld [vmem:[#allocation6 + $0xe00] sm:$0xff]
        %v1488 = vld [vmem:[#allocation6 + $0xe08] sm:$0xff]
        %v1489 = vld [vmem:[#allocation6 + $0xe10] sm:$0xff]
        %v1490 = vld [vmem:[#allocation6 + $0xe18] sm:$0xff]
        %v1491 = vld [vmem:[#allocation6 + $0xe20] sm:$0xff]
        %v1492 = vld [vmem:[#allocation6 + $0xe28] sm:$0xff]
        %v1493 = vld [vmem:[#allocation6 + $0xe30] sm:$0xff]
        %v1494 = vld [vmem:[#allocation6 + $0xe38] sm:$0xff]
        %v1495 = vld [vmem:[#allocation6 + $0xe40] sm:$0xff]
        %v1496 = vld [vmem:[#allocation6 + $0xe48] sm:$0xff]
        %v1497 = vld [vmem:[#allocation6 + $0xe50] sm:$0xff]
        %v1498 = vld [vmem:[#allocation6 + $0xe58] sm:$0xff]
        %v1499 = vld [vmem:[#allocation6 + $0xe60] sm:$0xff]
        %v1500 = vld [vmem:[#allocation6 + $0xe68] sm:$0xff]
        %v1501 = vld [vmem:[#allocation6 + $0xe70] sm:$0xff]
        %v1502 = vld [vmem:[#allocation6 + $0xe78] sm:$0xff]
        %v1503 = vld [vmem:[#allocation6 + $0xe80] sm:$0xff]
        %v1504 = vld [vmem:[#allocation6 + $0xe88] sm:$0xff]
        %v1505 = vld [vmem:[#allocation6 + $0xe90] sm:$0xff]
        %v1506 = vld [vmem:[#allocation6 + $0xe98] sm:$0xff]
        %v1507 = vld [vmem:[#allocation6 + $0xea0] sm:$0xff]
        %v1508 = vld [vmem:[#allocation6 + $0xea8] sm:$0xff]
        %v1509 = vld [vmem:[#allocation6 + $0xeb0] sm:$0xff]
        %v1510 = vld [vmem:[#allocation6 + $0xeb8] sm:$0xff]
        %v1511 = vld [vmem:[#allocation6 + $0xec0] sm:$0xff]
        %v1512 = vld [vmem:[#allocation6 + $0xec8] sm:$0xff]
        %v1513 = vld [vmem:[#allocation6 + $0xed0] sm:$0xff]
        %v1514 = vld [vmem:[#allocation6 + $0xed8] sm:$0xff]
        %v1515 = vld [vmem:[#allocation6 + $0xee0] sm:$0xff]
        %v1516 = vld [vmem:[#allocation6 + $0xee8] sm:$0xff]
        %v1517 = vld [vmem:[#allocation6 + $0xef0] sm:$0xff]
        %v1518 = vld [vmem:[#allocation6 + $0xef8] sm:$0xff]
        %v1519 = vld [vmem:[#allocation6 + $0xf00] sm:$0xff]
        %v1520 = vld [vmem:[#allocation6 + $0xf08] sm:$0xff]
        %v1521 = vld [vmem:[#allocation6 + $0xf10] sm:$0xff]
        %v1522 = vld [vmem:[#allocation6 + $0xf18] sm:$0xff]
        %v1523 = vld [vmem:[#allocation6 + $0xf20] sm:$0xff]
        %v1524 = vld [vmem:[#allocation6 + $0xf28] sm:$0xff]
        %v1525 = vld [vmem:[#allocation6 + $0xf30] sm:$0xff]
        %v1526 = vld [vmem:[#allocation6 + $0xf38] sm:$0xff]
        %v1527 = vld [vmem:[#allocation6 + $0xf40] sm:$0xff]
        %v1528 = vld [vmem:[#allocation6 + $0xf48] sm:$0xff]
        %v1529 = vld [vmem:[#allocation6 + $0xf50] sm:$0xff]
        %v1530 = vld [vmem:[#allocation6 + $0xf58] sm:$0xff]
        %v1531 = vld [vmem:[#allocation6 + $0xf60] sm:$0xff]
        %v1532 = vld [vmem:[#allocation6 + $0xf68] sm:$0xff]
        %v1533 = vld [vmem:[#allocation6 + $0xf70] sm:$0xff]
        %v1534 = vld [vmem:[#allocation6 + $0xf78] sm:$0xff]
        %v1535 = vld [vmem:[#allocation6 + $0xf80] sm:$0xff]
        %v1536 = vld [vmem:[#allocation6 + $0xf88] sm:$0xff]
        %v1537 = vld [vmem:[#allocation6 + $0xf90] sm:$0xff]
        %v1538 = vld [vmem:[#allocation6 + $0xf98] sm:$0xff]
        %v1539 = vld [vmem:[#allocation6 + $0xfa0] sm:$0xff]
        %v1540 = vld [vmem:[#allocation6 + $0xfa8] sm:$0xff]
        %v1541 = vld [vmem:[#allocation6 + $0xfb0] sm:$0xff]
        %v1542 = vld [vmem:[#allocation6 + $0xfb8] sm:$0xff]
        %v1543 = vld [vmem:[#allocation6 + $0xfc0] sm:$0xff]
        %v1544 = vld [vmem:[#allocation6 + $0xfc8] sm:$0xff]
        %v1545 = vld [vmem:[#allocation6 + $0xfd0] sm:$0xff]
        %v1546 = vld [vmem:[#allocation6 + $0xfd8] sm:$0xff]
        %v1547 = vld [vmem:[#allocation6 + $0xfe0] sm:$0xff]
        %v1548 = vld [vmem:[#allocation6 + $0xfe8] sm:$0xff]
        %v1549 = vld [vmem:[#allocation6 + $0xff0] sm:$0xff]
        %v1550 = vld [vmem:[#allocation6 + $0xff8] sm:$0xff]
        %v1551 = vld [vmem:[#allocation6 + $0x1000] sm:$0xff]
        %v1552 = vld [vmem:[#allocation6 + $0x1008] sm:$0xff]
        %v1553 = vld [vmem:[#allocation6 + $0x1010] sm:$0xff]
        %v1554 = vld [vmem:[#allocation6 + $0x1018] sm:$0xff]
        %v1555 = vld [vmem:[#allocation6 + $0x1020] sm:$0xff]
        %v1556 = vld [vmem:[#allocation6 + $0x1028] sm:$0xff]
        %v1557 = vld [vmem:[#allocation6 + $0x1030] sm:$0xff]
        %v1558 = vld [vmem:[#allocation6 + $0x1038] sm:$0xff]
        %v1559 = vld [vmem:[#allocation6 + $0x1040] sm:$0xff]
        %v1560 = vld [vmem:[#allocation6 + $0x1048] sm:$0xff]
        %v1561 = vld [vmem:[#allocation6 + $0x1050] sm:$0xff]
        %v1562 = vld [vmem:[#allocation6 + $0x1058] sm:$0xff]
        %v1563 = vld [vmem:[#allocation6 + $0x1060] sm:$0xff]
        %v1564 = vld [vmem:[#allocation6 + $0x1068] sm:$0xff]
        %v1565 = vld [vmem:[#allocation6 + $0x1070] sm:$0xff]
        %v1566 = vld [vmem:[#allocation6 + $0x1078] sm:$0xff]
        %v1567 = vld [vmem:[#allocation6 + $0x1080] sm:$0xff]
        %v1568 = vld [vmem:[#allocation6 + $0x1088] sm:$0xff]
        %v1569 = vld [vmem:[#allocation6 + $0x1090] sm:$0xff]
        %v1570 = vld [vmem:[#allocation6 + $0x1098] sm:$0xff]
        %v1571 = vld [vmem:[#allocation6 + $0x10a0] sm:$0xff]
        %v1572 = vld [vmem:[#allocation6 + $0x10a8] sm:$0xff]
        %v1573 = vld [vmem:[#allocation6 + $0x10b0] sm:$0xff]
        %v1574 = vld [vmem:[#allocation6 + $0x10b8] sm:$0xff]
        %v1575 = vld [vmem:[#allocation6 + $0x10c0] sm:$0xff]
        %v1576 = vld [vmem:[#allocation6 + $0x10c8] sm:$0xff]
        %v1577 = vld [vmem:[#allocation6 + $0x10d0] sm:$0xff]
        %v1578 = vld [vmem:[#allocation6 + $0x10d8] sm:$0xff]
        %v1579 = vld [vmem:[#allocation6 + $0x10e0] sm:$0xff]
        %v1580 = vld [vmem:[#allocation6 + $0x10e8] sm:$0xff]
        %v1581 = vld [vmem:[#allocation6 + $0x10f0] sm:$0xff]
        %v1582 = vld [vmem:[#allocation6 + $0x10f8] sm:$0xff]
        %v1583 = vld [vmem:[#allocation6 + $0x1100] sm:$0xff]
        %v1584 = vld [vmem:[#allocation6 + $0x1108] sm:$0xff]
        %v1585 = vld [vmem:[#allocation6 + $0x1110] sm:$0xff]
        %v1586 = vld [vmem:[#allocation6 + $0x1118] sm:$0xff]
        %v1587 = vld [vmem:[#allocation6 + $0x1120] sm:$0xff]
        %v1588 = vld [vmem:[#allocation6 + $0x1128] sm:$0xff]
        %v1589 = vld [vmem:[#allocation6 + $0x1130] sm:$0xff]
        %v1590 = vld [vmem:[#allocation6 + $0x1138] sm:$0xff]
        %v1591 = vld [vmem:[#allocation6 + $0x1140] sm:$0xff]
        %v1592 = vld [vmem:[#allocation6 + $0x1148] sm:$0xff]
        %v1593 = vld [vmem:[#allocation6 + $0x1150] sm:$0xff]
        %v1594 = vld [vmem:[#allocation6 + $0x1158] sm:$0xff]
        %v1595 = vld [vmem:[#allocation6 + $0x1160] sm:$0xff]
        %v1596 = vld [vmem:[#allocation6 + $0x1168] sm:$0xff]
        %v1597 = vld [vmem:[#allocation6 + $0x1170] sm:$0xff]
        %v1598 = vld [vmem:[#allocation6 + $0x1178] sm:$0xff]
        %v1599 = vld [vmem:[#allocation6 + $0x1180] sm:$0xff]
        %v1600 = vld [vmem:[#allocation6 + $0x1188] sm:$0xff]
        %v1601 = vld [vmem:[#allocation6 + $0x1190] sm:$0xff]
        %v1602 = vld [vmem:[#allocation6 + $0x1198] sm:$0xff]
        %v1603 = vld [vmem:[#allocation6 + $0x11a0] sm:$0xff]
        %v1604 = vld [vmem:[#allocation6 + $0x11a8] sm:$0xff]
        %v1605 = vld [vmem:[#allocation6 + $0x11b0] sm:$0xff]
        %v1606 = vld [vmem:[#allocation6 + $0x11b8] sm:$0xff]
        %v1607 = vld [vmem:[#allocation6 + $0x11c0] sm:$0xff]
        %v1608 = vld [vmem:[#allocation6 + $0x11c8] sm:$0xff]
        %v1609 = vld [vmem:[#allocation6 + $0x11d0] sm:$0xff]
        %v1610 = vld [vmem:[#allocation6 + $0x11d8] sm:$0xff]
        %v1611 = vld [vmem:[#allocation6 + $0x11e0] sm:$0xff]
        %v1612 = vld [vmem:[#allocation6 + $0x11e8] sm:$0xff]
        %v1613 = vld [vmem:[#allocation6 + $0x11f0] sm:$0xff]
        %v1614 = vld [vmem:[#allocation6 + $0x11f8] sm:$0xff]
        %v1615 = vld [vmem:[#allocation6 + $0x1200] sm:$0xff]
        %v1616 = vld [vmem:[#allocation6 + $0x1208] sm:$0xff]
        %v1617 = vld [vmem:[#allocation6 + $0x1210] sm:$0xff]
        %v1618 = vld [vmem:[#allocation6 + $0x1218] sm:$0xff]
        %v1619 = vld [vmem:[#allocation6 + $0x1220] sm:$0xff]
        %v1620 = vld [vmem:[#allocation6 + $0x1228] sm:$0xff]
        %v1621 = vld [vmem:[#allocation6 + $0x1230] sm:$0xff]
        %v1622 = vld [vmem:[#allocation6 + $0x1238] sm:$0xff]
        %v1623 = vld [vmem:[#allocation6 + $0x1240] sm:$0xff]
        %v1624 = vld [vmem:[#allocation6 + $0x1248] sm:$0xff]
        %v1625 = vld [vmem:[#allocation6 + $0x1250] sm:$0xff]
        %v1626 = vld [vmem:[#allocation6 + $0x1258] sm:$0xff]
        %v1627 = vld [vmem:[#allocation6 + $0x1260] sm:$0xff]
        %v1628 = vld [vmem:[#allocation6 + $0x1268] sm:$0xff]
        %v1629 = vld [vmem:[#allocation6 + $0x1270] sm:$0xff]
        %v1630 = vld [vmem:[#allocation6 + $0x1278] sm:$0xff]
        %v1631 = vld [vmem:[#allocation6 + $0x1280] sm:$0xff]
        %v1632 = vld [vmem:[#allocation6 + $0x1288] sm:$0xff]
        %v1633 = vld [vmem:[#allocation6 + $0x1290] sm:$0xff]
        %v1634 = vld [vmem:[#allocation6 + $0x1298] sm:$0xff]
        %v1635 = vld [vmem:[#allocation6 + $0x12a0] sm:$0xff]
        %v1636 = vld [vmem:[#allocation6 + $0x12a8] sm:$0xff]
        %v1637 = vld [vmem:[#allocation6 + $0x12b0] sm:$0xff]
        %v1638 = vld [vmem:[#allocation6 + $0x12b8] sm:$0xff]
        %v1639 = vld [vmem:[#allocation6 + $0x12c0] sm:$0xff]
        %v1640 = vld [vmem:[#allocation6 + $0x12c8] sm:$0xff]
        %v1641 = vld [vmem:[#allocation6 + $0x12d0] sm:$0xff]
        %v1642 = vld [vmem:[#allocation6 + $0x12d8] sm:$0xff]
        %v1643 = vld [vmem:[#allocation6 + $0x12e0] sm:$0xff]
        %v1644 = vld [vmem:[#allocation6 + $0x12e8] sm:$0xff]
        %v1645 = vld [vmem:[#allocation6 + $0x12f0] sm:$0xff]
        %v1646 = vld [vmem:[#allocation6 + $0x12f8] sm:$0xff]
        %v1647 = vld [vmem:[#allocation6 + $0x1300] sm:$0xff]
        %v1648 = vld [vmem:[#allocation6 + $0x1308] sm:$0xff]
        %v1649 = vld [vmem:[#allocation6 + $0x1310] sm:$0xff]
        %v1650 = vld [vmem:[#allocation6 + $0x1318] sm:$0xff]
        %v1651 = vld [vmem:[#allocation6 + $0x1320] sm:$0xff]
        %v1652 = vld [vmem:[#allocation6 + $0x1328] sm:$0xff]
        %v1653 = vld [vmem:[#allocation6 + $0x1330] sm:$0xff]
        %v1654 = vld [vmem:[#allocation6 + $0x1338] sm:$0xff]
        %v1655 = vld [vmem:[#allocation6 + $0x1340] sm:$0xff]
        %v1656 = vld [vmem:[#allocation6 + $0x1348] sm:$0xff]
        %v1657 = vld [vmem:[#allocation6 + $0x1350] sm:$0xff]
        %v1658 = vld [vmem:[#allocation6 + $0x1358] sm:$0xff]
        %v1659 = vld [vmem:[#allocation6 + $0x1360] sm:$0xff]
        %v1660 = vld [vmem:[#allocation6 + $0x1368] sm:$0xff]
        %v1661 = vld [vmem:[#allocation6 + $0x1370] sm:$0xff]
        %v1662 = vld [vmem:[#allocation6 + $0x1378] sm:$0xff]
        %v1663 = vld [vmem:[#allocation6 + $0x1380] sm:$0xff]
        %v1664 = vld [vmem:[#allocation6 + $0x1388] sm:$0xff]
        %v1665 = vld [vmem:[#allocation6 + $0x1390] sm:$0xff]
        %v1666 = vld [vmem:[#allocation6 + $0x1398] sm:$0xff]
        %v1667 = vld [vmem:[#allocation6 + $0x13a0] sm:$0xff]
        %v1668 = vld [vmem:[#allocation6 + $0x13a8] sm:$0xff]
        %v1669 = vld [vmem:[#allocation6 + $0x13b0] sm:$0xff]
        %v1670 = vld [vmem:[#allocation6 + $0x13b8] sm:$0xff]
        %v1671 = vld [vmem:[#allocation6 + $0x13c0] sm:$0xff]
        %v1672 = vld [vmem:[#allocation6 + $0x13c8] sm:$0xff]
        %v1673 = vld [vmem:[#allocation6 + $0x13d0] sm:$0xff]
        %v1674 = vld [vmem:[#allocation6 + $0x13d8] sm:$0xff]
        %v1675 = vld [vmem:[#allocation6 + $0x13e0] sm:$0xff]
        %v1676 = vld [vmem:[#allocation6 + $0x13e8] sm:$0xff]
        %v1677 = vld [vmem:[#allocation6 + $0x13f0] sm:$0xff]
        %v1678 = vld [vmem:[#allocation6 + $0x13f8] sm:$0xff]
        %v1679 = vld [vmem:[#allocation6 + $0x1400] sm:$0xff]
        %v1680 = vld [vmem:[#allocation6 + $0x1408] sm:$0xff]
        %v1681 = vld [vmem:[#allocation6 + $0x1410] sm:$0xff]
        %v1682 = vld [vmem:[#allocation6 + $0x1418] sm:$0xff]
        %v1683 = vld [vmem:[#allocation6 + $0x1420] sm:$0xff]
        %v1684 = vld [vmem:[#allocation6 + $0x1428] sm:$0xff]
        %v1685 = vld [vmem:[#allocation6 + $0x1430] sm:$0xff]
        %v1686 = vld [vmem:[#allocation6 + $0x1438] sm:$0xff]
        %v1687 = vld [vmem:[#allocation6 + $0x1440] sm:$0xff]
        %v1688 = vld [vmem:[#allocation6 + $0x1448] sm:$0xff]
        %v1689 = vld [vmem:[#allocation6 + $0x1450] sm:$0xff]
        %v1690 = vld [vmem:[#allocation6 + $0x1458] sm:$0xff]
        %v1691 = vld [vmem:[#allocation6 + $0x1460] sm:$0xff]
        %v1692 = vld [vmem:[#allocation6 + $0x1468] sm:$0xff]
        %v1693 = vld [vmem:[#allocation6 + $0x1470] sm:$0xff]
        %v1694 = vld [vmem:[#allocation6 + $0x1478] sm:$0xff]
        %v1695 = vld [vmem:[#allocation6 + $0x1480] sm:$0xff]
        %v1696 = vld [vmem:[#allocation6 + $0x1488] sm:$0xff]
        %v1697 = vld [vmem:[#allocation6 + $0x1490] sm:$0xff]
        %v1698 = vld [vmem:[#allocation6 + $0x1498] sm:$0xff]
        %v1699 = vld [vmem:[#allocation6 + $0x14a0] sm:$0xff]
        %v1700 = vld [vmem:[#allocation6 + $0x14a8] sm:$0xff]
        %v1701 = vld [vmem:[#allocation6 + $0x14b0] sm:$0xff]
        %v1702 = vld [vmem:[#allocation6 + $0x14b8] sm:$0xff]
        %v1703 = vld [vmem:[#allocation6 + $0x14c0] sm:$0xff]
        %v1704 = vld [vmem:[#allocation6 + $0x14c8] sm:$0xff]
        %v1705 = vld [vmem:[#allocation6 + $0x14d0] sm:$0xff]
        %v1706 = vld [vmem:[#allocation6 + $0x14d8] sm:$0xff]
        %v1707 = vld [vmem:[#allocation6 + $0x14e0] sm:$0xff]
        %v1708 = vld [vmem:[#allocation6 + $0x14e8] sm:$0xff]
        %v1709 = vld [vmem:[#allocation6 + $0x14f0] sm:$0xff]
        %v1710 = vld [vmem:[#allocation6 + $0x14f8] sm:$0xff]
        %v1711 = vld [vmem:[#allocation6 + $0x1500] sm:$0xff]
        %v1712 = vld [vmem:[#allocation6 + $0x1508] sm:$0xff]
        %v1713 = vld [vmem:[#allocation6 + $0x1510] sm:$0xff]
        %v1714 = vld [vmem:[#allocation6 + $0x1518] sm:$0xff]
        %v1715 = vld [vmem:[#allocation6 + $0x1520] sm:$0xff]
        %v1716 = vld [vmem:[#allocation6 + $0x1528] sm:$0xff]
        %v1717 = vld [vmem:[#allocation6 + $0x1530] sm:$0xff]
        %v1718 = vld [vmem:[#allocation6 + $0x1538] sm:$0xff]
        %v1719 = vld [vmem:[#allocation6 + $0x1540] sm:$0xff]
        %v1720 = vld [vmem:[#allocation6 + $0x1548] sm:$0xff]
        %v1721 = vld [vmem:[#allocation6 + $0x1550] sm:$0xff]
        %v1722 = vld [vmem:[#allocation6 + $0x1558] sm:$0xff]
        %v1723 = vld [vmem:[#allocation6 + $0x1560] sm:$0xff]
        %v1724 = vld [vmem:[#allocation6 + $0x1568] sm:$0xff]
        %v1725 = vld [vmem:[#allocation6 + $0x1570] sm:$0xff]
        %v1726 = vld [vmem:[#allocation6 + $0x1578] sm:$0xff]
        %v1727 = vld [vmem:[#allocation6 + $0x1580] sm:$0xff]
        %v1728 = vld [vmem:[#allocation6 + $0x1588] sm:$0xff]
        %v1729 = vld [vmem:[#allocation6 + $0x1590] sm:$0xff]
        %v1730 = vld [vmem:[#allocation6 + $0x1598] sm:$0xff]
        %v1731 = vld [vmem:[#allocation6 + $0x15a0] sm:$0xff]
        %v1732 = vld [vmem:[#allocation6 + $0x15a8] sm:$0xff]
        %v1733 = vld [vmem:[#allocation6 + $0x15b0] sm:$0xff]
        %v1734 = vld [vmem:[#allocation6 + $0x15b8] sm:$0xff]
        %v1735 = vld [vmem:[#allocation6 + $0x15c0] sm:$0xff]
        %v1736 = vld [vmem:[#allocation6 + $0x15c8] sm:$0xff]
        %v1737 = vld [vmem:[#allocation6 + $0x15d0] sm:$0xff]
        %v1738 = vld [vmem:[#allocation6 + $0x15d8] sm:$0xff]
        %v1739 = vld [vmem:[#allocation6 + $0x15e0] sm:$0xff]
        %v1740 = vld [vmem:[#allocation6 + $0x15e8] sm:$0xff]
        %v1741 = vld [vmem:[#allocation6 + $0x15f0] sm:$0xff]
        %v1742 = vld [vmem:[#allocation6 + $0x15f8] sm:$0xff]
        %v1743 = vld [vmem:[#allocation6 + $0x1600] sm:$0xff]
        %v1744 = vld [vmem:[#allocation6 + $0x1608] sm:$0xff]
        %v1745 = vld [vmem:[#allocation6 + $0x1610] sm:$0xff]
        %v1746 = vld [vmem:[#allocation6 + $0x1618] sm:$0xff]
        %v1747 = vld [vmem:[#allocation6 + $0x1620] sm:$0xff]
        %v1748 = vld [vmem:[#allocation6 + $0x1628] sm:$0xff]
        %v1749 = vld [vmem:[#allocation6 + $0x1630] sm:$0xff]
        %v1750 = vld [vmem:[#allocation6 + $0x1638] sm:$0xff]
        %v1751 = vld [vmem:[#allocation6 + $0x1640] sm:$0xff]
        %v1752 = vld [vmem:[#allocation6 + $0x1648] sm:$0xff]
        %v1753 = vld [vmem:[#allocation6 + $0x1650] sm:$0xff]
        %v1754 = vld [vmem:[#allocation6 + $0x1658] sm:$0xff]
        %v1755 = vld [vmem:[#allocation6 + $0x1660] sm:$0xff]
        %v1756 = vld [vmem:[#allocation6 + $0x1668] sm:$0xff]
        %v1757 = vld [vmem:[#allocation6 + $0x1670] sm:$0xff]
        %v1758 = vld [vmem:[#allocation6 + $0x1678] sm:$0xff]
        %v1759 = vld [vmem:[#allocation6 + $0x1680] sm:$0xff]
        %v1760 = vld [vmem:[#allocation6 + $0x1688] sm:$0xff]
        %v1761 = vld [vmem:[#allocation6 + $0x1690] sm:$0xff]
        %v1762 = vld [vmem:[#allocation6 + $0x1698] sm:$0xff]
        %v1763 = vld [vmem:[#allocation6 + $0x16a0] sm:$0xff]
        %v1764 = vld [vmem:[#allocation6 + $0x16a8] sm:$0xff]
        %v1765 = vld [vmem:[#allocation6 + $0x16b0] sm:$0xff]
        %v1766 = vld [vmem:[#allocation6 + $0x16b8] sm:$0xff]
        %v1767 = vld [vmem:[#allocation6 + $0x16c0] sm:$0xff]
        %v1768 = vld [vmem:[#allocation6 + $0x16c8] sm:$0xff]
        %v1769 = vld [vmem:[#allocation6 + $0x16d0] sm:$0xff]
        %v1770 = vld [vmem:[#allocation6 + $0x16d8] sm:$0xff]
        %v1771 = vld [vmem:[#allocation6 + $0x16e0] sm:$0xff]
        %v1772 = vld [vmem:[#allocation6 + $0x16e8] sm:$0xff]
        %v1773 = vld [vmem:[#allocation6 + $0x16f0] sm:$0xff]
        %v1774 = vld [vmem:[#allocation6 + $0x16f8] sm:$0xff]
        %v1775 = vld [vmem:[#allocation6 + $0x1700] sm:$0xff]
        %v1776 = vld [vmem:[#allocation6 + $0x1708] sm:$0xff]
        %v1777 = vld [vmem:[#allocation6 + $0x1710] sm:$0xff]
        %v1778 = vld [vmem:[#allocation6 + $0x1718] sm:$0xff]
        %v1779 = vld [vmem:[#allocation6 + $0x1720] sm:$0xff]
        %v1780 = vld [vmem:[#allocation6 + $0x1728] sm:$0xff]
        %v1781 = vld [vmem:[#allocation6 + $0x1730] sm:$0xff]
        %v1782 = vld [vmem:[#allocation6 + $0x1738] sm:$0xff]
        %v1783 = vld [vmem:[#allocation6 + $0x1740] sm:$0xff]
        %v1784 = vld [vmem:[#allocation6 + $0x1748] sm:$0xff]
        %v1785 = vld [vmem:[#allocation6 + $0x1750] sm:$0xff]
        %v1786 = vld [vmem:[#allocation6 + $0x1758] sm:$0xff]
        %v1787 = vld [vmem:[#allocation6 + $0x1760] sm:$0xff]
        %v1788 = vld [vmem:[#allocation6 + $0x1768] sm:$0xff]
        %v1789 = vld [vmem:[#allocation6 + $0x1770] sm:$0xff]
        %v1790 = vld [vmem:[#allocation6 + $0x1778] sm:$0xff]
        %v1791 = vld [vmem:[#allocation6 + $0x1780] sm:$0xff]
        %v1792 = vld [vmem:[#allocation6 + $0x1788] sm:$0xff]
        %v1793 = vld [vmem:[#allocation6 + $0x1790] sm:$0xff]
        %v1794 = vld [vmem:[#allocation6 + $0x1798] sm:$0xff]
        %v1795 = vld [vmem:[#allocation6 + $0x17a0] sm:$0xff]
        %v1796 = vld [vmem:[#allocation6 + $0x17a8] sm:$0xff]
        %v1797 = vld [vmem:[#allocation6 + $0x17b0] sm:$0xff]
        %v1798 = vld [vmem:[#allocation6 + $0x17b8] sm:$0xff]
        %v1799 = vld [vmem:[#allocation6 + $0x17c0] sm:$0xff]
        %v1800 = vld [vmem:[#allocation6 + $0x17c8] sm:$0xff]
        %v1801 = vld [vmem:[#allocation6 + $0x17d0] sm:$0xff]
        %v1802 = vld [vmem:[#allocation6 + $0x17d8] sm:$0xff]
        %v1803 = vld [vmem:[#allocation6 + $0x17e0] sm:$0xff]
        %v1804 = vld [vmem:[#allocation6 + $0x17e8] sm:$0xff]
        %v1805 = vld [vmem:[#allocation6 + $0x17f0] sm:$0xff]
        %v1806 = vld [vmem:[#allocation6 + $0x17f8] sm:$0xff]
        %v1807 = vld [vmem:[#allocation7] sm:$0x3f]
        %v1809 = vperm.slane %v1807, 0
        %v1810 = vperm.slane %v1807, 1
        %v1811 = vperm.slane %v1807, 2
        %v1812 = vperm.slane %v1807, 3
        %v1813 = vperm.slane %v1807, 4
        %v1814 = vperm.slane %v1807, 5
        %v2589 = vunpack.c.l.b16 %v1039
        %v2590 = vunpack.c.h.b16 %v1039
        %v2591 = vunpack.c.l.b16 %v1040
        %v2592 = vunpack.c.h.b16 %v1040
        %v2593 = vunpack.c.l.b16 %v1041
        %v2594 = vunpack.c.h.b16 %v1041
        %v2595 = vunpack.c.l.b16 %v1042
        %v2596 = vunpack.c.h.b16 %v1042
        %v2597 = vunpack.c.l.b16 %v1043
        %v2598 = vunpack.c.h.b16 %v1043
        %v2599 = vunpack.c.l.b16 %v1044
        %v2600 = vunpack.c.h.b16 %v1044
        %v2601 = vunpack.c.l.b16 %v1045
        %v2602 = vunpack.c.h.b16 %v1045
        %v2603 = vunpack.c.l.b16 %v1046
        %v2604 = vunpack.c.h.b16 %v1046
        %v2605 = vunpack.c.l.b16 %v1047
        %v2606 = vunpack.c.h.b16 %v1047
        %v2607 = vunpack.c.l.b16 %v1048
        %v2608 = vunpack.c.h.b16 %v1048
        %v2609 = vunpack.c.l.b16 %v1049
        %v2610 = vunpack.c.h.b16 %v1049
        %v2611 = vunpack.c.l.b16 %v1050
        %v2612 = vunpack.c.h.b16 %v1050
        %v2613 = vunpack.c.l.b16 %v1051
        %v2614 = vunpack.c.h.b16 %v1051
        %v2615 = vunpack.c.l.b16 %v1052
        %v2616 = vunpack.c.h.b16 %v1052
        %v2617 = vunpack.c.l.b16 %v1053
        %v2618 = vunpack.c.h.b16 %v1053
        %v2619 = vunpack.c.l.b16 %v1054
        %v2620 = vunpack.c.h.b16 %v1054
        %v2621 = vunpack.c.l.b16 %v1055
        %v2622 = vunpack.c.h.b16 %v1055
        %v2623 = vunpack.c.l.b16 %v1056
        %v2624 = vunpack.c.h.b16 %v1056
        %v2625 = vunpack.c.l.b16 %v1057
        %v2626 = vunpack.c.h.b16 %v1057
        %v2627 = vunpack.c.l.b16 %v1058
        %v2628 = vunpack.c.h.b16 %v1058
        %v2629 = vunpack.c.l.b16 %v1059
        %v2630 = vunpack.c.h.b16 %v1059
        %v2631 = vunpack.c.l.b16 %v1060
        %v2632 = vunpack.c.h.b16 %v1060
        %v2633 = vunpack.c.l.b16 %v1061
        %v2634 = vunpack.c.h.b16 %v1061
        %v2635 = vunpack.c.l.b16 %v1062
        %v2636 = vunpack.c.h.b16 %v1062
        %v2637 = vunpack.c.l.b16 %v1063
        %v2638 = vunpack.c.h.b16 %v1063
        %v2639 = vunpack.c.l.b16 %v1064
        %v2640 = vunpack.c.h.b16 %v1064
        %v2641 = vunpack.c.l.b16 %v1065
        %v2642 = vunpack.c.h.b16 %v1065
        %v2643 = vunpack.c.l.b16 %v1066
        %v2644 = vunpack.c.h.b16 %v1066
        %v2645 = vunpack.c.l.b16 %v1067
        %v2646 = vunpack.c.h.b16 %v1067
        %v2647 = vunpack.c.l.b16 %v1068
        %v2648 = vunpack.c.h.b16 %v1068
        %v2649 = vunpack.c.l.b16 %v1069
        %v2650 = vunpack.c.h.b16 %v1069
        %v2651 = vunpack.c.l.b16 %v1070
        %v2652 = vunpack.c.h.b16 %v1070
        %v2653 = vunpack.c.l.b16 %v1071
        %v2654 = vunpack.c.h.b16 %v1071
        %v2655 = vunpack.c.l.b16 %v1072
        %v2656 = vunpack.c.h.b16 %v1072
        %v2657 = vunpack.c.l.b16 %v1073
        %v2658 = vunpack.c.h.b16 %v1073
        %v2659 = vunpack.c.l.b16 %v1074
        %v2660 = vunpack.c.h.b16 %v1074
        %v2661 = vunpack.c.l.b16 %v1075
        %v2662 = vunpack.c.h.b16 %v1075
        %v2663 = vunpack.c.l.b16 %v1076
        %v2664 = vunpack.c.h.b16 %v1076
        %v2665 = vunpack.c.l.b16 %v1077
        %v2666 = vunpack.c.h.b16 %v1077
        %v2667 = vunpack.c.l.b16 %v1078
        %v2668 = vunpack.c.h.b16 %v1078
        %v2669 = vunpack.c.l.b16 %v1079
        %v2670 = vunpack.c.h.b16 %v1079
        %v2671 = vunpack.c.l.b16 %v1080
        %v2672 = vunpack.c.h.b16 %v1080
        %v2673 = vunpack.c.l.b16 %v1081
        %v2674 = vunpack.c.h.b16 %v1081
        %v2675 = vunpack.c.l.b16 %v1082
        %v2676 = vunpack.c.h.b16 %v1082
        %v2677 = vunpack.c.l.b16 %v1083
        %v2678 = vunpack.c.h.b16 %v1083
        %v2679 = vunpack.c.l.b16 %v1084
        %v2680 = vunpack.c.h.b16 %v1084
        %v2681 = vunpack.c.l.b16 %v1085
        %v2682 = vunpack.c.h.b16 %v1085
        %v2683 = vunpack.c.l.b16 %v1086
        %v2684 = vunpack.c.h.b16 %v1086
        %v2685 = vunpack.c.l.b16 %v1087
        %v2686 = vunpack.c.h.b16 %v1087
        %v2687 = vunpack.c.l.b16 %v1088
        %v2688 = vunpack.c.h.b16 %v1088
        %v2689 = vunpack.c.l.b16 %v1089
        %v2690 = vunpack.c.h.b16 %v1089
        %v2691 = vunpack.c.l.b16 %v1090
        %v2692 = vunpack.c.h.b16 %v1090
        %v2693 = vunpack.c.l.b16 %v1091
        %v2694 = vunpack.c.h.b16 %v1091
        %v2695 = vunpack.c.l.b16 %v1092
        %v2696 = vunpack.c.h.b16 %v1092
        %v2697 = vunpack.c.l.b16 %v1093
        %v2698 = vunpack.c.h.b16 %v1093
        %v2699 = vunpack.c.l.b16 %v1094
        %v2700 = vunpack.c.h.b16 %v1094
        %v2701 = vunpack.c.l.b16 %v1095
        %v2702 = vunpack.c.h.b16 %v1095
        %v2703 = vunpack.c.l.b16 %v1096
        %v2704 = vunpack.c.h.b16 %v1096
        %v2705 = vunpack.c.l.b16 %v1097
        %v2706 = vunpack.c.h.b16 %v1097
        %v2707 = vunpack.c.l.b16 %v1098
        %v2708 = vunpack.c.h.b16 %v1098
        %v2709 = vunpack.c.l.b16 %v1099
        %v2710 = vunpack.c.h.b16 %v1099
        %v2711 = vunpack.c.l.b16 %v1100
        %v2712 = vunpack.c.h.b16 %v1100
        %v2713 = vunpack.c.l.b16 %v1101
        %v2714 = vunpack.c.h.b16 %v1101
        %v2715 = vunpack.c.l.b16 %v1102
        %v2716 = vunpack.c.h.b16 %v1102
        %v2717 = vunpack.c.l.b16 %v1103
        %v2718 = vunpack.c.h.b16 %v1103
        %v2719 = vunpack.c.l.b16 %v1104
        %v2720 = vunpack.c.h.b16 %v1104
        %v2721 = vunpack.c.l.b16 %v1105
        %v2722 = vunpack.c.h.b16 %v1105
        %v2723 = vunpack.c.l.b16 %v1106
        %v2724 = vunpack.c.h.b16 %v1106
        %v2725 = vunpack.c.l.b16 %v1107
        %v2726 = vunpack.c.h.b16 %v1107
        %v2727 = vunpack.c.l.b16 %v1108
        %v2728 = vunpack.c.h.b16 %v1108
        %v2729 = vunpack.c.l.b16 %v1109
        %v2730 = vunpack.c.h.b16 %v1109
        %v2731 = vunpack.c.l.b16 %v1110
        %v2732 = vunpack.c.h.b16 %v1110
        %v2733 = vunpack.c.l.b16 %v1111
        %v2734 = vunpack.c.h.b16 %v1111
        %v2735 = vunpack.c.l.b16 %v1112
        %v2736 = vunpack.c.h.b16 %v1112
        %v2737 = vunpack.c.l.b16 %v1113
        %v2738 = vunpack.c.h.b16 %v1113
        %v2739 = vunpack.c.l.b16 %v1114
        %v2740 = vunpack.c.h.b16 %v1114
        %v2741 = vunpack.c.l.b16 %v1115
        %v2742 = vunpack.c.h.b16 %v1115
        %v2743 = vunpack.c.l.b16 %v1116
        %v2744 = vunpack.c.h.b16 %v1116
        %v2745 = vunpack.c.l.b16 %v1117
        %v2746 = vunpack.c.h.b16 %v1117
        %v2747 = vunpack.c.l.b16 %v1118
        %v2748 = vunpack.c.h.b16 %v1118
        %v2749 = vunpack.c.l.b16 %v1119
        %v2750 = vunpack.c.h.b16 %v1119
        %v2751 = vunpack.c.l.b16 %v1120
        %v2752 = vunpack.c.h.b16 %v1120
        %v2753 = vunpack.c.l.b16 %v1121
        %v2754 = vunpack.c.h.b16 %v1121
        %v2755 = vunpack.c.l.b16 %v1122
        %v2756 = vunpack.c.h.b16 %v1122
        %v2757 = vunpack.c.l.b16 %v1123
        %v2758 = vunpack.c.h.b16 %v1123
        %v2759 = vunpack.c.l.b16 %v1124
        %v2760 = vunpack.c.h.b16 %v1124
        %v2761 = vunpack.c.l.b16 %v1125
        %v2762 = vunpack.c.h.b16 %v1125
        %v2763 = vunpack.c.l.b16 %v1126
        %v2764 = vunpack.c.h.b16 %v1126
        %v2765 = vunpack.c.l.b16 %v1127
        %v2766 = vunpack.c.h.b16 %v1127
        %v2767 = vunpack.c.l.b16 %v1128
        %v2768 = vunpack.c.h.b16 %v1128
        %v2769 = vunpack.c.l.b16 %v1129
        %v2770 = vunpack.c.h.b16 %v1129
        %v2771 = vunpack.c.l.b16 %v1130
        %v2772 = vunpack.c.h.b16 %v1130
        %v2773 = vunpack.c.l.b16 %v1131
        %v2774 = vunpack.c.h.b16 %v1131
        %v2775 = vunpack.c.l.b16 %v1132
        %v2776 = vunpack.c.h.b16 %v1132
        %v2777 = vunpack.c.l.b16 %v1133
        %v2778 = vunpack.c.h.b16 %v1133
        %v2779 = vunpack.c.l.b16 %v1134
        %v2780 = vunpack.c.h.b16 %v1134
        %v2781 = vunpack.c.l.b16 %v1135
        %v2782 = vunpack.c.h.b16 %v1135
        %v2783 = vunpack.c.l.b16 %v1136
        %v2784 = vunpack.c.h.b16 %v1136
        %v2785 = vunpack.c.l.b16 %v1137
        %v2786 = vunpack.c.h.b16 %v1137
        %v2787 = vunpack.c.l.b16 %v1138
        %v2788 = vunpack.c.h.b16 %v1138
        %v2789 = vunpack.c.l.b16 %v1139
        %v2790 = vunpack.c.h.b16 %v1139
        %v2791 = vunpack.c.l.b16 %v1140
        %v2792 = vunpack.c.h.b16 %v1140
        %v2793 = vunpack.c.l.b16 %v1141
        %v2794 = vunpack.c.h.b16 %v1141
        %v2795 = vunpack.c.l.b16 %v1142
        %v2796 = vunpack.c.h.b16 %v1142
        %v2797 = vunpack.c.l.b16 %v1143
        %v2798 = vunpack.c.h.b16 %v1143
        %v2799 = vunpack.c.l.b16 %v1144
        %v2800 = vunpack.c.h.b16 %v1144
        %v2801 = vunpack.c.l.b16 %v1145
        %v2802 = vunpack.c.h.b16 %v1145
        %v2803 = vunpack.c.l.b16 %v1146
        %v2804 = vunpack.c.h.b16 %v1146
        %v2805 = vunpack.c.l.b16 %v1147
        %v2806 = vunpack.c.h.b16 %v1147
        %v2807 = vunpack.c.l.b16 %v1148
        %v2808 = vunpack.c.h.b16 %v1148
        %v2809 = vunpack.c.l.b16 %v1149
        %v2810 = vunpack.c.h.b16 %v1149
        %v2811 = vunpack.c.l.b16 %v1150
        %v2812 = vunpack.c.h.b16 %v1150
        %v2813 = vunpack.c.l.b16 %v1151
        %v2814 = vunpack.c.h.b16 %v1151
        %v2815 = vunpack.c.l.b16 %v1152
        %v2816 = vunpack.c.h.b16 %v1152
        %v2817 = vunpack.c.l.b16 %v1153
        %v2818 = vunpack.c.h.b16 %v1153
        %v2819 = vunpack.c.l.b16 %v1154
        %v2820 = vunpack.c.h.b16 %v1154
        %v2821 = vunpack.c.l.b16 %v1155
        %v2822 = vunpack.c.h.b16 %v1155
        %v2823 = vunpack.c.l.b16 %v1156
        %v2824 = vunpack.c.h.b16 %v1156
        %v2825 = vunpack.c.l.b16 %v1157
        %v2826 = vunpack.c.h.b16 %v1157
        %v2827 = vunpack.c.l.b16 %v1158
        %v2828 = vunpack.c.h.b16 %v1158
        %v2829 = vunpack.c.l.b16 %v1159
        %v2830 = vunpack.c.h.b16 %v1159
        %v2831 = vunpack.c.l.b16 %v1160
        %v2832 = vunpack.c.h.b16 %v1160
        %v2833 = vunpack.c.l.b16 %v1161
        %v2834 = vunpack.c.h.b16 %v1161
        %v2835 = vunpack.c.l.b16 %v1162
        %v2836 = vunpack.c.h.b16 %v1162
        %v2837 = vunpack.c.l.b16 %v1163
        %v2838 = vunpack.c.h.b16 %v1163
        %v2839 = vunpack.c.l.b16 %v1164
        %v2840 = vunpack.c.h.b16 %v1164
        %v2841 = vunpack.c.l.b16 %v1165
        %v2842 = vunpack.c.h.b16 %v1165
        %v2843 = vunpack.c.l.b16 %v1166
        %v2844 = vunpack.c.h.b16 %v1166
        %v2845 = vunpack.c.l.b16 %v1167
        %v2846 = vunpack.c.h.b16 %v1167
        %v2847 = vunpack.c.l.b16 %v1168
        %v2848 = vunpack.c.h.b16 %v1168
        %v2849 = vunpack.c.l.b16 %v1169
        %v2850 = vunpack.c.h.b16 %v1169
        %v2851 = vunpack.c.l.b16 %v1170
        %v2852 = vunpack.c.h.b16 %v1170
        %v2853 = vunpack.c.l.b16 %v1171
        %v2854 = vunpack.c.h.b16 %v1171
        %v2855 = vunpack.c.l.b16 %v1172
        %v2856 = vunpack.c.h.b16 %v1172
        %v2857 = vunpack.c.l.b16 %v1173
        %v2858 = vunpack.c.h.b16 %v1173
        %v2859 = vunpack.c.l.b16 %v1174
        %v2860 = vunpack.c.h.b16 %v1174
        %v2861 = vunpack.c.l.b16 %v1175
        %v2862 = vunpack.c.h.b16 %v1175
        %v2863 = vunpack.c.l.b16 %v1176
        %v2864 = vunpack.c.h.b16 %v1176
        %v2865 = vunpack.c.l.b16 %v1177
        %v2866 = vunpack.c.h.b16 %v1177
        %v2867 = vunpack.c.l.b16 %v1178
        %v2868 = vunpack.c.h.b16 %v1178
        %v2869 = vunpack.c.l.b16 %v1179
        %v2870 = vunpack.c.h.b16 %v1179
        %v2871 = vunpack.c.l.b16 %v1180
        %v2872 = vunpack.c.h.b16 %v1180
        %v2873 = vunpack.c.l.b16 %v1181
        %v2874 = vunpack.c.h.b16 %v1181
        %v2875 = vunpack.c.l.b16 %v1182
        %v2876 = vunpack.c.h.b16 %v1182
        %v2877 = vunpack.c.l.b16 %v1183
        %v2878 = vunpack.c.h.b16 %v1183
        %v2879 = vunpack.c.l.b16 %v1184
        %v2880 = vunpack.c.h.b16 %v1184
        %v2881 = vunpack.c.l.b16 %v1185
        %v2882 = vunpack.c.h.b16 %v1185
        %v2883 = vunpack.c.l.b16 %v1186
        %v2884 = vunpack.c.h.b16 %v1186
        %v2885 = vunpack.c.l.b16 %v1187
        %v2886 = vunpack.c.h.b16 %v1187
        %v2887 = vunpack.c.l.b16 %v1188
        %v2888 = vunpack.c.h.b16 %v1188
        %v2889 = vunpack.c.l.b16 %v1189
        %v2890 = vunpack.c.h.b16 %v1189
        %v2891 = vunpack.c.l.b16 %v1190
        %v2892 = vunpack.c.h.b16 %v1190
        %v2893 = vunpack.c.l.b16 %v1191
        %v2894 = vunpack.c.h.b16 %v1191
        %v2895 = vunpack.c.l.b16 %v1192
        %v2896 = vunpack.c.h.b16 %v1192
        %v2897 = vunpack.c.l.b16 %v1193
        %v2898 = vunpack.c.h.b16 %v1193
        %v2899 = vunpack.c.l.b16 %v1194
        %v2900 = vunpack.c.h.b16 %v1194
        %v2901 = vunpack.c.l.b16 %v1195
        %v2902 = vunpack.c.h.b16 %v1195
        %v2903 = vunpack.c.l.b16 %v1196
        %v2904 = vunpack.c.h.b16 %v1196
        %v2905 = vunpack.c.l.b16 %v1197
        %v2906 = vunpack.c.h.b16 %v1197
        %v2907 = vunpack.c.l.b16 %v1198
        %v2908 = vunpack.c.h.b16 %v1198
        %v2909 = vunpack.c.l.b16 %v1199
        %v2910 = vunpack.c.h.b16 %v1199
        %v2911 = vunpack.c.l.b16 %v1200
        %v2912 = vunpack.c.h.b16 %v1200
        %v2913 = vunpack.c.l.b16 %v1201
        %v2914 = vunpack.c.h.b16 %v1201
        %v2915 = vunpack.c.l.b16 %v1202
        %v2916 = vunpack.c.h.b16 %v1202
        %v2917 = vunpack.c.l.b16 %v1203
        %v2918 = vunpack.c.h.b16 %v1203
        %v2919 = vunpack.c.l.b16 %v1204
        %v2920 = vunpack.c.h.b16 %v1204
        %v2921 = vunpack.c.l.b16 %v1205
        %v2922 = vunpack.c.h.b16 %v1205
        %v2923 = vunpack.c.l.b16 %v1206
        %v2924 = vunpack.c.h.b16 %v1206
        %v2925 = vunpack.c.l.b16 %v1207
        %v2926 = vunpack.c.h.b16 %v1207
        %v2927 = vunpack.c.l.b16 %v1208
        %v2928 = vunpack.c.h.b16 %v1208
        %v2929 = vunpack.c.l.b16 %v1209
        %v2930 = vunpack.c.h.b16 %v1209
        %v2931 = vunpack.c.l.b16 %v1210
        %v2932 = vunpack.c.h.b16 %v1210
        %v2933 = vunpack.c.l.b16 %v1211
        %v2934 = vunpack.c.h.b16 %v1211
        %v2935 = vunpack.c.l.b16 %v1212
        %v2936 = vunpack.c.h.b16 %v1212
        %v2937 = vunpack.c.l.b16 %v1213
        %v2938 = vunpack.c.h.b16 %v1213
        %v2939 = vunpack.c.l.b16 %v1214
        %v2940 = vunpack.c.h.b16 %v1214
        %v2941 = vunpack.c.l.b16 %v1215
        %v2942 = vunpack.c.h.b16 %v1215
        %v2943 = vunpack.c.l.b16 %v1216
        %v2944 = vunpack.c.h.b16 %v1216
        %v2945 = vunpack.c.l.b16 %v1217
        %v2946 = vunpack.c.h.b16 %v1217
        %v2947 = vunpack.c.l.b16 %v1218
        %v2948 = vunpack.c.h.b16 %v1218
        %v2949 = vunpack.c.l.b16 %v1219
        %v2950 = vunpack.c.h.b16 %v1219
        %v2951 = vunpack.c.l.b16 %v1220
        %v2952 = vunpack.c.h.b16 %v1220
        %v2953 = vunpack.c.l.b16 %v1221
        %v2954 = vunpack.c.h.b16 %v1221
        %v2955 = vunpack.c.l.b16 %v1222
        %v2956 = vunpack.c.h.b16 %v1222
        %v2957 = vunpack.c.l.b16 %v1223
        %v2958 = vunpack.c.h.b16 %v1223
        %v2959 = vunpack.c.l.b16 %v1224
        %v2960 = vunpack.c.h.b16 %v1224
        %v2961 = vunpack.c.l.b16 %v1225
        %v2962 = vunpack.c.h.b16 %v1225
        %v2963 = vunpack.c.l.b16 %v1226
        %v2964 = vunpack.c.h.b16 %v1226
        %v2965 = vunpack.c.l.b16 %v1227
        %v2966 = vunpack.c.h.b16 %v1227
        %v2967 = vunpack.c.l.b16 %v1228
        %v2968 = vunpack.c.h.b16 %v1228
        %v2969 = vunpack.c.l.b16 %v1229
        %v2970 = vunpack.c.h.b16 %v1229
        %v2971 = vunpack.c.l.b16 %v1230
        %v2972 = vunpack.c.h.b16 %v1230
        %v2973 = vunpack.c.l.b16 %v1231
        %v2974 = vunpack.c.h.b16 %v1231
        %v2975 = vunpack.c.l.b16 %v1232
        %v2976 = vunpack.c.h.b16 %v1232
        %v2977 = vunpack.c.l.b16 %v1233
        %v2978 = vunpack.c.h.b16 %v1233
        %v2979 = vunpack.c.l.b16 %v1234
        %v2980 = vunpack.c.h.b16 %v1234
        %v2981 = vunpack.c.l.b16 %v1235
        %v2982 = vunpack.c.h.b16 %v1235
        %v2983 = vunpack.c.l.b16 %v1236
        %v2984 = vunpack.c.h.b16 %v1236
        %v2985 = vunpack.c.l.b16 %v1237
        %v2986 = vunpack.c.h.b16 %v1237
        %v2987 = vunpack.c.l.b16 %v1238
        %v2988 = vunpack.c.h.b16 %v1238
        %v2989 = vunpack.c.l.b16 %v1239
        %v2990 = vunpack.c.h.b16 %v1239
        %v2991 = vunpack.c.l.b16 %v1240
        %v2992 = vunpack.c.h.b16 %v1240
        %v2993 = vunpack.c.l.b16 %v1241
        %v2994 = vunpack.c.h.b16 %v1241
        %v2995 = vunpack.c.l.b16 %v1242
        %v2996 = vunpack.c.h.b16 %v1242
        %v2997 = vunpack.c.l.b16 %v1243
        %v2998 = vunpack.c.h.b16 %v1243
        %v2999 = vunpack.c.l.b16 %v1244
        %v3000 = vunpack.c.h.b16 %v1244
        %v3001 = vunpack.c.l.b16 %v1245
        %v3002 = vunpack.c.h.b16 %v1245
        %v3003 = vunpack.c.l.b16 %v1246
        %v3004 = vunpack.c.h.b16 %v1246
        %v3005 = vunpack.c.l.b16 %v1247
        %v3006 = vunpack.c.h.b16 %v1247
        %v3007 = vunpack.c.l.b16 %v1248
        %v3008 = vunpack.c.h.b16 %v1248
        %v3009 = vunpack.c.l.b16 %v1249
        %v3010 = vunpack.c.h.b16 %v1249
        %v3011 = vunpack.c.l.b16 %v1250
        %v3012 = vunpack.c.h.b16 %v1250
        %v3013 = vunpack.c.l.b16 %v1251
        %v3014 = vunpack.c.h.b16 %v1251
        %v3015 = vunpack.c.l.b16 %v1252
        %v3016 = vunpack.c.h.b16 %v1252
        %v3017 = vunpack.c.l.b16 %v1253
        %v3018 = vunpack.c.h.b16 %v1253
        %v3019 = vunpack.c.l.b16 %v1254
        %v3020 = vunpack.c.h.b16 %v1254
        %v3021 = vunpack.c.l.b16 %v1255
        %v3022 = vunpack.c.h.b16 %v1255
        %v3023 = vunpack.c.l.b16 %v1256
        %v3024 = vunpack.c.h.b16 %v1256
        %v3025 = vunpack.c.l.b16 %v1257
        %v3026 = vunpack.c.h.b16 %v1257
        %v3027 = vunpack.c.l.b16 %v1258
        %v3028 = vunpack.c.h.b16 %v1258
        %v3029 = vunpack.c.l.b16 %v1259
        %v3030 = vunpack.c.h.b16 %v1259
        %v3031 = vunpack.c.l.b16 %v1260
        %v3032 = vunpack.c.h.b16 %v1260
        %v3033 = vunpack.c.l.b16 %v1261
        %v3034 = vunpack.c.h.b16 %v1261
        %v3035 = vunpack.c.l.b16 %v1262
        %v3036 = vunpack.c.h.b16 %v1262
        %v3037 = vunpack.c.l.b16 %v1263
        %v3038 = vunpack.c.h.b16 %v1263
        %v3039 = vunpack.c.l.b16 %v1264
        %v3040 = vunpack.c.h.b16 %v1264
        %v3041 = vunpack.c.l.b16 %v1265
        %v3042 = vunpack.c.h.b16 %v1265
        %v3043 = vunpack.c.l.b16 %v1266
        %v3044 = vunpack.c.h.b16 %v1266
        %v3045 = vunpack.c.l.b16 %v1267
        %v3046 = vunpack.c.h.b16 %v1267
        %v3047 = vunpack.c.l.b16 %v1268
        %v3048 = vunpack.c.h.b16 %v1268
        %v3049 = vunpack.c.l.b16 %v1269
        %v3050 = vunpack.c.h.b16 %v1269
        %v3051 = vunpack.c.l.b16 %v1270
        %v3052 = vunpack.c.h.b16 %v1270
        %v3053 = vunpack.c.l.b16 %v1271
        %v3054 = vunpack.c.h.b16 %v1271
        %v3055 = vunpack.c.l.b16 %v1272
        %v3056 = vunpack.c.h.b16 %v1272
        %v3057 = vunpack.c.l.b16 %v1273
        %v3058 = vunpack.c.h.b16 %v1273
        %v3059 = vunpack.c.l.b16 %v1274
        %v3060 = vunpack.c.h.b16 %v1274
        %v3061 = vunpack.c.l.b16 %v1275
        %v3062 = vunpack.c.h.b16 %v1275
        %v3063 = vunpack.c.l.b16 %v1276
        %v3064 = vunpack.c.h.b16 %v1276
        %v3065 = vunpack.c.l.b16 %v1277
        %v3066 = vunpack.c.h.b16 %v1277
        %v3067 = vunpack.c.l.b16 %v1278
        %v3068 = vunpack.c.h.b16 %v1278
        %v3069 = vunpack.c.l.b16 %v1279
        %v3070 = vunpack.c.h.b16 %v1279
        %v3071 = vunpack.c.l.b16 %v1280
        %v3072 = vunpack.c.h.b16 %v1280
        %v3073 = vunpack.c.l.b16 %v1281
        %v3074 = vunpack.c.h.b16 %v1281
        %v3075 = vunpack.c.l.b16 %v1282
        %v3076 = vunpack.c.h.b16 %v1282
        %v3077 = vunpack.c.l.b16 %v1283
        %v3078 = vunpack.c.h.b16 %v1283
        %v3079 = vunpack.c.l.b16 %v1284
        %v3080 = vunpack.c.h.b16 %v1284
        %v3081 = vunpack.c.l.b16 %v1285
        %v3082 = vunpack.c.h.b16 %v1285
        %v3083 = vunpack.c.l.b16 %v1286
        %v3084 = vunpack.c.h.b16 %v1286
        %v3085 = vunpack.c.l.b16 %v1287
        %v3086 = vunpack.c.h.b16 %v1287
        %v3087 = vunpack.c.l.b16 %v1288
        %v3088 = vunpack.c.h.b16 %v1288
        %v3089 = vunpack.c.l.b16 %v1289
        %v3090 = vunpack.c.h.b16 %v1289
        %v3091 = vunpack.c.l.b16 %v1290
        %v3092 = vunpack.c.h.b16 %v1290
        %v3093 = vunpack.c.l.b16 %v1291
        %v3094 = vunpack.c.h.b16 %v1291
        %v3095 = vunpack.c.l.b16 %v1292
        %v3096 = vunpack.c.h.b16 %v1292
        %v3097 = vunpack.c.l.b16 %v1293
        %v3098 = vunpack.c.h.b16 %v1293
        %v3099 = vunpack.c.l.b16 %v1294
        %v3100 = vunpack.c.h.b16 %v1294
        %v3101 = vunpack.c.l.b16 %v1295
        %v3102 = vunpack.c.h.b16 %v1295
        %v3103 = vunpack.c.l.b16 %v1296
        %v3104 = vunpack.c.h.b16 %v1296
        %v3105 = vunpack.c.l.b16 %v1297
        %v3106 = vunpack.c.h.b16 %v1297
        %v3107 = vunpack.c.l.b16 %v1298
        %v3108 = vunpack.c.h.b16 %v1298
        %v3109 = vunpack.c.l.b16 %v1299
        %v3110 = vunpack.c.h.b16 %v1299
        %v3111 = vunpack.c.l.b16 %v1300
        %v3112 = vunpack.c.h.b16 %v1300
        %v3113 = vunpack.c.l.b16 %v1301
        %v3114 = vunpack.c.h.b16 %v1301
        %v3115 = vunpack.c.l.b16 %v1302
        %v3116 = vunpack.c.h.b16 %v1302
        %v3117 = vunpack.c.l.b16 %v1303
        %v3118 = vunpack.c.h.b16 %v1303
        %v3119 = vunpack.c.l.b16 %v1304
        %v3120 = vunpack.c.h.b16 %v1304
        %v3121 = vunpack.c.l.b16 %v1305
        %v3122 = vunpack.c.h.b16 %v1305
        %v3123 = vunpack.c.l.b16 %v1306
        %v3124 = vunpack.c.h.b16 %v1306
        %v3125 = vunpack.c.l.b16 %v1307
        %v3126 = vunpack.c.h.b16 %v1307
        %v3127 = vunpack.c.l.b16 %v1308
        %v3128 = vunpack.c.h.b16 %v1308
        %v3129 = vunpack.c.l.b16 %v1309
        %v3130 = vunpack.c.h.b16 %v1309
        %v3131 = vunpack.c.l.b16 %v1310
        %v3132 = vunpack.c.h.b16 %v1310
        %v3133 = vunpack.c.l.b16 %v1311
        %v3134 = vunpack.c.h.b16 %v1311
        %v3135 = vunpack.c.l.b16 %v1312
        %v3136 = vunpack.c.h.b16 %v1312
        %v3137 = vunpack.c.l.b16 %v1313
        %v3138 = vunpack.c.h.b16 %v1313
        %v3139 = vunpack.c.l.b16 %v1314
        %v3140 = vunpack.c.h.b16 %v1314
        %v3141 = vunpack.c.l.b16 %v1315
        %v3142 = vunpack.c.h.b16 %v1315
        %v3143 = vunpack.c.l.b16 %v1316
        %v3144 = vunpack.c.h.b16 %v1316
        %v3145 = vunpack.c.l.b16 %v1317
        %v3146 = vunpack.c.h.b16 %v1317
        %v3147 = vunpack.c.l.b16 %v1318
        %v3148 = vunpack.c.h.b16 %v1318
        %v3149 = vunpack.c.l.b16 %v1319
        %v3150 = vunpack.c.h.b16 %v1319
        %v3151 = vunpack.c.l.b16 %v1320
        %v3152 = vunpack.c.h.b16 %v1320
        %v3153 = vunpack.c.l.b16 %v1321
        %v3154 = vunpack.c.h.b16 %v1321
        %v3155 = vunpack.c.l.b16 %v1322
        %v3156 = vunpack.c.h.b16 %v1322
        %v3157 = vunpack.c.l.b16 %v1323
        %v3158 = vunpack.c.h.b16 %v1323
        %v3159 = vunpack.c.l.b16 %v1324
        %v3160 = vunpack.c.h.b16 %v1324
        %v3161 = vunpack.c.l.b16 %v1325
        %v3162 = vunpack.c.h.b16 %v1325
        %v3163 = vunpack.c.l.b16 %v1326
        %v3164 = vunpack.c.h.b16 %v1326
        %v3165 = vunpack.c.l.b16 %v1327
        %v3166 = vunpack.c.h.b16 %v1327
        %v3167 = vunpack.c.l.b16 %v1328
        %v3168 = vunpack.c.h.b16 %v1328
        %v3169 = vunpack.c.l.b16 %v1329
        %v3170 = vunpack.c.h.b16 %v1329
        %v3171 = vunpack.c.l.b16 %v1330
        %v3172 = vunpack.c.h.b16 %v1330
        %v3173 = vunpack.c.l.b16 %v1331
        %v3174 = vunpack.c.h.b16 %v1331
        %v3175 = vunpack.c.l.b16 %v1332
        %v3176 = vunpack.c.h.b16 %v1332
        %v3177 = vunpack.c.l.b16 %v1333
        %v3178 = vunpack.c.h.b16 %v1333
        %v3179 = vunpack.c.l.b16 %v1334
        %v3180 = vunpack.c.h.b16 %v1334
        %v3181 = vunpack.c.l.b16 %v1335
        %v3182 = vunpack.c.h.b16 %v1335
        %v3183 = vunpack.c.l.b16 %v1336
        %v3184 = vunpack.c.h.b16 %v1336
        %v3185 = vunpack.c.l.b16 %v1337
        %v3186 = vunpack.c.h.b16 %v1337
        %v3187 = vunpack.c.l.b16 %v1338
        %v3188 = vunpack.c.h.b16 %v1338
        %v3189 = vunpack.c.l.b16 %v1339
        %v3190 = vunpack.c.h.b16 %v1339
        %v3191 = vunpack.c.l.b16 %v1340
        %v3192 = vunpack.c.h.b16 %v1340
        %v3193 = vunpack.c.l.b16 %v1341
        %v3194 = vunpack.c.h.b16 %v1341
        %v3195 = vunpack.c.l.b16 %v1342
        %v3196 = vunpack.c.h.b16 %v1342
        %v3197 = vunpack.c.l.b16 %v1343
        %v3198 = vunpack.c.h.b16 %v1343
        %v3199 = vunpack.c.l.b16 %v1344
        %v3200 = vunpack.c.h.b16 %v1344
        %v3201 = vunpack.c.l.b16 %v1345
        %v3202 = vunpack.c.h.b16 %v1345
        %v3203 = vunpack.c.l.b16 %v1346
        %v3204 = vunpack.c.h.b16 %v1346
        %v3205 = vunpack.c.l.b16 %v1347
        %v3206 = vunpack.c.h.b16 %v1347
        %v3207 = vunpack.c.l.b16 %v1348
        %v3208 = vunpack.c.h.b16 %v1348
        %v3209 = vunpack.c.l.b16 %v1349
        %v3210 = vunpack.c.h.b16 %v1349
        %v3211 = vunpack.c.l.b16 %v1350
        %v3212 = vunpack.c.h.b16 %v1350
        %v3213 = vunpack.c.l.b16 %v1351
        %v3214 = vunpack.c.h.b16 %v1351
        %v3215 = vunpack.c.l.b16 %v1352
        %v3216 = vunpack.c.h.b16 %v1352
        %v3217 = vunpack.c.l.b16 %v1353
        %v3218 = vunpack.c.h.b16 %v1353
        %v3219 = vunpack.c.l.b16 %v1354
        %v3220 = vunpack.c.h.b16 %v1354
        %v3221 = vunpack.c.l.b16 %v1355
        %v3222 = vunpack.c.h.b16 %v1355
        %v3223 = vunpack.c.l.b16 %v1356
        %v3224 = vunpack.c.h.b16 %v1356
        %v3225 = vunpack.c.l.b16 %v1357
        %v3226 = vunpack.c.h.b16 %v1357
        %v3227 = vunpack.c.l.b16 %v1358
        %v3228 = vunpack.c.h.b16 %v1358
        %v3229 = vunpack.c.l.b16 %v1359
        %v3230 = vunpack.c.h.b16 %v1359
        %v3231 = vunpack.c.l.b16 %v1360
        %v3232 = vunpack.c.h.b16 %v1360
        %v3233 = vunpack.c.l.b16 %v1361
        %v3234 = vunpack.c.h.b16 %v1361
        %v3235 = vunpack.c.l.b16 %v1362
        %v3236 = vunpack.c.h.b16 %v1362
        %v3237 = vunpack.c.l.b16 %v1363
        %v3238 = vunpack.c.h.b16 %v1363
        %v3239 = vunpack.c.l.b16 %v1364
        %v3240 = vunpack.c.h.b16 %v1364
        %v3241 = vunpack.c.l.b16 %v1365
        %v3242 = vunpack.c.h.b16 %v1365
        %v3243 = vunpack.c.l.b16 %v1366
        %v3244 = vunpack.c.h.b16 %v1366
        %v3245 = vunpack.c.l.b16 %v1367
        %v3246 = vunpack.c.h.b16 %v1367
        %v3247 = vunpack.c.l.b16 %v1368
        %v3248 = vunpack.c.h.b16 %v1368
        %v3249 = vunpack.c.l.b16 %v1369
        %v3250 = vunpack.c.h.b16 %v1369
        %v3251 = vunpack.c.l.b16 %v1370
        %v3252 = vunpack.c.h.b16 %v1370
        %v3253 = vunpack.c.l.b16 %v1371
        %v3254 = vunpack.c.h.b16 %v1371
        %v3255 = vunpack.c.l.b16 %v1372
        %v3256 = vunpack.c.h.b16 %v1372
        %v3257 = vunpack.c.l.b16 %v1373
        %v3258 = vunpack.c.h.b16 %v1373
        %v3259 = vunpack.c.l.b16 %v1374
        %v3260 = vunpack.c.h.b16 %v1374
        %v3261 = vunpack.c.l.b16 %v1375
        %v3262 = vunpack.c.h.b16 %v1375
        %v3263 = vunpack.c.l.b16 %v1376
        %v3264 = vunpack.c.h.b16 %v1376
        %v3265 = vunpack.c.l.b16 %v1377
        %v3266 = vunpack.c.h.b16 %v1377
        %v3267 = vunpack.c.l.b16 %v1378
        %v3268 = vunpack.c.h.b16 %v1378
        %v3269 = vunpack.c.l.b16 %v1379
        %v3270 = vunpack.c.h.b16 %v1379
        %v3271 = vunpack.c.l.b16 %v1380
        %v3272 = vunpack.c.h.b16 %v1380
        %v3273 = vunpack.c.l.b16 %v1381
        %v3274 = vunpack.c.h.b16 %v1381
        %v3275 = vunpack.c.l.b16 %v1382
        %v3276 = vunpack.c.h.b16 %v1382
        %v3277 = vunpack.c.l.b16 %v1383
        %v3278 = vunpack.c.h.b16 %v1383
        %v3279 = vunpack.c.l.b16 %v1384
        %v3280 = vunpack.c.h.b16 %v1384
        %v3281 = vunpack.c.l.b16 %v1385
        %v3282 = vunpack.c.h.b16 %v1385
        %v3283 = vunpack.c.l.b16 %v1386
        %v3284 = vunpack.c.h.b16 %v1386
        %v3285 = vunpack.c.l.b16 %v1387
        %v3286 = vunpack.c.h.b16 %v1387
        %v3287 = vunpack.c.l.b16 %v1388
        %v3288 = vunpack.c.h.b16 %v1388
        %v3289 = vunpack.c.l.b16 %v1389
        %v3290 = vunpack.c.h.b16 %v1389
        %v3291 = vunpack.c.l.b16 %v1390
        %v3292 = vunpack.c.h.b16 %v1390
        %v3293 = vunpack.c.l.b16 %v1391
        %v3294 = vunpack.c.h.b16 %v1391
        %v3295 = vunpack.c.l.b16 %v1392
        %v3296 = vunpack.c.h.b16 %v1392
        %v3297 = vunpack.c.l.b16 %v1393
        %v3298 = vunpack.c.h.b16 %v1393
        %v3299 = vunpack.c.l.b16 %v1394
        %v3300 = vunpack.c.h.b16 %v1394
        %v3301 = vunpack.c.l.b16 %v1395
        %v3302 = vunpack.c.h.b16 %v1395
        %v3303 = vunpack.c.l.b16 %v1396
        %v3304 = vunpack.c.h.b16 %v1396
        %v3305 = vunpack.c.l.b16 %v1397
        %v3306 = vunpack.c.h.b16 %v1397
        %v3307 = vunpack.c.l.b16 %v1398
        %v3308 = vunpack.c.h.b16 %v1398
        %v3309 = vunpack.c.l.b16 %v1399
        %v3310 = vunpack.c.h.b16 %v1399
        %v3311 = vunpack.c.l.b16 %v1400
        %v3312 = vunpack.c.h.b16 %v1400
        %v3313 = vunpack.c.l.b16 %v1401
        %v3314 = vunpack.c.h.b16 %v1401
        %v3315 = vunpack.c.l.b16 %v1402
        %v3316 = vunpack.c.h.b16 %v1402
        %v3317 = vunpack.c.l.b16 %v1403
        %v3318 = vunpack.c.h.b16 %v1403
        %v3319 = vunpack.c.l.b16 %v1404
        %v3320 = vunpack.c.h.b16 %v1404
        %v3321 = vunpack.c.l.b16 %v1405
        %v3322 = vunpack.c.h.b16 %v1405
        %v3323 = vunpack.c.l.b16 %v1406
        %v3324 = vunpack.c.h.b16 %v1406
        %v3325 = vunpack.c.l.b16 %v1407
        %v3326 = vunpack.c.h.b16 %v1407
        %v3327 = vunpack.c.l.b16 %v1408
        %v3328 = vunpack.c.h.b16 %v1408
        %v3329 = vunpack.c.l.b16 %v1409
        %v3330 = vunpack.c.h.b16 %v1409
        %v3331 = vunpack.c.l.b16 %v1410
        %v3332 = vunpack.c.h.b16 %v1410
        %v3333 = vunpack.c.l.b16 %v1411
        %v3334 = vunpack.c.h.b16 %v1411
        %v3335 = vunpack.c.l.b16 %v1412
        %v3336 = vunpack.c.h.b16 %v1412
        %v3337 = vunpack.c.l.b16 %v1413
        %v3338 = vunpack.c.h.b16 %v1413
        %v3339 = vunpack.c.l.b16 %v1414
        %v3340 = vunpack.c.h.b16 %v1414
        %v3341 = vunpack.c.l.b16 %v1415
        %v3342 = vunpack.c.h.b16 %v1415
        %v3343 = vunpack.c.l.b16 %v1416
        %v3344 = vunpack.c.h.b16 %v1416
        %v3345 = vunpack.c.l.b16 %v1417
        %v3346 = vunpack.c.h.b16 %v1417
        %v3347 = vunpack.c.l.b16 %v1418
        %v3348 = vunpack.c.h.b16 %v1418
        %v3349 = vunpack.c.l.b16 %v1419
        %v3350 = vunpack.c.h.b16 %v1419
        %v3351 = vunpack.c.l.b16 %v1420
        %v3352 = vunpack.c.h.b16 %v1420
        %v3353 = vunpack.c.l.b16 %v1421
        %v3354 = vunpack.c.h.b16 %v1421
        %v3355 = vunpack.c.l.b16 %v1422
        %v3356 = vunpack.c.h.b16 %v1422
        %v3357 = vunpack.c.l.b16 %v1423
        %v3358 = vunpack.c.h.b16 %v1423
        %v3359 = vunpack.c.l.b16 %v1424
        %v3360 = vunpack.c.h.b16 %v1424
        %v3361 = vunpack.c.l.b16 %v1425
        %v3362 = vunpack.c.h.b16 %v1425
        %v3363 = vunpack.c.l.b16 %v1426
        %v3364 = vunpack.c.h.b16 %v1426
        %v3365 = vunpack.c.l.b16 %v1427
        %v3366 = vunpack.c.h.b16 %v1427
        %v3367 = vunpack.c.l.b16 %v1428
        %v3368 = vunpack.c.h.b16 %v1428
        %v3369 = vunpack.c.l.b16 %v1429
        %v3370 = vunpack.c.h.b16 %v1429
        %v3371 = vunpack.c.l.b16 %v1430
        %v3372 = vunpack.c.h.b16 %v1430
        %v3373 = vunpack.c.l.b16 %v1431
        %v3374 = vunpack.c.h.b16 %v1431
        %v3375 = vunpack.c.l.b16 %v1432
        %v3376 = vunpack.c.h.b16 %v1432
        %v3377 = vunpack.c.l.b16 %v1433
        %v3378 = vunpack.c.h.b16 %v1433
        %v3379 = vunpack.c.l.b16 %v1434
        %v3380 = vunpack.c.h.b16 %v1434
        %v3381 = vunpack.c.l.b16 %v1435
        %v3382 = vunpack.c.h.b16 %v1435
        %v3383 = vunpack.c.l.b16 %v1436
        %v3384 = vunpack.c.h.b16 %v1436
        %v3385 = vunpack.c.l.b16 %v1437
        %v3386 = vunpack.c.h.b16 %v1437
        %v3387 = vunpack.c.l.b16 %v1438
        %v3388 = vunpack.c.h.b16 %v1438
        %v3389 = vunpack.c.l.b16 %v1439
        %v3390 = vunpack.c.h.b16 %v1439
        %v3391 = vunpack.c.l.b16 %v1440
        %v3392 = vunpack.c.h.b16 %v1440
        %v3393 = vunpack.c.l.b16 %v1441
        %v3394 = vunpack.c.h.b16 %v1441
        %v3395 = vunpack.c.l.b16 %v1442
        %v3396 = vunpack.c.h.b16 %v1442
        %v3397 = vunpack.c.l.b16 %v1443
        %v3398 = vunpack.c.h.b16 %v1443
        %v3399 = vunpack.c.l.b16 %v1444
        %v3400 = vunpack.c.h.b16 %v1444
        %v3401 = vunpack.c.l.b16 %v1445
        %v3402 = vunpack.c.h.b16 %v1445
        %v3403 = vunpack.c.l.b16 %v1446
        %v3404 = vunpack.c.h.b16 %v1446
        %v3405 = vunpack.c.l.b16 %v1447
        %v3406 = vunpack.c.h.b16 %v1447
        %v3407 = vunpack.c.l.b16 %v1448
        %v3408 = vunpack.c.h.b16 %v1448
        %v3409 = vunpack.c.l.b16 %v1449
        %v3410 = vunpack.c.h.b16 %v1449
        %v3411 = vunpack.c.l.b16 %v1450
        %v3412 = vunpack.c.h.b16 %v1450
        %v3413 = vunpack.c.l.b16 %v1451
        %v3414 = vunpack.c.h.b16 %v1451
        %v3415 = vunpack.c.l.b16 %v1452
        %v3416 = vunpack.c.h.b16 %v1452
        %v3417 = vunpack.c.l.b16 %v1453
        %v3418 = vunpack.c.h.b16 %v1453
        %v3419 = vunpack.c.l.b16 %v1454
        %v3420 = vunpack.c.h.b16 %v1454
        %v3421 = vunpack.c.l.b16 %v1455
        %v3422 = vunpack.c.h.b16 %v1455
        %v3423 = vunpack.c.l.b16 %v1456
        %v3424 = vunpack.c.h.b16 %v1456
        %v3425 = vunpack.c.l.b16 %v1457
        %v3426 = vunpack.c.h.b16 %v1457
        %v3427 = vunpack.c.l.b16 %v1458
        %v3428 = vunpack.c.h.b16 %v1458
        %v3429 = vunpack.c.l.b16 %v1459
        %v3430 = vunpack.c.h.b16 %v1459
        %v3431 = vunpack.c.l.b16 %v1460
        %v3432 = vunpack.c.h.b16 %v1460
        %v3433 = vunpack.c.l.b16 %v1461
        %v3434 = vunpack.c.h.b16 %v1461
        %v3435 = vunpack.c.l.b16 %v1462
        %v3436 = vunpack.c.h.b16 %v1462
        %v3437 = vunpack.c.l.b16 %v1463
        %v3438 = vunpack.c.h.b16 %v1463
        %v3439 = vunpack.c.l.b16 %v1464
        %v3440 = vunpack.c.h.b16 %v1464
        %v3441 = vunpack.c.l.b16 %v1465
        %v3442 = vunpack.c.h.b16 %v1465
        %v3443 = vunpack.c.l.b16 %v1466
        %v3444 = vunpack.c.h.b16 %v1466
        %v3445 = vunpack.c.l.b16 %v1467
        %v3446 = vunpack.c.h.b16 %v1467
        %v3447 = vunpack.c.l.b16 %v1468
        %v3448 = vunpack.c.h.b16 %v1468
        %v3449 = vunpack.c.l.b16 %v1469
        %v3450 = vunpack.c.h.b16 %v1469
        %v3451 = vunpack.c.l.b16 %v1470
        %v3452 = vunpack.c.h.b16 %v1470
        %v3453 = vunpack.c.l.b16 %v1471
        %v3454 = vunpack.c.h.b16 %v1471
        %v3455 = vunpack.c.l.b16 %v1472
        %v3456 = vunpack.c.h.b16 %v1472
        %v3457 = vunpack.c.l.b16 %v1473
        %v3458 = vunpack.c.h.b16 %v1473
        %v3459 = vunpack.c.l.b16 %v1474
        %v3460 = vunpack.c.h.b16 %v1474
        %v3461 = vunpack.c.l.b16 %v1475
        %v3462 = vunpack.c.h.b16 %v1475
        %v3463 = vunpack.c.l.b16 %v1476
        %v3464 = vunpack.c.h.b16 %v1476
        %v3465 = vunpack.c.l.b16 %v1477
        %v3466 = vunpack.c.h.b16 %v1477
        %v3467 = vunpack.c.l.b16 %v1478
        %v3468 = vunpack.c.h.b16 %v1478
        %v3469 = vunpack.c.l.b16 %v1479
        %v3470 = vunpack.c.h.b16 %v1479
        %v3471 = vunpack.c.l.b16 %v1480
        %v3472 = vunpack.c.h.b16 %v1480
        %v3473 = vunpack.c.l.b16 %v1481
        %v3474 = vunpack.c.h.b16 %v1481
        %v3475 = vunpack.c.l.b16 %v1482
        %v3476 = vunpack.c.h.b16 %v1482
        %v3477 = vunpack.c.l.b16 %v1483
        %v3478 = vunpack.c.h.b16 %v1483
        %v3479 = vunpack.c.l.b16 %v1484
        %v3480 = vunpack.c.h.b16 %v1484
        %v3481 = vunpack.c.l.b16 %v1485
        %v3482 = vunpack.c.h.b16 %v1485
        %v3483 = vunpack.c.l.b16 %v1486
        %v3484 = vunpack.c.h.b16 %v1486
        %v3485 = vunpack.c.l.b16 %v1487
        %v3486 = vunpack.c.h.b16 %v1487
        %v3487 = vunpack.c.l.b16 %v1488
        %v3488 = vunpack.c.h.b16 %v1488
        %v3489 = vunpack.c.l.b16 %v1489
        %v3490 = vunpack.c.h.b16 %v1489
        %v3491 = vunpack.c.l.b16 %v1490
        %v3492 = vunpack.c.h.b16 %v1490
        %v3493 = vunpack.c.l.b16 %v1491
        %v3494 = vunpack.c.h.b16 %v1491
        %v3495 = vunpack.c.l.b16 %v1492
        %v3496 = vunpack.c.h.b16 %v1492
        %v3497 = vunpack.c.l.b16 %v1493
        %v3498 = vunpack.c.h.b16 %v1493
        %v3499 = vunpack.c.l.b16 %v1494
        %v3500 = vunpack.c.h.b16 %v1494
        %v3501 = vunpack.c.l.b16 %v1495
        %v3502 = vunpack.c.h.b16 %v1495
        %v3503 = vunpack.c.l.b16 %v1496
        %v3504 = vunpack.c.h.b16 %v1496
        %v3505 = vunpack.c.l.b16 %v1497
        %v3506 = vunpack.c.h.b16 %v1497
        %v3507 = vunpack.c.l.b16 %v1498
        %v3508 = vunpack.c.h.b16 %v1498
        %v3509 = vunpack.c.l.b16 %v1499
        %v3510 = vunpack.c.h.b16 %v1499
        %v3511 = vunpack.c.l.b16 %v1500
        %v3512 = vunpack.c.h.b16 %v1500
        %v3513 = vunpack.c.l.b16 %v1501
        %v3514 = vunpack.c.h.b16 %v1501
        %v3515 = vunpack.c.l.b16 %v1502
        %v3516 = vunpack.c.h.b16 %v1502
        %v3517 = vunpack.c.l.b16 %v1503
        %v3518 = vunpack.c.h.b16 %v1503
        %v3519 = vunpack.c.l.b16 %v1504
        %v3520 = vunpack.c.h.b16 %v1504
        %v3521 = vunpack.c.l.b16 %v1505
        %v3522 = vunpack.c.h.b16 %v1505
        %v3523 = vunpack.c.l.b16 %v1506
        %v3524 = vunpack.c.h.b16 %v1506
        %v3525 = vunpack.c.l.b16 %v1507
        %v3526 = vunpack.c.h.b16 %v1507
        %v3527 = vunpack.c.l.b16 %v1508
        %v3528 = vunpack.c.h.b16 %v1508
        %v3529 = vunpack.c.l.b16 %v1509
        %v3530 = vunpack.c.h.b16 %v1509
        %v3531 = vunpack.c.l.b16 %v1510
        %v3532 = vunpack.c.h.b16 %v1510
        %v3533 = vunpack.c.l.b16 %v1511
        %v3534 = vunpack.c.h.b16 %v1511
        %v3535 = vunpack.c.l.b16 %v1512
        %v3536 = vunpack.c.h.b16 %v1512
        %v3537 = vunpack.c.l.b16 %v1513
        %v3538 = vunpack.c.h.b16 %v1513
        %v3539 = vunpack.c.l.b16 %v1514
        %v3540 = vunpack.c.h.b16 %v1514
        %v3541 = vunpack.c.l.b16 %v1515
        %v3542 = vunpack.c.h.b16 %v1515
        %v3543 = vunpack.c.l.b16 %v1516
        %v3544 = vunpack.c.h.b16 %v1516
        %v3545 = vunpack.c.l.b16 %v1517
        %v3546 = vunpack.c.h.b16 %v1517
        %v3547 = vunpack.c.l.b16 %v1518
        %v3548 = vunpack.c.h.b16 %v1518
        %v3549 = vunpack.c.l.b16 %v1519
        %v3550 = vunpack.c.h.b16 %v1519
        %v3551 = vunpack.c.l.b16 %v1520
        %v3552 = vunpack.c.h.b16 %v1520
        %v3553 = vunpack.c.l.b16 %v1521
        %v3554 = vunpack.c.h.b16 %v1521
        %v3555 = vunpack.c.l.b16 %v1522
        %v3556 = vunpack.c.h.b16 %v1522
        %v3557 = vunpack.c.l.b16 %v1523
        %v3558 = vunpack.c.h.b16 %v1523
        %v3559 = vunpack.c.l.b16 %v1524
        %v3560 = vunpack.c.h.b16 %v1524
        %v3561 = vunpack.c.l.b16 %v1525
        %v3562 = vunpack.c.h.b16 %v1525
        %v3563 = vunpack.c.l.b16 %v1526
        %v3564 = vunpack.c.h.b16 %v1526
        %v3565 = vunpack.c.l.b16 %v1527
        %v3566 = vunpack.c.h.b16 %v1527
        %v3567 = vunpack.c.l.b16 %v1528
        %v3568 = vunpack.c.h.b16 %v1528
        %v3569 = vunpack.c.l.b16 %v1529
        %v3570 = vunpack.c.h.b16 %v1529
        %v3571 = vunpack.c.l.b16 %v1530
        %v3572 = vunpack.c.h.b16 %v1530
        %v3573 = vunpack.c.l.b16 %v1531
        %v3574 = vunpack.c.h.b16 %v1531
        %v3575 = vunpack.c.l.b16 %v1532
        %v3576 = vunpack.c.h.b16 %v1532
        %v3577 = vunpack.c.l.b16 %v1533
        %v3578 = vunpack.c.h.b16 %v1533
        %v3579 = vunpack.c.l.b16 %v1534
        %v3580 = vunpack.c.h.b16 %v1534
        %v3581 = vunpack.c.l.b16 %v1535
        %v3582 = vunpack.c.h.b16 %v1535
        %v3583 = vunpack.c.l.b16 %v1536
        %v3584 = vunpack.c.h.b16 %v1536
        %v3585 = vunpack.c.l.b16 %v1537
        %v3586 = vunpack.c.h.b16 %v1537
        %v3587 = vunpack.c.l.b16 %v1538
        %v3588 = vunpack.c.h.b16 %v1538
        %v3589 = vunpack.c.l.b16 %v1539
        %v3590 = vunpack.c.h.b16 %v1539
        %v3591 = vunpack.c.l.b16 %v1540
        %v3592 = vunpack.c.h.b16 %v1540
        %v3593 = vunpack.c.l.b16 %v1541
        %v3594 = vunpack.c.h.b16 %v1541
        %v3595 = vunpack.c.l.b16 %v1542
        %v3596 = vunpack.c.h.b16 %v1542
        %v3597 = vunpack.c.l.b16 %v1543
        %v3598 = vunpack.c.h.b16 %v1543
        %v3599 = vunpack.c.l.b16 %v1544
        %v3600 = vunpack.c.h.b16 %v1544
        %v3601 = vunpack.c.l.b16 %v1545
        %v3602 = vunpack.c.h.b16 %v1545
        %v3603 = vunpack.c.l.b16 %v1546
        %v3604 = vunpack.c.h.b16 %v1546
        %v3605 = vunpack.c.l.b16 %v1547
        %v3606 = vunpack.c.h.b16 %v1547
        %v3607 = vunpack.c.l.b16 %v1548
        %v3608 = vunpack.c.h.b16 %v1548
        %v3609 = vunpack.c.l.b16 %v1549
        %v3610 = vunpack.c.h.b16 %v1549
        %v3611 = vunpack.c.l.b16 %v1550
        %v3612 = vunpack.c.h.b16 %v1550
        %v3613 = vunpack.c.l.b16 %v1551
        %v3614 = vunpack.c.h.b16 %v1551
        %v3615 = vunpack.c.l.b16 %v1552
        %v3616 = vunpack.c.h.b16 %v1552
        %v3617 = vunpack.c.l.b16 %v1553
        %v3618 = vunpack.c.h.b16 %v1553
        %v3619 = vunpack.c.l.b16 %v1554
        %v3620 = vunpack.c.h.b16 %v1554
        %v3621 = vunpack.c.l.b16 %v1555
        %v3622 = vunpack.c.h.b16 %v1555
        %v3623 = vunpack.c.l.b16 %v1556
        %v3624 = vunpack.c.h.b16 %v1556
        %v3625 = vunpack.c.l.b16 %v1557
        %v3626 = vunpack.c.h.b16 %v1557
        %v3627 = vunpack.c.l.b16 %v1558
        %v3628 = vunpack.c.h.b16 %v1558
        %v3629 = vunpack.c.l.b16 %v1559
        %v3630 = vunpack.c.h.b16 %v1559
        %v3631 = vunpack.c.l.b16 %v1560
        %v3632 = vunpack.c.h.b16 %v1560
        %v3633 = vunpack.c.l.b16 %v1561
        %v3634 = vunpack.c.h.b16 %v1561
        %v3635 = vunpack.c.l.b16 %v1562
        %v3636 = vunpack.c.h.b16 %v1562
        %v3637 = vunpack.c.l.b16 %v1563
        %v3638 = vunpack.c.h.b16 %v1563
        %v3639 = vunpack.c.l.b16 %v1564
        %v3640 = vunpack.c.h.b16 %v1564
        %v3641 = vunpack.c.l.b16 %v1565
        %v3642 = vunpack.c.h.b16 %v1565
        %v3643 = vunpack.c.l.b16 %v1566
        %v3644 = vunpack.c.h.b16 %v1566
        %v3645 = vunpack.c.l.b16 %v1567
        %v3646 = vunpack.c.h.b16 %v1567
        %v3647 = vunpack.c.l.b16 %v1568
        %v3648 = vunpack.c.h.b16 %v1568
        %v3649 = vunpack.c.l.b16 %v1569
        %v3650 = vunpack.c.h.b16 %v1569
        %v3651 = vunpack.c.l.b16 %v1570
        %v3652 = vunpack.c.h.b16 %v1570
        %v3653 = vunpack.c.l.b16 %v1571
        %v3654 = vunpack.c.h.b16 %v1571
        %v3655 = vunpack.c.l.b16 %v1572
        %v3656 = vunpack.c.h.b16 %v1572
        %v3657 = vunpack.c.l.b16 %v1573
        %v3658 = vunpack.c.h.b16 %v1573
        %v3659 = vunpack.c.l.b16 %v1574
        %v3660 = vunpack.c.h.b16 %v1574
        %v3661 = vunpack.c.l.b16 %v1575
        %v3662 = vunpack.c.h.b16 %v1575
        %v3663 = vunpack.c.l.b16 %v1576
        %v3664 = vunpack.c.h.b16 %v1576
        %v3665 = vunpack.c.l.b16 %v1577
        %v3666 = vunpack.c.h.b16 %v1577
        %v3667 = vunpack.c.l.b16 %v1578
        %v3668 = vunpack.c.h.b16 %v1578
        %v3669 = vunpack.c.l.b16 %v1579
        %v3670 = vunpack.c.h.b16 %v1579
        %v3671 = vunpack.c.l.b16 %v1580
        %v3672 = vunpack.c.h.b16 %v1580
        %v3673 = vunpack.c.l.b16 %v1581
        %v3674 = vunpack.c.h.b16 %v1581
        %v3675 = vunpack.c.l.b16 %v1582
        %v3676 = vunpack.c.h.b16 %v1582
        %v3677 = vunpack.c.l.b16 %v1583
        %v3678 = vunpack.c.h.b16 %v1583
        %v3679 = vunpack.c.l.b16 %v1584
        %v3680 = vunpack.c.h.b16 %v1584
        %v3681 = vunpack.c.l.b16 %v1585
        %v3682 = vunpack.c.h.b16 %v1585
        %v3683 = vunpack.c.l.b16 %v1586
        %v3684 = vunpack.c.h.b16 %v1586
        %v3685 = vunpack.c.l.b16 %v1587
        %v3686 = vunpack.c.h.b16 %v1587
        %v3687 = vunpack.c.l.b16 %v1588
        %v3688 = vunpack.c.h.b16 %v1588
        %v3689 = vunpack.c.l.b16 %v1589
        %v3690 = vunpack.c.h.b16 %v1589
        %v3691 = vunpack.c.l.b16 %v1590
        %v3692 = vunpack.c.h.b16 %v1590
        %v3693 = vunpack.c.l.b16 %v1591
        %v3694 = vunpack.c.h.b16 %v1591
        %v3695 = vunpack.c.l.b16 %v1592
        %v3696 = vunpack.c.h.b16 %v1592
        %v3697 = vunpack.c.l.b16 %v1593
        %v3698 = vunpack.c.h.b16 %v1593
        %v3699 = vunpack.c.l.b16 %v1594
        %v3700 = vunpack.c.h.b16 %v1594
        %v3701 = vunpack.c.l.b16 %v1595
        %v3702 = vunpack.c.h.b16 %v1595
        %v3703 = vunpack.c.l.b16 %v1596
        %v3704 = vunpack.c.h.b16 %v1596
        %v3705 = vunpack.c.l.b16 %v1597
        %v3706 = vunpack.c.h.b16 %v1597
        %v3707 = vunpack.c.l.b16 %v1598
        %v3708 = vunpack.c.h.b16 %v1598
        %v3709 = vunpack.c.l.b16 %v1599
        %v3710 = vunpack.c.h.b16 %v1599
        %v3711 = vunpack.c.l.b16 %v1600
        %v3712 = vunpack.c.h.b16 %v1600
        %v3713 = vunpack.c.l.b16 %v1601
        %v3714 = vunpack.c.h.b16 %v1601
        %v3715 = vunpack.c.l.b16 %v1602
        %v3716 = vunpack.c.h.b16 %v1602
        %v3717 = vunpack.c.l.b16 %v1603
        %v3718 = vunpack.c.h.b16 %v1603
        %v3719 = vunpack.c.l.b16 %v1604
        %v3720 = vunpack.c.h.b16 %v1604
        %v3721 = vunpack.c.l.b16 %v1605
        %v3722 = vunpack.c.h.b16 %v1605
        %v3723 = vunpack.c.l.b16 %v1606
        %v3724 = vunpack.c.h.b16 %v1606
        %v3725 = vunpack.c.l.b16 %v1607
        %v3726 = vunpack.c.h.b16 %v1607
        %v3727 = vunpack.c.l.b16 %v1608
        %v3728 = vunpack.c.h.b16 %v1608
        %v3729 = vunpack.c.l.b16 %v1609
        %v3730 = vunpack.c.h.b16 %v1609
        %v3731 = vunpack.c.l.b16 %v1610
        %v3732 = vunpack.c.h.b16 %v1610
        %v3733 = vunpack.c.l.b16 %v1611
        %v3734 = vunpack.c.h.b16 %v1611
        %v3735 = vunpack.c.l.b16 %v1612
        %v3736 = vunpack.c.h.b16 %v1612
        %v3737 = vunpack.c.l.b16 %v1613
        %v3738 = vunpack.c.h.b16 %v1613
        %v3739 = vunpack.c.l.b16 %v1614
        %v3740 = vunpack.c.h.b16 %v1614
        %v3741 = vunpack.c.l.b16 %v1615
        %v3742 = vunpack.c.h.b16 %v1615
        %v3743 = vunpack.c.l.b16 %v1616
        %v3744 = vunpack.c.h.b16 %v1616
        %v3745 = vunpack.c.l.b16 %v1617
        %v3746 = vunpack.c.h.b16 %v1617
        %v3747 = vunpack.c.l.b16 %v1618
        %v3748 = vunpack.c.h.b16 %v1618
        %v3749 = vunpack.c.l.b16 %v1619
        %v3750 = vunpack.c.h.b16 %v1619
        %v3751 = vunpack.c.l.b16 %v1620
        %v3752 = vunpack.c.h.b16 %v1620
        %v3753 = vunpack.c.l.b16 %v1621
        %v3754 = vunpack.c.h.b16 %v1621
        %v3755 = vunpack.c.l.b16 %v1622
        %v3756 = vunpack.c.h.b16 %v1622
        %v3757 = vunpack.c.l.b16 %v1623
        %v3758 = vunpack.c.h.b16 %v1623
        %v3759 = vunpack.c.l.b16 %v1624
        %v3760 = vunpack.c.h.b16 %v1624
        %v3761 = vunpack.c.l.b16 %v1625
        %v3762 = vunpack.c.h.b16 %v1625
        %v3763 = vunpack.c.l.b16 %v1626
        %v3764 = vunpack.c.h.b16 %v1626
        %v3765 = vunpack.c.l.b16 %v1627
        %v3766 = vunpack.c.h.b16 %v1627
        %v3767 = vunpack.c.l.b16 %v1628
        %v3768 = vunpack.c.h.b16 %v1628
        %v3769 = vunpack.c.l.b16 %v1629
        %v3770 = vunpack.c.h.b16 %v1629
        %v3771 = vunpack.c.l.b16 %v1630
        %v3772 = vunpack.c.h.b16 %v1630
        %v3773 = vunpack.c.l.b16 %v1631
        %v3774 = vunpack.c.h.b16 %v1631
        %v3775 = vunpack.c.l.b16 %v1632
        %v3776 = vunpack.c.h.b16 %v1632
        %v3777 = vunpack.c.l.b16 %v1633
        %v3778 = vunpack.c.h.b16 %v1633
        %v3779 = vunpack.c.l.b16 %v1634
        %v3780 = vunpack.c.h.b16 %v1634
        %v3781 = vunpack.c.l.b16 %v1635
        %v3782 = vunpack.c.h.b16 %v1635
        %v3783 = vunpack.c.l.b16 %v1636
        %v3784 = vunpack.c.h.b16 %v1636
        %v3785 = vunpack.c.l.b16 %v1637
        %v3786 = vunpack.c.h.b16 %v1637
        %v3787 = vunpack.c.l.b16 %v1638
        %v3788 = vunpack.c.h.b16 %v1638
        %v3789 = vunpack.c.l.b16 %v1639
        %v3790 = vunpack.c.h.b16 %v1639
        %v3791 = vunpack.c.l.b16 %v1640
        %v3792 = vunpack.c.h.b16 %v1640
        %v3793 = vunpack.c.l.b16 %v1641
        %v3794 = vunpack.c.h.b16 %v1641
        %v3795 = vunpack.c.l.b16 %v1642
        %v3796 = vunpack.c.h.b16 %v1642
        %v3797 = vunpack.c.l.b16 %v1643
        %v3798 = vunpack.c.h.b16 %v1643
        %v3799 = vunpack.c.l.b16 %v1644
        %v3800 = vunpack.c.h.b16 %v1644
        %v3801 = vunpack.c.l.b16 %v1645
        %v3802 = vunpack.c.h.b16 %v1645
        %v3803 = vunpack.c.l.b16 %v1646
        %v3804 = vunpack.c.h.b16 %v1646
        %v3805 = vunpack.c.l.b16 %v1647
        %v3806 = vunpack.c.h.b16 %v1647
        %v3807 = vunpack.c.l.b16 %v1648
        %v3808 = vunpack.c.h.b16 %v1648
        %v3809 = vunpack.c.l.b16 %v1649
        %v3810 = vunpack.c.h.b16 %v1649
        %v3811 = vunpack.c.l.b16 %v1650
        %v3812 = vunpack.c.h.b16 %v1650
        %v3813 = vunpack.c.l.b16 %v1651
        %v3814 = vunpack.c.h.b16 %v1651
        %v3815 = vunpack.c.l.b16 %v1652
        %v3816 = vunpack.c.h.b16 %v1652
        %v3817 = vunpack.c.l.b16 %v1653
        %v3818 = vunpack.c.h.b16 %v1653
        %v3819 = vunpack.c.l.b16 %v1654
        %v3820 = vunpack.c.h.b16 %v1654
        %v3821 = vunpack.c.l.b16 %v1655
        %v3822 = vunpack.c.h.b16 %v1655
        %v3823 = vunpack.c.l.b16 %v1656
        %v3824 = vunpack.c.h.b16 %v1656
        %v3825 = vunpack.c.l.b16 %v1657
        %v3826 = vunpack.c.h.b16 %v1657
        %v3827 = vunpack.c.l.b16 %v1658
        %v3828 = vunpack.c.h.b16 %v1658
        %v3829 = vunpack.c.l.b16 %v1659
        %v3830 = vunpack.c.h.b16 %v1659
        %v3831 = vunpack.c.l.b16 %v1660
        %v3832 = vunpack.c.h.b16 %v1660
        %v3833 = vunpack.c.l.b16 %v1661
        %v3834 = vunpack.c.h.b16 %v1661
        %v3835 = vunpack.c.l.b16 %v1662
        %v3836 = vunpack.c.h.b16 %v1662
        %v3837 = vunpack.c.l.b16 %v1663
        %v3838 = vunpack.c.h.b16 %v1663
        %v3839 = vunpack.c.l.b16 %v1664
        %v3840 = vunpack.c.h.b16 %v1664
        %v3841 = vunpack.c.l.b16 %v1665
        %v3842 = vunpack.c.h.b16 %v1665
        %v3843 = vunpack.c.l.b16 %v1666
        %v3844 = vunpack.c.h.b16 %v1666
        %v3845 = vunpack.c.l.b16 %v1667
        %v3846 = vunpack.c.h.b16 %v1667
        %v3847 = vunpack.c.l.b16 %v1668
        %v3848 = vunpack.c.h.b16 %v1668
        %v3849 = vunpack.c.l.b16 %v1669
        %v3850 = vunpack.c.h.b16 %v1669
        %v3851 = vunpack.c.l.b16 %v1670
        %v3852 = vunpack.c.h.b16 %v1670
        %v3853 = vunpack.c.l.b16 %v1671
        %v3854 = vunpack.c.h.b16 %v1671
        %v3855 = vunpack.c.l.b16 %v1672
        %v3856 = vunpack.c.h.b16 %v1672
        %v3857 = vunpack.c.l.b16 %v1673
        %v3858 = vunpack.c.h.b16 %v1673
        %v3859 = vunpack.c.l.b16 %v1674
        %v3860 = vunpack.c.h.b16 %v1674
        %v3861 = vunpack.c.l.b16 %v1675
        %v3862 = vunpack.c.h.b16 %v1675
        %v3863 = vunpack.c.l.b16 %v1676
        %v3864 = vunpack.c.h.b16 %v1676
        %v3865 = vunpack.c.l.b16 %v1677
        %v3866 = vunpack.c.h.b16 %v1677
        %v3867 = vunpack.c.l.b16 %v1678
        %v3868 = vunpack.c.h.b16 %v1678
        %v3869 = vunpack.c.l.b16 %v1679
        %v3870 = vunpack.c.h.b16 %v1679
        %v3871 = vunpack.c.l.b16 %v1680
        %v3872 = vunpack.c.h.b16 %v1680
        %v3873 = vunpack.c.l.b16 %v1681
        %v3874 = vunpack.c.h.b16 %v1681
        %v3875 = vunpack.c.l.b16 %v1682
        %v3876 = vunpack.c.h.b16 %v1682
        %v3877 = vunpack.c.l.b16 %v1683
        %v3878 = vunpack.c.h.b16 %v1683
        %v3879 = vunpack.c.l.b16 %v1684
        %v3880 = vunpack.c.h.b16 %v1684
        %v3881 = vunpack.c.l.b16 %v1685
        %v3882 = vunpack.c.h.b16 %v1685
        %v3883 = vunpack.c.l.b16 %v1686
        %v3884 = vunpack.c.h.b16 %v1686
        %v3885 = vunpack.c.l.b16 %v1687
        %v3886 = vunpack.c.h.b16 %v1687
        %v3887 = vunpack.c.l.b16 %v1688
        %v3888 = vunpack.c.h.b16 %v1688
        %v3889 = vunpack.c.l.b16 %v1689
        %v3890 = vunpack.c.h.b16 %v1689
        %v3891 = vunpack.c.l.b16 %v1690
        %v3892 = vunpack.c.h.b16 %v1690
        %v3893 = vunpack.c.l.b16 %v1691
        %v3894 = vunpack.c.h.b16 %v1691
        %v3895 = vunpack.c.l.b16 %v1692
        %v3896 = vunpack.c.h.b16 %v1692
        %v3897 = vunpack.c.l.b16 %v1693
        %v3898 = vunpack.c.h.b16 %v1693
        %v3899 = vunpack.c.l.b16 %v1694
        %v3900 = vunpack.c.h.b16 %v1694
        %v3901 = vunpack.c.l.b16 %v1695
        %v3902 = vunpack.c.h.b16 %v1695
        %v3903 = vunpack.c.l.b16 %v1696
        %v3904 = vunpack.c.h.b16 %v1696
        %v3905 = vunpack.c.l.b16 %v1697
        %v3906 = vunpack.c.h.b16 %v1697
        %v3907 = vunpack.c.l.b16 %v1698
        %v3908 = vunpack.c.h.b16 %v1698
        %v3909 = vunpack.c.l.b16 %v1699
        %v3910 = vunpack.c.h.b16 %v1699
        %v3911 = vunpack.c.l.b16 %v1700
        %v3912 = vunpack.c.h.b16 %v1700
        %v3913 = vunpack.c.l.b16 %v1701
        %v3914 = vunpack.c.h.b16 %v1701
        %v3915 = vunpack.c.l.b16 %v1702
        %v3916 = vunpack.c.h.b16 %v1702
        %v3917 = vunpack.c.l.b16 %v1703
        %v3918 = vunpack.c.h.b16 %v1703
        %v3919 = vunpack.c.l.b16 %v1704
        %v3920 = vunpack.c.h.b16 %v1704
        %v3921 = vunpack.c.l.b16 %v1705
        %v3922 = vunpack.c.h.b16 %v1705
        %v3923 = vunpack.c.l.b16 %v1706
        %v3924 = vunpack.c.h.b16 %v1706
        %v3925 = vunpack.c.l.b16 %v1707
        %v3926 = vunpack.c.h.b16 %v1707
        %v3927 = vunpack.c.l.b16 %v1708
        %v3928 = vunpack.c.h.b16 %v1708
        %v3929 = vunpack.c.l.b16 %v1709
        %v3930 = vunpack.c.h.b16 %v1709
        %v3931 = vunpack.c.l.b16 %v1710
        %v3932 = vunpack.c.h.b16 %v1710
        %v3933 = vunpack.c.l.b16 %v1711
        %v3934 = vunpack.c.h.b16 %v1711
        %v3935 = vunpack.c.l.b16 %v1712
        %v3936 = vunpack.c.h.b16 %v1712
        %v3937 = vunpack.c.l.b16 %v1713
        %v3938 = vunpack.c.h.b16 %v1713
        %v3939 = vunpack.c.l.b16 %v1714
        %v3940 = vunpack.c.h.b16 %v1714
        %v3941 = vunpack.c.l.b16 %v1715
        %v3942 = vunpack.c.h.b16 %v1715
        %v3943 = vunpack.c.l.b16 %v1716
        %v3944 = vunpack.c.h.b16 %v1716
        %v3945 = vunpack.c.l.b16 %v1717
        %v3946 = vunpack.c.h.b16 %v1717
        %v3947 = vunpack.c.l.b16 %v1718
        %v3948 = vunpack.c.h.b16 %v1718
        %v3949 = vunpack.c.l.b16 %v1719
        %v3950 = vunpack.c.h.b16 %v1719
        %v3951 = vunpack.c.l.b16 %v1720
        %v3952 = vunpack.c.h.b16 %v1720
        %v3953 = vunpack.c.l.b16 %v1721
        %v3954 = vunpack.c.h.b16 %v1721
        %v3955 = vunpack.c.l.b16 %v1722
        %v3956 = vunpack.c.h.b16 %v1722
        %v3957 = vunpack.c.l.b16 %v1723
        %v3958 = vunpack.c.h.b16 %v1723
        %v3959 = vunpack.c.l.b16 %v1724
        %v3960 = vunpack.c.h.b16 %v1724
        %v3961 = vunpack.c.l.b16 %v1725
        %v3962 = vunpack.c.h.b16 %v1725
        %v3963 = vunpack.c.l.b16 %v1726
        %v3964 = vunpack.c.h.b16 %v1726
        %v3965 = vunpack.c.l.b16 %v1727
        %v3966 = vunpack.c.h.b16 %v1727
        %v3967 = vunpack.c.l.b16 %v1728
        %v3968 = vunpack.c.h.b16 %v1728
        %v3969 = vunpack.c.l.b16 %v1729
        %v3970 = vunpack.c.h.b16 %v1729
        %v3971 = vunpack.c.l.b16 %v1730
        %v3972 = vunpack.c.h.b16 %v1730
        %v3973 = vunpack.c.l.b16 %v1731
        %v3974 = vunpack.c.h.b16 %v1731
        %v3975 = vunpack.c.l.b16 %v1732
        %v3976 = vunpack.c.h.b16 %v1732
        %v3977 = vunpack.c.l.b16 %v1733
        %v3978 = vunpack.c.h.b16 %v1733
        %v3979 = vunpack.c.l.b16 %v1734
        %v3980 = vunpack.c.h.b16 %v1734
        %v3981 = vunpack.c.l.b16 %v1735
        %v3982 = vunpack.c.h.b16 %v1735
        %v3983 = vunpack.c.l.b16 %v1736
        %v3984 = vunpack.c.h.b16 %v1736
        %v3985 = vunpack.c.l.b16 %v1737
        %v3986 = vunpack.c.h.b16 %v1737
        %v3987 = vunpack.c.l.b16 %v1738
        %v3988 = vunpack.c.h.b16 %v1738
        %v3989 = vunpack.c.l.b16 %v1739
        %v3990 = vunpack.c.h.b16 %v1739
        %v3991 = vunpack.c.l.b16 %v1740
        %v3992 = vunpack.c.h.b16 %v1740
        %v3993 = vunpack.c.l.b16 %v1741
        %v3994 = vunpack.c.h.b16 %v1741
        %v3995 = vunpack.c.l.b16 %v1742
        %v3996 = vunpack.c.h.b16 %v1742
        %v3997 = vunpack.c.l.b16 %v1743
        %v3998 = vunpack.c.h.b16 %v1743
        %v3999 = vunpack.c.l.b16 %v1744
        %v4000 = vunpack.c.h.b16 %v1744
        %v4001 = vunpack.c.l.b16 %v1745
        %v4002 = vunpack.c.h.b16 %v1745
        %v4003 = vunpack.c.l.b16 %v1746
        %v4004 = vunpack.c.h.b16 %v1746
        %v4005 = vunpack.c.l.b16 %v1747
        %v4006 = vunpack.c.h.b16 %v1747
        %v4007 = vunpack.c.l.b16 %v1748
        %v4008 = vunpack.c.h.b16 %v1748
        %v4009 = vunpack.c.l.b16 %v1749
        %v4010 = vunpack.c.h.b16 %v1749
        %v4011 = vunpack.c.l.b16 %v1750
        %v4012 = vunpack.c.h.b16 %v1750
        %v4013 = vunpack.c.l.b16 %v1751
        %v4014 = vunpack.c.h.b16 %v1751
        %v4015 = vunpack.c.l.b16 %v1752
        %v4016 = vunpack.c.h.b16 %v1752
        %v4017 = vunpack.c.l.b16 %v1753
        %v4018 = vunpack.c.h.b16 %v1753
        %v4019 = vunpack.c.l.b16 %v1754
        %v4020 = vunpack.c.h.b16 %v1754
        %v4021 = vunpack.c.l.b16 %v1755
        %v4022 = vunpack.c.h.b16 %v1755
        %v4023 = vunpack.c.l.b16 %v1756
        %v4024 = vunpack.c.h.b16 %v1756
        %v4025 = vunpack.c.l.b16 %v1757
        %v4026 = vunpack.c.h.b16 %v1757
        %v4027 = vunpack.c.l.b16 %v1758
        %v4028 = vunpack.c.h.b16 %v1758
        %v4029 = vunpack.c.l.b16 %v1759
        %v4030 = vunpack.c.h.b16 %v1759
        %v4031 = vunpack.c.l.b16 %v1760
        %v4032 = vunpack.c.h.b16 %v1760
        %v4033 = vunpack.c.l.b16 %v1761
        %v4034 = vunpack.c.h.b16 %v1761
        %v4035 = vunpack.c.l.b16 %v1762
        %v4036 = vunpack.c.h.b16 %v1762
        %v4037 = vunpack.c.l.b16 %v1763
        %v4038 = vunpack.c.h.b16 %v1763
        %v4039 = vunpack.c.l.b16 %v1764
        %v4040 = vunpack.c.h.b16 %v1764
        %v4041 = vunpack.c.l.b16 %v1765
        %v4042 = vunpack.c.h.b16 %v1765
        %v4043 = vunpack.c.l.b16 %v1766
        %v4044 = vunpack.c.h.b16 %v1766
        %v4045 = vunpack.c.l.b16 %v1767
        %v4046 = vunpack.c.h.b16 %v1767
        %v4047 = vunpack.c.l.b16 %v1768
        %v4048 = vunpack.c.h.b16 %v1768
        %v4049 = vunpack.c.l.b16 %v1769
        %v4050 = vunpack.c.h.b16 %v1769
        %v4051 = vunpack.c.l.b16 %v1770
        %v4052 = vunpack.c.h.b16 %v1770
        %v4053 = vunpack.c.l.b16 %v1771
        %v4054 = vunpack.c.h.b16 %v1771
        %v4055 = vunpack.c.l.b16 %v1772
        %v4056 = vunpack.c.h.b16 %v1772
        %v4057 = vunpack.c.l.b16 %v1773
        %v4058 = vunpack.c.h.b16 %v1773
        %v4059 = vunpack.c.l.b16 %v1774
        %v4060 = vunpack.c.h.b16 %v1774
        %v4061 = vunpack.c.l.b16 %v1775
        %v4062 = vunpack.c.h.b16 %v1775
        %v4063 = vunpack.c.l.b16 %v1776
        %v4064 = vunpack.c.h.b16 %v1776
        %v4065 = vunpack.c.l.b16 %v1777
        %v4066 = vunpack.c.h.b16 %v1777
        %v4067 = vunpack.c.l.b16 %v1778
        %v4068 = vunpack.c.h.b16 %v1778
        %v4069 = vunpack.c.l.b16 %v1779
        %v4070 = vunpack.c.h.b16 %v1779
        %v4071 = vunpack.c.l.b16 %v1780
        %v4072 = vunpack.c.h.b16 %v1780
        %v4073 = vunpack.c.l.b16 %v1781
        %v4074 = vunpack.c.h.b16 %v1781
        %v4075 = vunpack.c.l.b16 %v1782
        %v4076 = vunpack.c.h.b16 %v1782
        %v4077 = vunpack.c.l.b16 %v1783
        %v4078 = vunpack.c.h.b16 %v1783
        %v4079 = vunpack.c.l.b16 %v1784
        %v4080 = vunpack.c.h.b16 %v1784
        %v4081 = vunpack.c.l.b16 %v1785
        %v4082 = vunpack.c.h.b16 %v1785
        %v4083 = vunpack.c.l.b16 %v1786
        %v4084 = vunpack.c.h.b16 %v1786
        %v4085 = vunpack.c.l.b16 %v1787
        %v4086 = vunpack.c.h.b16 %v1787
        %v4087 = vunpack.c.l.b16 %v1788
        %v4088 = vunpack.c.h.b16 %v1788
        %v4089 = vunpack.c.l.b16 %v1789
        %v4090 = vunpack.c.h.b16 %v1789
        %v4091 = vunpack.c.l.b16 %v1790
        %v4092 = vunpack.c.h.b16 %v1790
        %v4093 = vunpack.c.l.b16 %v1791
        %v4094 = vunpack.c.h.b16 %v1791
        %v4095 = vunpack.c.l.b16 %v1792
        %v4096 = vunpack.c.h.b16 %v1792
        %v4097 = vunpack.c.l.b16 %v1793
        %v4098 = vunpack.c.h.b16 %v1793
        %v4099 = vunpack.c.l.b16 %v1794
        %v4100 = vunpack.c.h.b16 %v1794
        %v4101 = vunpack.c.l.b16 %v1795
        %v4102 = vunpack.c.h.b16 %v1795
        %v4103 = vunpack.c.l.b16 %v1796
        %v4104 = vunpack.c.h.b16 %v1796
        %v4105 = vunpack.c.l.b16 %v1797
        %v4106 = vunpack.c.h.b16 %v1797
        %v4107 = vunpack.c.l.b16 %v1798
        %v4108 = vunpack.c.h.b16 %v1798
        %v4109 = vunpack.c.l.b16 %v1799
        %v4110 = vunpack.c.h.b16 %v1799
        %v4111 = vunpack.c.l.b16 %v1800
        %v4112 = vunpack.c.h.b16 %v1800
        %v4113 = vunpack.c.l.b16 %v1801
        %v4114 = vunpack.c.h.b16 %v1801
        %v4115 = vunpack.c.l.b16 %v1802
        %v4116 = vunpack.c.h.b16 %v1802
        %v4117 = vunpack.c.l.b16 %v1803
        %v4118 = vunpack.c.h.b16 %v1803
        %v4119 = vunpack.c.l.b16 %v1804
        %v4120 = vunpack.c.h.b16 %v1804
        %v4121 = vunpack.c.l.b16 %v1805
        %v4122 = vunpack.c.h.b16 %v1805
        %v4123 = vunpack.c.l.b16 %v1806
        %v4124 = vunpack.c.h.b16 %v1806
        %v4125 = vpack.c.b16 %v2595, %v2589
        %v4126 = vpack.c.b16 %v2596, %v2590
        %v4127 = vpack.c.b16 %v2597, %v2591
        %v4128 = vpack.c.b16 %v2598, %v2592
        %v4129 = vpack.c.b16 %v2599, %v2593
        %v4130 = vpack.c.b16 %v2600, %v2594
        %v4131 = vpack.c.b16 %v2607, %v2601
        %v4132 = vpack.c.b16 %v2608, %v2602
        %v4133 = vpack.c.b16 %v2609, %v2603
        %v4134 = vpack.c.b16 %v2610, %v2604
        %v4135 = vpack.c.b16 %v2611, %v2605
        %v4136 = vpack.c.b16 %v2612, %v2606
        %v4137 = vpack.c.b16 %v2619, %v2613
        %v4138 = vpack.c.b16 %v2620, %v2614
        %v4139 = vpack.c.b16 %v2621, %v2615
        %v4140 = vpack.c.b16 %v2622, %v2616
        %v4141 = vpack.c.b16 %v2623, %v2617
        %v4142 = vpack.c.b16 %v2624, %v2618
        %v4143 = vpack.c.b16 %v2631, %v2625
        %v4144 = vpack.c.b16 %v2632, %v2626
        %v4145 = vpack.c.b16 %v2633, %v2627
        %v4146 = vpack.c.b16 %v2634, %v2628
        %v4147 = vpack.c.b16 %v2635, %v2629
        %v4148 = vpack.c.b16 %v2636, %v2630
        %v4149 = vpack.c.b16 %v2643, %v2637
        %v4150 = vpack.c.b16 %v2644, %v2638
        %v4151 = vpack.c.b16 %v2645, %v2639
        %v4152 = vpack.c.b16 %v2646, %v2640
        %v4153 = vpack.c.b16 %v2647, %v2641
        %v4154 = vpack.c.b16 %v2648, %v2642
        %v4155 = vpack.c.b16 %v2655, %v2649
        %v4156 = vpack.c.b16 %v2656, %v2650
        %v4157 = vpack.c.b16 %v2657, %v2651
        %v4158 = vpack.c.b16 %v2658, %v2652
        %v4159 = vpack.c.b16 %v2659, %v2653
        %v4160 = vpack.c.b16 %v2660, %v2654
        %v4161 = vpack.c.b16 %v2667, %v2661
        %v4162 = vpack.c.b16 %v2668, %v2662
        %v4163 = vpack.c.b16 %v2669, %v2663
        %v4164 = vpack.c.b16 %v2670, %v2664
        %v4165 = vpack.c.b16 %v2671, %v2665
        %v4166 = vpack.c.b16 %v2672, %v2666
        %v4167 = vpack.c.b16 %v2679, %v2673
        %v4168 = vpack.c.b16 %v2680, %v2674
        %v4169 = vpack.c.b16 %v2681, %v2675
        %v4170 = vpack.c.b16 %v2682, %v2676
        %v4171 = vpack.c.b16 %v2683, %v2677
        %v4172 = vpack.c.b16 %v2684, %v2678
        %v4173 = vpack.c.b16 %v2691, %v2685
        %v4174 = vpack.c.b16 %v2692, %v2686
        %v4175 = vpack.c.b16 %v2693, %v2687
        %v4176 = vpack.c.b16 %v2694, %v2688
        %v4177 = vpack.c.b16 %v2695, %v2689
        %v4178 = vpack.c.b16 %v2696, %v2690
        %v4179 = vpack.c.b16 %v2703, %v2697
        %v4180 = vpack.c.b16 %v2704, %v2698
        %v4181 = vpack.c.b16 %v2705, %v2699
        %v4182 = vpack.c.b16 %v2706, %v2700
        %v4183 = vpack.c.b16 %v2707, %v2701
        %v4184 = vpack.c.b16 %v2708, %v2702
        %v4185 = vpack.c.b16 %v2715, %v2709
        %v4186 = vpack.c.b16 %v2716, %v2710
        %v4187 = vpack.c.b16 %v2717, %v2711
        %v4188 = vpack.c.b16 %v2718, %v2712
        %v4189 = vpack.c.b16 %v2719, %v2713
        %v4190 = vpack.c.b16 %v2720, %v2714
        %v4191 = vpack.c.b16 %v2727, %v2721
        %v4192 = vpack.c.b16 %v2728, %v2722
        %v4193 = vpack.c.b16 %v2729, %v2723
        %v4194 = vpack.c.b16 %v2730, %v2724
        %v4195 = vpack.c.b16 %v2731, %v2725
        %v4196 = vpack.c.b16 %v2732, %v2726
        %v4197 = vpack.c.b16 %v2739, %v2733
        %v4198 = vpack.c.b16 %v2740, %v2734
        %v4199 = vpack.c.b16 %v2741, %v2735
        %v4200 = vpack.c.b16 %v2742, %v2736
        %v4201 = vpack.c.b16 %v2743, %v2737
        %v4202 = vpack.c.b16 %v2744, %v2738
        %v4203 = vpack.c.b16 %v2751, %v2745
        %v4204 = vpack.c.b16 %v2752, %v2746
        %v4205 = vpack.c.b16 %v2753, %v2747
        %v4206 = vpack.c.b16 %v2754, %v2748
        %v4207 = vpack.c.b16 %v2755, %v2749
        %v4208 = vpack.c.b16 %v2756, %v2750
        %v4209 = vpack.c.b16 %v2763, %v2757
        %v4210 = vpack.c.b16 %v2764, %v2758
        %v4211 = vpack.c.b16 %v2765, %v2759
        %v4212 = vpack.c.b16 %v2766, %v2760
        %v4213 = vpack.c.b16 %v2767, %v2761
        %v4214 = vpack.c.b16 %v2768, %v2762
        %v4215 = vpack.c.b16 %v2775, %v2769
        %v4216 = vpack.c.b16 %v2776, %v2770
        %v4217 = vpack.c.b16 %v2777, %v2771
        %v4218 = vpack.c.b16 %v2778, %v2772
        %v4219 = vpack.c.b16 %v2779, %v2773
        %v4220 = vpack.c.b16 %v2780, %v2774
        %v4221 = vpack.c.b16 %v2787, %v2781
        %v4222 = vpack.c.b16 %v2788, %v2782
        %v4223 = vpack.c.b16 %v2789, %v2783
        %v4224 = vpack.c.b16 %v2790, %v2784
        %v4225 = vpack.c.b16 %v2791, %v2785
        %v4226 = vpack.c.b16 %v2792, %v2786
        %v4227 = vpack.c.b16 %v2799, %v2793
        %v4228 = vpack.c.b16 %v2800, %v2794
        %v4229 = vpack.c.b16 %v2801, %v2795
        %v4230 = vpack.c.b16 %v2802, %v2796
        %v4231 = vpack.c.b16 %v2803, %v2797
        %v4232 = vpack.c.b16 %v2804, %v2798
        %v4233 = vpack.c.b16 %v2811, %v2805
        %v4234 = vpack.c.b16 %v2812, %v2806
        %v4235 = vpack.c.b16 %v2813, %v2807
        %v4236 = vpack.c.b16 %v2814, %v2808
        %v4237 = vpack.c.b16 %v2815, %v2809
        %v4238 = vpack.c.b16 %v2816, %v2810
        %v4239 = vpack.c.b16 %v2823, %v2817
        %v4240 = vpack.c.b16 %v2824, %v2818
        %v4241 = vpack.c.b16 %v2825, %v2819
        %v4242 = vpack.c.b16 %v2826, %v2820
        %v4243 = vpack.c.b16 %v2827, %v2821
        %v4244 = vpack.c.b16 %v2828, %v2822
        %v4245 = vpack.c.b16 %v2835, %v2829
        %v4246 = vpack.c.b16 %v2836, %v2830
        %v4247 = vpack.c.b16 %v2837, %v2831
        %v4248 = vpack.c.b16 %v2838, %v2832
        %v4249 = vpack.c.b16 %v2839, %v2833
        %v4250 = vpack.c.b16 %v2840, %v2834
        %v4251 = vpack.c.b16 %v2847, %v2841
        %v4252 = vpack.c.b16 %v2848, %v2842
        %v4253 = vpack.c.b16 %v2849, %v2843
        %v4254 = vpack.c.b16 %v2850, %v2844
        %v4255 = vpack.c.b16 %v2851, %v2845
        %v4256 = vpack.c.b16 %v2852, %v2846
        %v4257 = vpack.c.b16 %v2859, %v2853
        %v4258 = vpack.c.b16 %v2860, %v2854
        %v4259 = vpack.c.b16 %v2861, %v2855
        %v4260 = vpack.c.b16 %v2862, %v2856
        %v4261 = vpack.c.b16 %v2863, %v2857
        %v4262 = vpack.c.b16 %v2864, %v2858
        %v4263 = vpack.c.b16 %v2871, %v2865
        %v4264 = vpack.c.b16 %v2872, %v2866
        %v4265 = vpack.c.b16 %v2873, %v2867
        %v4266 = vpack.c.b16 %v2874, %v2868
        %v4267 = vpack.c.b16 %v2875, %v2869
        %v4268 = vpack.c.b16 %v2876, %v2870
        %v4269 = vpack.c.b16 %v2883, %v2877
        %v4270 = vpack.c.b16 %v2884, %v2878
        %v4271 = vpack.c.b16 %v2885, %v2879
        %v4272 = vpack.c.b16 %v2886, %v2880
        %v4273 = vpack.c.b16 %v2887, %v2881
        %v4274 = vpack.c.b16 %v2888, %v2882
        %v4275 = vpack.c.b16 %v2895, %v2889
        %v4276 = vpack.c.b16 %v2896, %v2890
        %v4277 = vpack.c.b16 %v2897, %v2891
        %v4278 = vpack.c.b16 %v2898, %v2892
        %v4279 = vpack.c.b16 %v2899, %v2893
        %v4280 = vpack.c.b16 %v2900, %v2894
        %v4281 = vpack.c.b16 %v2907, %v2901
        %v4282 = vpack.c.b16 %v2908, %v2902
        %v4283 = vpack.c.b16 %v2909, %v2903
        %v4284 = vpack.c.b16 %v2910, %v2904
        %v4285 = vpack.c.b16 %v2911, %v2905
        %v4286 = vpack.c.b16 %v2912, %v2906
        %v4287 = vpack.c.b16 %v2919, %v2913
        %v4288 = vpack.c.b16 %v2920, %v2914
        %v4289 = vpack.c.b16 %v2921, %v2915
        %v4290 = vpack.c.b16 %v2922, %v2916
        %v4291 = vpack.c.b16 %v2923, %v2917
        %v4292 = vpack.c.b16 %v2924, %v2918
        %v4293 = vpack.c.b16 %v2931, %v2925
        %v4294 = vpack.c.b16 %v2932, %v2926
        %v4295 = vpack.c.b16 %v2933, %v2927
        %v4296 = vpack.c.b16 %v2934, %v2928
        %v4297 = vpack.c.b16 %v2935, %v2929
        %v4298 = vpack.c.b16 %v2936, %v2930
        %v4299 = vpack.c.b16 %v2943, %v2937
        %v4300 = vpack.c.b16 %v2944, %v2938
        %v4301 = vpack.c.b16 %v2945, %v2939
        %v4302 = vpack.c.b16 %v2946, %v2940
        %v4303 = vpack.c.b16 %v2947, %v2941
        %v4304 = vpack.c.b16 %v2948, %v2942
        %v4305 = vpack.c.b16 %v2955, %v2949
        %v4306 = vpack.c.b16 %v2956, %v2950
        %v4307 = vpack.c.b16 %v2957, %v2951
        %v4308 = vpack.c.b16 %v2958, %v2952
        %v4309 = vpack.c.b16 %v2959, %v2953
        %v4310 = vpack.c.b16 %v2960, %v2954
        %v4311 = vpack.c.b16 %v2967, %v2961
        %v4312 = vpack.c.b16 %v2968, %v2962
        %v4313 = vpack.c.b16 %v2969, %v2963
        %v4314 = vpack.c.b16 %v2970, %v2964
        %v4315 = vpack.c.b16 %v2971, %v2965
        %v4316 = vpack.c.b16 %v2972, %v2966
        %v4317 = vpack.c.b16 %v2979, %v2973
        %v4318 = vpack.c.b16 %v2980, %v2974
        %v4319 = vpack.c.b16 %v2981, %v2975
        %v4320 = vpack.c.b16 %v2982, %v2976
        %v4321 = vpack.c.b16 %v2983, %v2977
        %v4322 = vpack.c.b16 %v2984, %v2978
        %v4323 = vpack.c.b16 %v2991, %v2985
        %v4324 = vpack.c.b16 %v2992, %v2986
        %v4325 = vpack.c.b16 %v2993, %v2987
        %v4326 = vpack.c.b16 %v2994, %v2988
        %v4327 = vpack.c.b16 %v2995, %v2989
        %v4328 = vpack.c.b16 %v2996, %v2990
        %v4329 = vpack.c.b16 %v3003, %v2997
        %v4330 = vpack.c.b16 %v3004, %v2998
        %v4331 = vpack.c.b16 %v3005, %v2999
        %v4332 = vpack.c.b16 %v3006, %v3000
        %v4333 = vpack.c.b16 %v3007, %v3001
        %v4334 = vpack.c.b16 %v3008, %v3002
        %v4335 = vpack.c.b16 %v3015, %v3009
        %v4336 = vpack.c.b16 %v3016, %v3010
        %v4337 = vpack.c.b16 %v3017, %v3011
        %v4338 = vpack.c.b16 %v3018, %v3012
        %v4339 = vpack.c.b16 %v3019, %v3013
        %v4340 = vpack.c.b16 %v3020, %v3014
        %v4341 = vpack.c.b16 %v3027, %v3021
        %v4342 = vpack.c.b16 %v3028, %v3022
        %v4343 = vpack.c.b16 %v3029, %v3023
        %v4344 = vpack.c.b16 %v3030, %v3024
        %v4345 = vpack.c.b16 %v3031, %v3025
        %v4346 = vpack.c.b16 %v3032, %v3026
        %v4347 = vpack.c.b16 %v3039, %v3033
        %v4348 = vpack.c.b16 %v3040, %v3034
        %v4349 = vpack.c.b16 %v3041, %v3035
        %v4350 = vpack.c.b16 %v3042, %v3036
        %v4351 = vpack.c.b16 %v3043, %v3037
        %v4352 = vpack.c.b16 %v3044, %v3038
        %v4353 = vpack.c.b16 %v3051, %v3045
        %v4354 = vpack.c.b16 %v3052, %v3046
        %v4355 = vpack.c.b16 %v3053, %v3047
        %v4356 = vpack.c.b16 %v3054, %v3048
        %v4357 = vpack.c.b16 %v3055, %v3049
        %v4358 = vpack.c.b16 %v3056, %v3050
        %v4359 = vpack.c.b16 %v3063, %v3057
        %v4360 = vpack.c.b16 %v3064, %v3058
        %v4361 = vpack.c.b16 %v3065, %v3059
        %v4362 = vpack.c.b16 %v3066, %v3060
        %v4363 = vpack.c.b16 %v3067, %v3061
        %v4364 = vpack.c.b16 %v3068, %v3062
        %v4365 = vpack.c.b16 %v3075, %v3069
        %v4366 = vpack.c.b16 %v3076, %v3070
        %v4367 = vpack.c.b16 %v3077, %v3071
        %v4368 = vpack.c.b16 %v3078, %v3072
        %v4369 = vpack.c.b16 %v3079, %v3073
        %v4370 = vpack.c.b16 %v3080, %v3074
        %v4371 = vpack.c.b16 %v3087, %v3081
        %v4372 = vpack.c.b16 %v3088, %v3082
        %v4373 = vpack.c.b16 %v3089, %v3083
        %v4374 = vpack.c.b16 %v3090, %v3084
        %v4375 = vpack.c.b16 %v3091, %v3085
        %v4376 = vpack.c.b16 %v3092, %v3086
        %v4377 = vpack.c.b16 %v3099, %v3093
        %v4378 = vpack.c.b16 %v3100, %v3094
        %v4379 = vpack.c.b16 %v3101, %v3095
        %v4380 = vpack.c.b16 %v3102, %v3096
        %v4381 = vpack.c.b16 %v3103, %v3097
        %v4382 = vpack.c.b16 %v3104, %v3098
        %v4383 = vpack.c.b16 %v3111, %v3105
        %v4384 = vpack.c.b16 %v3112, %v3106
        %v4385 = vpack.c.b16 %v3113, %v3107
        %v4386 = vpack.c.b16 %v3114, %v3108
        %v4387 = vpack.c.b16 %v3115, %v3109
        %v4388 = vpack.c.b16 %v3116, %v3110
        %v4389 = vpack.c.b16 %v3123, %v3117
        %v4390 = vpack.c.b16 %v3124, %v3118
        %v4391 = vpack.c.b16 %v3125, %v3119
        %v4392 = vpack.c.b16 %v3126, %v3120
        %v4393 = vpack.c.b16 %v3127, %v3121
        %v4394 = vpack.c.b16 %v3128, %v3122
        %v4395 = vpack.c.b16 %v3135, %v3129
        %v4396 = vpack.c.b16 %v3136, %v3130
        %v4397 = vpack.c.b16 %v3137, %v3131
        %v4398 = vpack.c.b16 %v3138, %v3132
        %v4399 = vpack.c.b16 %v3139, %v3133
        %v4400 = vpack.c.b16 %v3140, %v3134
        %v4401 = vpack.c.b16 %v3147, %v3141
        %v4402 = vpack.c.b16 %v3148, %v3142
        %v4403 = vpack.c.b16 %v3149, %v3143
        %v4404 = vpack.c.b16 %v3150, %v3144
        %v4405 = vpack.c.b16 %v3151, %v3145
        %v4406 = vpack.c.b16 %v3152, %v3146
        %v4407 = vpack.c.b16 %v3159, %v3153
        %v4408 = vpack.c.b16 %v3160, %v3154
        %v4409 = vpack.c.b16 %v3161, %v3155
        %v4410 = vpack.c.b16 %v3162, %v3156
        %v4411 = vpack.c.b16 %v3163, %v3157
        %v4412 = vpack.c.b16 %v3164, %v3158
        %v4413 = vpack.c.b16 %v3171, %v3165
        %v4414 = vpack.c.b16 %v3172, %v3166
        %v4415 = vpack.c.b16 %v3173, %v3167
        %v4416 = vpack.c.b16 %v3174, %v3168
        %v4417 = vpack.c.b16 %v3175, %v3169
        %v4418 = vpack.c.b16 %v3176, %v3170
        %v4419 = vpack.c.b16 %v3183, %v3177
        %v4420 = vpack.c.b16 %v3184, %v3178
        %v4421 = vpack.c.b16 %v3185, %v3179
        %v4422 = vpack.c.b16 %v3186, %v3180
        %v4423 = vpack.c.b16 %v3187, %v3181
        %v4424 = vpack.c.b16 %v3188, %v3182
        %v4425 = vpack.c.b16 %v3195, %v3189
        %v4426 = vpack.c.b16 %v3196, %v3190
        %v4427 = vpack.c.b16 %v3197, %v3191
        %v4428 = vpack.c.b16 %v3198, %v3192
        %v4429 = vpack.c.b16 %v3199, %v3193
        %v4430 = vpack.c.b16 %v3200, %v3194
        %v4431 = vpack.c.b16 %v3207, %v3201
        %v4432 = vpack.c.b16 %v3208, %v3202
        %v4433 = vpack.c.b16 %v3209, %v3203
        %v4434 = vpack.c.b16 %v3210, %v3204
        %v4435 = vpack.c.b16 %v3211, %v3205
        %v4436 = vpack.c.b16 %v3212, %v3206
        %v4437 = vpack.c.b16 %v3219, %v3213
        %v4438 = vpack.c.b16 %v3220, %v3214
        %v4439 = vpack.c.b16 %v3221, %v3215
        %v4440 = vpack.c.b16 %v3222, %v3216
        %v4441 = vpack.c.b16 %v3223, %v3217
        %v4442 = vpack.c.b16 %v3224, %v3218
        %v4443 = vpack.c.b16 %v3231, %v3225
        %v4444 = vpack.c.b16 %v3232, %v3226
        %v4445 = vpack.c.b16 %v3233, %v3227
        %v4446 = vpack.c.b16 %v3234, %v3228
        %v4447 = vpack.c.b16 %v3235, %v3229
        %v4448 = vpack.c.b16 %v3236, %v3230
        %v4449 = vpack.c.b16 %v3243, %v3237
        %v4450 = vpack.c.b16 %v3244, %v3238
        %v4451 = vpack.c.b16 %v3245, %v3239
        %v4452 = vpack.c.b16 %v3246, %v3240
        %v4453 = vpack.c.b16 %v3247, %v3241
        %v4454 = vpack.c.b16 %v3248, %v3242
        %v4455 = vpack.c.b16 %v3255, %v3249
        %v4456 = vpack.c.b16 %v3256, %v3250
        %v4457 = vpack.c.b16 %v3257, %v3251
        %v4458 = vpack.c.b16 %v3258, %v3252
        %v4459 = vpack.c.b16 %v3259, %v3253
        %v4460 = vpack.c.b16 %v3260, %v3254
        %v4461 = vpack.c.b16 %v3267, %v3261
        %v4462 = vpack.c.b16 %v3268, %v3262
        %v4463 = vpack.c.b16 %v3269, %v3263
        %v4464 = vpack.c.b16 %v3270, %v3264
        %v4465 = vpack.c.b16 %v3271, %v3265
        %v4466 = vpack.c.b16 %v3272, %v3266
        %v4467 = vpack.c.b16 %v3279, %v3273
        %v4468 = vpack.c.b16 %v3280, %v3274
        %v4469 = vpack.c.b16 %v3281, %v3275
        %v4470 = vpack.c.b16 %v3282, %v3276
        %v4471 = vpack.c.b16 %v3283, %v3277
        %v4472 = vpack.c.b16 %v3284, %v3278
        %v4473 = vpack.c.b16 %v3291, %v3285
        %v4474 = vpack.c.b16 %v3292, %v3286
        %v4475 = vpack.c.b16 %v3293, %v3287
        %v4476 = vpack.c.b16 %v3294, %v3288
        %v4477 = vpack.c.b16 %v3295, %v3289
        %v4478 = vpack.c.b16 %v3296, %v3290
        %v4479 = vpack.c.b16 %v3303, %v3297
        %v4480 = vpack.c.b16 %v3304, %v3298
        %v4481 = vpack.c.b16 %v3305, %v3299
        %v4482 = vpack.c.b16 %v3306, %v3300
        %v4483 = vpack.c.b16 %v3307, %v3301
        %v4484 = vpack.c.b16 %v3308, %v3302
        %v4485 = vpack.c.b16 %v3315, %v3309
        %v4486 = vpack.c.b16 %v3316, %v3310
        %v4487 = vpack.c.b16 %v3317, %v3311
        %v4488 = vpack.c.b16 %v3318, %v3312
        %v4489 = vpack.c.b16 %v3319, %v3313
        %v4490 = vpack.c.b16 %v3320, %v3314
        %v4491 = vpack.c.b16 %v3327, %v3321
        %v4492 = vpack.c.b16 %v3328, %v3322
        %v4493 = vpack.c.b16 %v3329, %v3323
        %v4494 = vpack.c.b16 %v3330, %v3324
        %v4495 = vpack.c.b16 %v3331, %v3325
        %v4496 = vpack.c.b16 %v3332, %v3326
        %v4497 = vpack.c.b16 %v3339, %v3333
        %v4498 = vpack.c.b16 %v3340, %v3334
        %v4499 = vpack.c.b16 %v3341, %v3335
        %v4500 = vpack.c.b16 %v3342, %v3336
        %v4501 = vpack.c.b16 %v3343, %v3337
        %v4502 = vpack.c.b16 %v3344, %v3338
        %v4503 = vpack.c.b16 %v3351, %v3345
        %v4504 = vpack.c.b16 %v3352, %v3346
        %v4505 = vpack.c.b16 %v3353, %v3347
        %v4506 = vpack.c.b16 %v3354, %v3348
        %v4507 = vpack.c.b16 %v3355, %v3349
        %v4508 = vpack.c.b16 %v3356, %v3350
        %v4509 = vpack.c.b16 %v3363, %v3357
        %v4510 = vpack.c.b16 %v3364, %v3358
        %v4511 = vpack.c.b16 %v3365, %v3359
        %v4512 = vpack.c.b16 %v3366, %v3360
        %v4513 = vpack.c.b16 %v3367, %v3361
        %v4514 = vpack.c.b16 %v3368, %v3362
        %v4515 = vpack.c.b16 %v3375, %v3369
        %v4516 = vpack.c.b16 %v3376, %v3370
        %v4517 = vpack.c.b16 %v3377, %v3371
        %v4518 = vpack.c.b16 %v3378, %v3372
        %v4519 = vpack.c.b16 %v3379, %v3373
        %v4520 = vpack.c.b16 %v3380, %v3374
        %v4521 = vpack.c.b16 %v3387, %v3381
        %v4522 = vpack.c.b16 %v3388, %v3382
        %v4523 = vpack.c.b16 %v3389, %v3383
        %v4524 = vpack.c.b16 %v3390, %v3384
        %v4525 = vpack.c.b16 %v3391, %v3385
        %v4526 = vpack.c.b16 %v3392, %v3386
        %v4527 = vpack.c.b16 %v3399, %v3393
        %v4528 = vpack.c.b16 %v3400, %v3394
        %v4529 = vpack.c.b16 %v3401, %v3395
        %v4530 = vpack.c.b16 %v3402, %v3396
        %v4531 = vpack.c.b16 %v3403, %v3397
        %v4532 = vpack.c.b16 %v3404, %v3398
        %v4533 = vpack.c.b16 %v3411, %v3405
        %v4534 = vpack.c.b16 %v3412, %v3406
        %v4535 = vpack.c.b16 %v3413, %v3407
        %v4536 = vpack.c.b16 %v3414, %v3408
        %v4537 = vpack.c.b16 %v3415, %v3409
        %v4538 = vpack.c.b16 %v3416, %v3410
        %v4539 = vpack.c.b16 %v3423, %v3417
        %v4540 = vpack.c.b16 %v3424, %v3418
        %v4541 = vpack.c.b16 %v3425, %v3419
        %v4542 = vpack.c.b16 %v3426, %v3420
        %v4543 = vpack.c.b16 %v3427, %v3421
        %v4544 = vpack.c.b16 %v3428, %v3422
        %v4545 = vpack.c.b16 %v3435, %v3429
        %v4546 = vpack.c.b16 %v3436, %v3430
        %v4547 = vpack.c.b16 %v3437, %v3431
        %v4548 = vpack.c.b16 %v3438, %v3432
        %v4549 = vpack.c.b16 %v3439, %v3433
        %v4550 = vpack.c.b16 %v3440, %v3434
        %v4551 = vpack.c.b16 %v3447, %v3441
        %v4552 = vpack.c.b16 %v3448, %v3442
        %v4553 = vpack.c.b16 %v3449, %v3443
        %v4554 = vpack.c.b16 %v3450, %v3444
        %v4555 = vpack.c.b16 %v3451, %v3445
        %v4556 = vpack.c.b16 %v3452, %v3446
        %v4557 = vpack.c.b16 %v3459, %v3453
        %v4558 = vpack.c.b16 %v3460, %v3454
        %v4559 = vpack.c.b16 %v3461, %v3455
        %v4560 = vpack.c.b16 %v3462, %v3456
        %v4561 = vpack.c.b16 %v3463, %v3457
        %v4562 = vpack.c.b16 %v3464, %v3458
        %v4563 = vpack.c.b16 %v3471, %v3465
        %v4564 = vpack.c.b16 %v3472, %v3466
        %v4565 = vpack.c.b16 %v3473, %v3467
        %v4566 = vpack.c.b16 %v3474, %v3468
        %v4567 = vpack.c.b16 %v3475, %v3469
        %v4568 = vpack.c.b16 %v3476, %v3470
        %v4569 = vpack.c.b16 %v3483, %v3477
        %v4570 = vpack.c.b16 %v3484, %v3478
        %v4571 = vpack.c.b16 %v3485, %v3479
        %v4572 = vpack.c.b16 %v3486, %v3480
        %v4573 = vpack.c.b16 %v3487, %v3481
        %v4574 = vpack.c.b16 %v3488, %v3482
        %v4575 = vpack.c.b16 %v3495, %v3489
        %v4576 = vpack.c.b16 %v3496, %v3490
        %v4577 = vpack.c.b16 %v3497, %v3491
        %v4578 = vpack.c.b16 %v3498, %v3492
        %v4579 = vpack.c.b16 %v3499, %v3493
        %v4580 = vpack.c.b16 %v3500, %v3494
        %v4581 = vpack.c.b16 %v3507, %v3501
        %v4582 = vpack.c.b16 %v3508, %v3502
        %v4583 = vpack.c.b16 %v3509, %v3503
        %v4584 = vpack.c.b16 %v3510, %v3504
        %v4585 = vpack.c.b16 %v3511, %v3505
        %v4586 = vpack.c.b16 %v3512, %v3506
        %v4587 = vpack.c.b16 %v3519, %v3513
        %v4588 = vpack.c.b16 %v3520, %v3514
        %v4589 = vpack.c.b16 %v3521, %v3515
        %v4590 = vpack.c.b16 %v3522, %v3516
        %v4591 = vpack.c.b16 %v3523, %v3517
        %v4592 = vpack.c.b16 %v3524, %v3518
        %v4593 = vpack.c.b16 %v3531, %v3525
        %v4594 = vpack.c.b16 %v3532, %v3526
        %v4595 = vpack.c.b16 %v3533, %v3527
        %v4596 = vpack.c.b16 %v3534, %v3528
        %v4597 = vpack.c.b16 %v3535, %v3529
        %v4598 = vpack.c.b16 %v3536, %v3530
        %v4599 = vpack.c.b16 %v3543, %v3537
        %v4600 = vpack.c.b16 %v3544, %v3538
        %v4601 = vpack.c.b16 %v3545, %v3539
        %v4602 = vpack.c.b16 %v3546, %v3540
        %v4603 = vpack.c.b16 %v3547, %v3541
        %v4604 = vpack.c.b16 %v3548, %v3542
        %v4605 = vpack.c.b16 %v3555, %v3549
        %v4606 = vpack.c.b16 %v3556, %v3550
        %v4607 = vpack.c.b16 %v3557, %v3551
        %v4608 = vpack.c.b16 %v3558, %v3552
        %v4609 = vpack.c.b16 %v3559, %v3553
        %v4610 = vpack.c.b16 %v3560, %v3554
        %v4611 = vpack.c.b16 %v3567, %v3561
        %v4612 = vpack.c.b16 %v3568, %v3562
        %v4613 = vpack.c.b16 %v3569, %v3563
        %v4614 = vpack.c.b16 %v3570, %v3564
        %v4615 = vpack.c.b16 %v3571, %v3565
        %v4616 = vpack.c.b16 %v3572, %v3566
        %v4617 = vpack.c.b16 %v3579, %v3573
        %v4618 = vpack.c.b16 %v3580, %v3574
        %v4619 = vpack.c.b16 %v3581, %v3575
        %v4620 = vpack.c.b16 %v3582, %v3576
        %v4621 = vpack.c.b16 %v3583, %v3577
        %v4622 = vpack.c.b16 %v3584, %v3578
        %v4623 = vpack.c.b16 %v3591, %v3585
        %v4624 = vpack.c.b16 %v3592, %v3586
        %v4625 = vpack.c.b16 %v3593, %v3587
        %v4626 = vpack.c.b16 %v3594, %v3588
        %v4627 = vpack.c.b16 %v3595, %v3589
        %v4628 = vpack.c.b16 %v3596, %v3590
        %v4629 = vpack.c.b16 %v3603, %v3597
        %v4630 = vpack.c.b16 %v3604, %v3598
        %v4631 = vpack.c.b16 %v3605, %v3599
        %v4632 = vpack.c.b16 %v3606, %v3600
        %v4633 = vpack.c.b16 %v3607, %v3601
        %v4634 = vpack.c.b16 %v3608, %v3602
        %v4635 = vpack.c.b16 %v3615, %v3609
        %v4636 = vpack.c.b16 %v3616, %v3610
        %v4637 = vpack.c.b16 %v3617, %v3611
        %v4638 = vpack.c.b16 %v3618, %v3612
        %v4639 = vpack.c.b16 %v3619, %v3613
        %v4640 = vpack.c.b16 %v3620, %v3614
        %v4641 = vpack.c.b16 %v3627, %v3621
        %v4642 = vpack.c.b16 %v3628, %v3622
        %v4643 = vpack.c.b16 %v3629, %v3623
        %v4644 = vpack.c.b16 %v3630, %v3624
        %v4645 = vpack.c.b16 %v3631, %v3625
        %v4646 = vpack.c.b16 %v3632, %v3626
        %v4647 = vpack.c.b16 %v3639, %v3633
        %v4648 = vpack.c.b16 %v3640, %v3634
        %v4649 = vpack.c.b16 %v3641, %v3635
        %v4650 = vpack.c.b16 %v3642, %v3636
        %v4651 = vpack.c.b16 %v3643, %v3637
        %v4652 = vpack.c.b16 %v3644, %v3638
        %v4653 = vpack.c.b16 %v3651, %v3645
        %v4654 = vpack.c.b16 %v3652, %v3646
        %v4655 = vpack.c.b16 %v3653, %v3647
        %v4656 = vpack.c.b16 %v3654, %v3648
        %v4657 = vpack.c.b16 %v3655, %v3649
        %v4658 = vpack.c.b16 %v3656, %v3650
        %v4659 = vpack.c.b16 %v3663, %v3657
        %v4660 = vpack.c.b16 %v3664, %v3658
        %v4661 = vpack.c.b16 %v3665, %v3659
        %v4662 = vpack.c.b16 %v3666, %v3660
        %v4663 = vpack.c.b16 %v3667, %v3661
        %v4664 = vpack.c.b16 %v3668, %v3662
        %v4665 = vpack.c.b16 %v3675, %v3669
        %v4666 = vpack.c.b16 %v3676, %v3670
        %v4667 = vpack.c.b16 %v3677, %v3671
        %v4668 = vpack.c.b16 %v3678, %v3672
        %v4669 = vpack.c.b16 %v3679, %v3673
        %v4670 = vpack.c.b16 %v3680, %v3674
        %v4671 = vpack.c.b16 %v3687, %v3681
        %v4672 = vpack.c.b16 %v3688, %v3682
        %v4673 = vpack.c.b16 %v3689, %v3683
        %v4674 = vpack.c.b16 %v3690, %v3684
        %v4675 = vpack.c.b16 %v3691, %v3685
        %v4676 = vpack.c.b16 %v3692, %v3686
        %v4677 = vpack.c.b16 %v3699, %v3693
        %v4678 = vpack.c.b16 %v3700, %v3694
        %v4679 = vpack.c.b16 %v3701, %v3695
        %v4680 = vpack.c.b16 %v3702, %v3696
        %v4681 = vpack.c.b16 %v3703, %v3697
        %v4682 = vpack.c.b16 %v3704, %v3698
        %v4683 = vpack.c.b16 %v3711, %v3705
        %v4684 = vpack.c.b16 %v3712, %v3706
        %v4685 = vpack.c.b16 %v3713, %v3707
        %v4686 = vpack.c.b16 %v3714, %v3708
        %v4687 = vpack.c.b16 %v3715, %v3709
        %v4688 = vpack.c.b16 %v3716, %v3710
        %v4689 = vpack.c.b16 %v3723, %v3717
        %v4690 = vpack.c.b16 %v3724, %v3718
        %v4691 = vpack.c.b16 %v3725, %v3719
        %v4692 = vpack.c.b16 %v3726, %v3720
        %v4693 = vpack.c.b16 %v3727, %v3721
        %v4694 = vpack.c.b16 %v3728, %v3722
        %v4695 = vpack.c.b16 %v3735, %v3729
        %v4696 = vpack.c.b16 %v3736, %v3730
        %v4697 = vpack.c.b16 %v3737, %v3731
        %v4698 = vpack.c.b16 %v3738, %v3732
        %v4699 = vpack.c.b16 %v3739, %v3733
        %v4700 = vpack.c.b16 %v3740, %v3734
        %v4701 = vpack.c.b16 %v3747, %v3741
        %v4702 = vpack.c.b16 %v3748, %v3742
        %v4703 = vpack.c.b16 %v3749, %v3743
        %v4704 = vpack.c.b16 %v3750, %v3744
        %v4705 = vpack.c.b16 %v3751, %v3745
        %v4706 = vpack.c.b16 %v3752, %v3746
        %v4707 = vpack.c.b16 %v3759, %v3753
        %v4708 = vpack.c.b16 %v3760, %v3754
        %v4709 = vpack.c.b16 %v3761, %v3755
        %v4710 = vpack.c.b16 %v3762, %v3756
        %v4711 = vpack.c.b16 %v3763, %v3757
        %v4712 = vpack.c.b16 %v3764, %v3758
        %v4713 = vpack.c.b16 %v3771, %v3765
        %v4714 = vpack.c.b16 %v3772, %v3766
        %v4715 = vpack.c.b16 %v3773, %v3767
        %v4716 = vpack.c.b16 %v3774, %v3768
        %v4717 = vpack.c.b16 %v3775, %v3769
        %v4718 = vpack.c.b16 %v3776, %v3770
        %v4719 = vpack.c.b16 %v3783, %v3777
        %v4720 = vpack.c.b16 %v3784, %v3778
        %v4721 = vpack.c.b16 %v3785, %v3779
        %v4722 = vpack.c.b16 %v3786, %v3780
        %v4723 = vpack.c.b16 %v3787, %v3781
        %v4724 = vpack.c.b16 %v3788, %v3782
        %v4725 = vpack.c.b16 %v3795, %v3789
        %v4726 = vpack.c.b16 %v3796, %v3790
        %v4727 = vpack.c.b16 %v3797, %v3791
        %v4728 = vpack.c.b16 %v3798, %v3792
        %v4729 = vpack.c.b16 %v3799, %v3793
        %v4730 = vpack.c.b16 %v3800, %v3794
        %v4731 = vpack.c.b16 %v3807, %v3801
        %v4732 = vpack.c.b16 %v3808, %v3802
        %v4733 = vpack.c.b16 %v3809, %v3803
        %v4734 = vpack.c.b16 %v3810, %v3804
        %v4735 = vpack.c.b16 %v3811, %v3805
        %v4736 = vpack.c.b16 %v3812, %v3806
        %v4737 = vpack.c.b16 %v3819, %v3813
        %v4738 = vpack.c.b16 %v3820, %v3814
        %v4739 = vpack.c.b16 %v3821, %v3815
        %v4740 = vpack.c.b16 %v3822, %v3816
        %v4741 = vpack.c.b16 %v3823, %v3817
        %v4742 = vpack.c.b16 %v3824, %v3818
        %v4743 = vpack.c.b16 %v3831, %v3825
        %v4744 = vpack.c.b16 %v3832, %v3826
        %v4745 = vpack.c.b16 %v3833, %v3827
        %v4746 = vpack.c.b16 %v3834, %v3828
        %v4747 = vpack.c.b16 %v3835, %v3829
        %v4748 = vpack.c.b16 %v3836, %v3830
        %v4749 = vpack.c.b16 %v3843, %v3837
        %v4750 = vpack.c.b16 %v3844, %v3838
        %v4751 = vpack.c.b16 %v3845, %v3839
        %v4752 = vpack.c.b16 %v3846, %v3840
        %v4753 = vpack.c.b16 %v3847, %v3841
        %v4754 = vpack.c.b16 %v3848, %v3842
        %v4755 = vpack.c.b16 %v3855, %v3849
        %v4756 = vpack.c.b16 %v3856, %v3850
        %v4757 = vpack.c.b16 %v3857, %v3851
        %v4758 = vpack.c.b16 %v3858, %v3852
        %v4759 = vpack.c.b16 %v3859, %v3853
        %v4760 = vpack.c.b16 %v3860, %v3854
        %v4761 = vpack.c.b16 %v3867, %v3861
        %v4762 = vpack.c.b16 %v3868, %v3862
        %v4763 = vpack.c.b16 %v3869, %v3863
        %v4764 = vpack.c.b16 %v3870, %v3864
        %v4765 = vpack.c.b16 %v3871, %v3865
        %v4766 = vpack.c.b16 %v3872, %v3866
        %v4767 = vpack.c.b16 %v3879, %v3873
        %v4768 = vpack.c.b16 %v3880, %v3874
        %v4769 = vpack.c.b16 %v3881, %v3875
        %v4770 = vpack.c.b16 %v3882, %v3876
        %v4771 = vpack.c.b16 %v3883, %v3877
        %v4772 = vpack.c.b16 %v3884, %v3878
        %v4773 = vpack.c.b16 %v3891, %v3885
        %v4774 = vpack.c.b16 %v3892, %v3886
        %v4775 = vpack.c.b16 %v3893, %v3887
        %v4776 = vpack.c.b16 %v3894, %v3888
        %v4777 = vpack.c.b16 %v3895, %v3889
        %v4778 = vpack.c.b16 %v3896, %v3890
        %v4779 = vpack.c.b16 %v3903, %v3897
        %v4780 = vpack.c.b16 %v3904, %v3898
        %v4781 = vpack.c.b16 %v3905, %v3899
        %v4782 = vpack.c.b16 %v3906, %v3900
        %v4783 = vpack.c.b16 %v3907, %v3901
        %v4784 = vpack.c.b16 %v3908, %v3902
        %v4785 = vpack.c.b16 %v3915, %v3909
        %v4786 = vpack.c.b16 %v3916, %v3910
        %v4787 = vpack.c.b16 %v3917, %v3911
        %v4788 = vpack.c.b16 %v3918, %v3912
        %v4789 = vpack.c.b16 %v3919, %v3913
        %v4790 = vpack.c.b16 %v3920, %v3914
        %v4791 = vpack.c.b16 %v3927, %v3921
        %v4792 = vpack.c.b16 %v3928, %v3922
        %v4793 = vpack.c.b16 %v3929, %v3923
        %v4794 = vpack.c.b16 %v3930, %v3924
        %v4795 = vpack.c.b16 %v3931, %v3925
        %v4796 = vpack.c.b16 %v3932, %v3926
        %v4797 = vpack.c.b16 %v3939, %v3933
        %v4798 = vpack.c.b16 %v3940, %v3934
        %v4799 = vpack.c.b16 %v3941, %v3935
        %v4800 = vpack.c.b16 %v3942, %v3936
        %v4801 = vpack.c.b16 %v3943, %v3937
        %v4802 = vpack.c.b16 %v3944, %v3938
        %v4803 = vpack.c.b16 %v3951, %v3945
        %v4804 = vpack.c.b16 %v3952, %v3946
        %v4805 = vpack.c.b16 %v3953, %v3947
        %v4806 = vpack.c.b16 %v3954, %v3948
        %v4807 = vpack.c.b16 %v3955, %v3949
        %v4808 = vpack.c.b16 %v3956, %v3950
        %v4809 = vpack.c.b16 %v3963, %v3957
        %v4810 = vpack.c.b16 %v3964, %v3958
        %v4811 = vpack.c.b16 %v3965, %v3959
        %v4812 = vpack.c.b16 %v3966, %v3960
        %v4813 = vpack.c.b16 %v3967, %v3961
        %v4814 = vpack.c.b16 %v3968, %v3962
        %v4815 = vpack.c.b16 %v3975, %v3969
        %v4816 = vpack.c.b16 %v3976, %v3970
        %v4817 = vpack.c.b16 %v3977, %v3971
        %v4818 = vpack.c.b16 %v3978, %v3972
        %v4819 = vpack.c.b16 %v3979, %v3973
        %v4820 = vpack.c.b16 %v3980, %v3974
        %v4821 = vpack.c.b16 %v3987, %v3981
        %v4822 = vpack.c.b16 %v3988, %v3982
        %v4823 = vpack.c.b16 %v3989, %v3983
        %v4824 = vpack.c.b16 %v3990, %v3984
        %v4825 = vpack.c.b16 %v3991, %v3985
        %v4826 = vpack.c.b16 %v3992, %v3986
        %v4827 = vpack.c.b16 %v3999, %v3993
        %v4828 = vpack.c.b16 %v4000, %v3994
        %v4829 = vpack.c.b16 %v4001, %v3995
        %v4830 = vpack.c.b16 %v4002, %v3996
        %v4831 = vpack.c.b16 %v4003, %v3997
        %v4832 = vpack.c.b16 %v4004, %v3998
        %v4833 = vpack.c.b16 %v4011, %v4005
        %v4834 = vpack.c.b16 %v4012, %v4006
        %v4835 = vpack.c.b16 %v4013, %v4007
        %v4836 = vpack.c.b16 %v4014, %v4008
        %v4837 = vpack.c.b16 %v4015, %v4009
        %v4838 = vpack.c.b16 %v4016, %v4010
        %v4839 = vpack.c.b16 %v4023, %v4017
        %v4840 = vpack.c.b16 %v4024, %v4018
        %v4841 = vpack.c.b16 %v4025, %v4019
        %v4842 = vpack.c.b16 %v4026, %v4020
        %v4843 = vpack.c.b16 %v4027, %v4021
        %v4844 = vpack.c.b16 %v4028, %v4022
        %v4845 = vpack.c.b16 %v4035, %v4029
        %v4846 = vpack.c.b16 %v4036, %v4030
        %v4847 = vpack.c.b16 %v4037, %v4031
        %v4848 = vpack.c.b16 %v4038, %v4032
        %v4849 = vpack.c.b16 %v4039, %v4033
        %v4850 = vpack.c.b16 %v4040, %v4034
        %v4851 = vpack.c.b16 %v4047, %v4041
        %v4852 = vpack.c.b16 %v4048, %v4042
        %v4853 = vpack.c.b16 %v4049, %v4043
        %v4854 = vpack.c.b16 %v4050, %v4044
        %v4855 = vpack.c.b16 %v4051, %v4045
        %v4856 = vpack.c.b16 %v4052, %v4046
        %v4857 = vpack.c.b16 %v4059, %v4053
        %v4858 = vpack.c.b16 %v4060, %v4054
        %v4859 = vpack.c.b16 %v4061, %v4055
        %v4860 = vpack.c.b16 %v4062, %v4056
        %v4861 = vpack.c.b16 %v4063, %v4057
        %v4862 = vpack.c.b16 %v4064, %v4058
        %v4863 = vpack.c.b16 %v4071, %v4065
        %v4864 = vpack.c.b16 %v4072, %v4066
        %v4865 = vpack.c.b16 %v4073, %v4067
        %v4866 = vpack.c.b16 %v4074, %v4068
        %v4867 = vpack.c.b16 %v4075, %v4069
        %v4868 = vpack.c.b16 %v4076, %v4070
        %v4869 = vpack.c.b16 %v4083, %v4077
        %v4870 = vpack.c.b16 %v4084, %v4078
        %v4871 = vpack.c.b16 %v4085, %v4079
        %v4872 = vpack.c.b16 %v4086, %v4080
        %v4873 = vpack.c.b16 %v4087, %v4081
        %v4874 = vpack.c.b16 %v4088, %v4082
        %v4875 = vpack.c.b16 %v4095, %v4089
        %v4876 = vpack.c.b16 %v4096, %v4090
        %v4877 = vpack.c.b16 %v4097, %v4091
        %v4878 = vpack.c.b16 %v4098, %v4092
        %v4879 = vpack.c.b16 %v4099, %v4093
        %v4880 = vpack.c.b16 %v4100, %v4094
        %v4881 = vpack.c.b16 %v4107, %v4101
        %v4882 = vpack.c.b16 %v4108, %v4102
        %v4883 = vpack.c.b16 %v4109, %v4103
        %v4884 = vpack.c.b16 %v4110, %v4104
        %v4885 = vpack.c.b16 %v4111, %v4105
        %v4886 = vpack.c.b16 %v4112, %v4106
        %v4887 = vpack.c.b16 %v4119, %v4113
        %v4888 = vpack.c.b16 %v4120, %v4114
        %v4889 = vpack.c.b16 %v4121, %v4115
        %v4890 = vpack.c.b16 %v4122, %v4116
        %v4891 = vpack.c.b16 %v4123, %v4117
        %v4892 = vpack.c.b16 %v4124, %v4118
        %5661 = vmatpush.bf16.msra.mxu0 %v4167
        %5662 = vmatpush.bf16.msra.mxu0 %v4161
        %5663 = vmatpush.bf16.msra.mxu0 %v4155
        %5664 = vmatpush.bf16.msra.mxu0 %v4149
        %5665 = vmatpush.bf16.msra.mxu0 %v4143
        %5666 = vmatpush.bf16.msra.mxu0 %v4137
        %5667 = vmatpush.bf16.msra.mxu0 %v4131
        %5668 = vmatpush.bf16.msra.mxu0 %v4125
        %5669 = vmatmul.bf16.gmra.mxu0 %v1007
        %v5670 = vpop.f32.mrf.mxu0
        %v5671 = vadd.f32 %v1809, %v5670
        %v5672 = vpop.f32.mrf.mxu0
        %v5673 = vadd.f32 %v1809, %v5672
        %5674 = vmatmul.bf16.gmra.mxu0 %v1023
        %v5675 = vpop.f32.mrf.mxu0
        %v5676 = vadd.f32 %v1809, %v5675
        %v5677 = vpop.f32.mrf.mxu0
        %v5678 = vadd.f32 %v1809, %v5677
        %5679 = vdwg.mxu0
        %5680 = vmatpush.bf16.msra.mxu0 %v4215
        %5681 = vmatpush.bf16.msra.mxu0 %v4209
        %5682 = vmatpush.bf16.msra.mxu0 %v4203
        %5683 = vmatpush.bf16.msra.mxu0 %v4197
        %5684 = vmatpush.bf16.msra.mxu0 %v4191
        %5685 = vmatpush.bf16.msra.mxu0 %v4185
        %5686 = vmatpush.bf16.msra.mxu0 %v4179
        %5687 = vmatpush.bf16.msra.mxu0 %v4173
        %5688 = vmatmul.bf16.gmra.mxu0 %v1008
        %v5689 = vpop.f32.mrf.mxu0
        %v5690 = vadd.f32 %v5671, %v5689
        %v5691 = vpop.f32.mrf.mxu0
        %v5692 = vadd.f32 %v5673, %v5691
        %5693 = vmatmul.bf16.gmra.mxu0 %v1024
        %v5694 = vpop.f32.mrf.mxu0
        %v5695 = vadd.f32 %v5676, %v5694
        %v5696 = vpop.f32.mrf.mxu0
        %v5697 = vadd.f32 %v5678, %v5696
        %5698 = vdwg.mxu0
        %5699 = vmatpush.bf16.msra.mxu0 %v4263
        %5700 = vmatpush.bf16.msra.mxu0 %v4257
        %5701 = vmatpush.bf16.msra.mxu0 %v4251
        %5702 = vmatpush.bf16.msra.mxu0 %v4245
        %5703 = vmatpush.bf16.msra.mxu0 %v4239
        %5704 = vmatpush.bf16.msra.mxu0 %v4233
        %5705 = vmatpush.bf16.msra.mxu0 %v4227
        %5706 = vmatpush.bf16.msra.mxu0 %v4221
        %5707 = vmatmul.bf16.gmra.mxu0 %v1009
        %v5708 = vpop.f32.mrf.mxu0
        %v5709 = vadd.f32 %v5690, %v5708
        %v5710 = vpop.f32.mrf.mxu0
        %v5711 = vadd.f32 %v5692, %v5710
        %5712 = vmatmul.bf16.gmra.mxu0 %v1025
        %v5713 = vpop.f32.mrf.mxu0
        %v5714 = vadd.f32 %v5695, %v5713
        %v5715 = vpop.f32.mrf.mxu0
        %v5716 = vadd.f32 %v5697, %v5715
        %5717 = vdwg.mxu0
        %5718 = vmatpush.bf16.msra.mxu0 %v4311
        %5719 = vmatpush.bf16.msra.mxu0 %v4305
        %5720 = vmatpush.bf16.msra.mxu0 %v4299
        %5721 = vmatpush.bf16.msra.mxu0 %v4293
        %5722 = vmatpush.bf16.msra.mxu0 %v4287
        %5723 = vmatpush.bf16.msra.mxu0 %v4281
        %5724 = vmatpush.bf16.msra.mxu0 %v4275
        %5725 = vmatpush.bf16.msra.mxu0 %v4269
        %5726 = vmatmul.bf16.gmra.mxu0 %v1010
        %v5727 = vpop.f32.mrf.mxu0
        %v5728 = vadd.f32 %v5709, %v5727
        %v5729 = vpop.f32.mrf.mxu0
        %v5730 = vadd.f32 %v5711, %v5729
        %5731 = vmatmul.bf16.gmra.mxu0 %v1026
        %v5732 = vpop.f32.mrf.mxu0
        %v5733 = vadd.f32 %v5714, %v5732
        %v5734 = vpop.f32.mrf.mxu0
        %v5735 = vadd.f32 %v5716, %v5734
        %5736 = vdwg.mxu0
        %5737 = vmatpush.bf16.msra.mxu0 %v4359
        %5738 = vmatpush.bf16.msra.mxu0 %v4353
        %5739 = vmatpush.bf16.msra.mxu0 %v4347
        %5740 = vmatpush.bf16.msra.mxu0 %v4341
        %5741 = vmatpush.bf16.msra.mxu0 %v4335
        %5742 = vmatpush.bf16.msra.mxu0 %v4329
        %5743 = vmatpush.bf16.msra.mxu0 %v4323
        %5744 = vmatpush.bf16.msra.mxu0 %v4317
        %5745 = vmatmul.bf16.gmra.mxu0 %v1011
        %v5746 = vpop.f32.mrf.mxu0
        %v5747 = vadd.f32 %v5728, %v5746
        %v5748 = vpop.f32.mrf.mxu0
        %v5749 = vadd.f32 %v5730, %v5748
        %5750 = vmatmul.bf16.gmra.mxu0 %v1027
        %v5751 = vpop.f32.mrf.mxu0
        %v5752 = vadd.f32 %v5733, %v5751
        %v5753 = vpop.f32.mrf.mxu0
        %v5754 = vadd.f32 %v5735, %v5753
        %5755 = vdwg.mxu0
        %5756 = vmatpush.bf16.msra.mxu0 %v4407
        %5757 = vmatpush.bf16.msra.mxu0 %v4401
        %5758 = vmatpush.bf16.msra.mxu0 %v4395
        %5759 = vmatpush.bf16.msra.mxu0 %v4389
        %5760 = vmatpush.bf16.msra.mxu0 %v4383
        %5761 = vmatpush.bf16.msra.mxu0 %v4377
        %5762 = vmatpush.bf16.msra.mxu0 %v4371
        %5763 = vmatpush.bf16.msra.mxu0 %v4365
        %5764 = vmatmul.bf16.gmra.mxu0 %v1012
        %v5765 = vpop.f32.mrf.mxu0
        %v5766 = vadd.f32 %v5747, %v5765
        %v5767 = vpop.f32.mrf.mxu0
        %v5768 = vadd.f32 %v5749, %v5767
        %5769 = vmatmul.bf16.gmra.mxu0 %v1028
        %v5770 = vpop.f32.mrf.mxu0
        %v5771 = vadd.f32 %v5752, %v5770
        %v5772 = vpop.f32.mrf.mxu0
        %v5773 = vadd.f32 %v5754, %v5772
        %5774 = vdwg.mxu0
        %5775 = vmatpush.bf16.msra.mxu0 %v4455
        %5776 = vmatpush.bf16.msra.mxu0 %v4449
        %5777 = vmatpush.bf16.msra.mxu0 %v4443
        %5778 = vmatpush.bf16.msra.mxu0 %v4437
        %5779 = vmatpush.bf16.msra.mxu0 %v4431
        %5780 = vmatpush.bf16.msra.mxu0 %v4425
        %5781 = vmatpush.bf16.msra.mxu0 %v4419
        %5782 = vmatpush.bf16.msra.mxu0 %v4413
        %5783 = vmatmul.bf16.gmra.mxu0 %v1013
        %v5784 = vpop.f32.mrf.mxu0
        %v5785 = vadd.f32 %v5766, %v5784
        %v5786 = vpop.f32.mrf.mxu0
        %v5787 = vadd.f32 %v5768, %v5786
        %5788 = vmatmul.bf16.gmra.mxu0 %v1029
        %v5789 = vpop.f32.mrf.mxu0
        %v5790 = vadd.f32 %v5771, %v5789
        %v5791 = vpop.f32.mrf.mxu0
        %v5792 = vadd.f32 %v5773, %v5791
        %5793 = vdwg.mxu0
        %5794 = vmatpush.bf16.msra.mxu0 %v4503
        %5795 = vmatpush.bf16.msra.mxu0 %v4497
        %5796 = vmatpush.bf16.msra.mxu0 %v4491
        %5797 = vmatpush.bf16.msra.mxu0 %v4485
        %5798 = vmatpush.bf16.msra.mxu0 %v4479
        %5799 = vmatpush.bf16.msra.mxu0 %v4473
        %5800 = vmatpush.bf16.msra.mxu0 %v4467
        %5801 = vmatpush.bf16.msra.mxu0 %v4461
        %5802 = vmatmul.bf16.gmra.mxu0 %v1014
        %v5803 = vpop.f32.mrf.mxu0
        %v5804 = vadd.f32 %v5785, %v5803
        %v5805 = vpop.f32.mrf.mxu0
        %v5806 = vadd.f32 %v5787, %v5805
        %5807 = vmatmul.bf16.gmra.mxu0 %v1030
        %v5808 = vpop.f32.mrf.mxu0
        %v5809 = vadd.f32 %v5790, %v5808
        %v5810 = vpop.f32.mrf.mxu0
        %v5811 = vadd.f32 %v5792, %v5810
        %5812 = vdwg.mxu0
        %5813 = vmatpush.bf16.msra.mxu0 %v4551
        %5814 = vmatpush.bf16.msra.mxu0 %v4545
        %5815 = vmatpush.bf16.msra.mxu0 %v4539
        %5816 = vmatpush.bf16.msra.mxu0 %v4533
        %5817 = vmatpush.bf16.msra.mxu0 %v4527
        %5818 = vmatpush.bf16.msra.mxu0 %v4521
        %5819 = vmatpush.bf16.msra.mxu0 %v4515
        %5820 = vmatpush.bf16.msra.mxu0 %v4509
        %5821 = vmatmul.bf16.gmra.mxu0 %v1015
        %v5822 = vpop.f32.mrf.mxu0
        %v5823 = vadd.f32 %v5804, %v5822
        %v5824 = vpop.f32.mrf.mxu0
        %v5825 = vadd.f32 %v5806, %v5824
        %5826 = vmatmul.bf16.gmra.mxu0 %v1031
        %v5827 = vpop.f32.mrf.mxu0
        %v5828 = vadd.f32 %v5809, %v5827
        %v5829 = vpop.f32.mrf.mxu0
        %v5830 = vadd.f32 %v5811, %v5829
        %5831 = vdwg.mxu0
        %5832 = vmatpush.bf16.msra.mxu0 %v4599
        %5833 = vmatpush.bf16.msra.mxu0 %v4593
        %5834 = vmatpush.bf16.msra.mxu0 %v4587
        %5835 = vmatpush.bf16.msra.mxu0 %v4581
        %5836 = vmatpush.bf16.msra.mxu0 %v4575
        %5837 = vmatpush.bf16.msra.mxu0 %v4569
        %5838 = vmatpush.bf16.msra.mxu0 %v4563
        %5839 = vmatpush.bf16.msra.mxu0 %v4557
        %5840 = vmatmul.bf16.gmra.mxu0 %v1016
        %v5841 = vpop.f32.mrf.mxu0
        %v5842 = vadd.f32 %v5823, %v5841
        %v5843 = vpop.f32.mrf.mxu0
        %v5844 = vadd.f32 %v5825, %v5843
        %5845 = vmatmul.bf16.gmra.mxu0 %v1032
        %v5846 = vpop.f32.mrf.mxu0
        %v5847 = vadd.f32 %v5828, %v5846
        %v5848 = vpop.f32.mrf.mxu0
        %v5849 = vadd.f32 %v5830, %v5848
        %5850 = vdwg.mxu0
        %5851 = vmatpush.bf16.msra.mxu0 %v4647
        %5852 = vmatpush.bf16.msra.mxu0 %v4641
        %5853 = vmatpush.bf16.msra.mxu0 %v4635
        %5854 = vmatpush.bf16.msra.mxu0 %v4629
        %5855 = vmatpush.bf16.msra.mxu0 %v4623
        %5856 = vmatpush.bf16.msra.mxu0 %v4617
        %5857 = vmatpush.bf16.msra.mxu0 %v4611
        %5858 = vmatpush.bf16.msra.mxu0 %v4605
        %5859 = vmatmul.bf16.gmra.mxu0 %v1017
        %v5860 = vpop.f32.mrf.mxu0
        %v5861 = vadd.f32 %v5842, %v5860
        %v5862 = vpop.f32.mrf.mxu0
        %v5863 = vadd.f32 %v5844, %v5862
        %5864 = vmatmul.bf16.gmra.mxu0 %v1033
        %v5865 = vpop.f32.mrf.mxu0
        %v5866 = vadd.f32 %v5847, %v5865
        %v5867 = vpop.f32.mrf.mxu0
        %v5868 = vadd.f32 %v5849, %v5867
        %5869 = vdwg.mxu0
        %5870 = vmatpush.bf16.msra.mxu0 %v4695
        %5871 = vmatpush.bf16.msra.mxu0 %v4689
        %5872 = vmatpush.bf16.msra.mxu0 %v4683
        %5873 = vmatpush.bf16.msra.mxu0 %v4677
        %5874 = vmatpush.bf16.msra.mxu0 %v4671
        %5875 = vmatpush.bf16.msra.mxu0 %v4665
        %5876 = vmatpush.bf16.msra.mxu0 %v4659
        %5877 = vmatpush.bf16.msra.mxu0 %v4653
        %5878 = vmatmul.bf16.gmra.mxu0 %v1018
        %v5879 = vpop.f32.mrf.mxu0
        %v5880 = vadd.f32 %v5861, %v5879
        %v5881 = vpop.f32.mrf.mxu0
        %v5882 = vadd.f32 %v5863, %v5881
        %5883 = vmatmul.bf16.gmra.mxu0 %v1034
        %v5884 = vpop.f32.mrf.mxu0
        %v5885 = vadd.f32 %v5866, %v5884
        %v5886 = vpop.f32.mrf.mxu0
        %v5887 = vadd.f32 %v5868, %v5886
        %5888 = vdwg.mxu0
        %5889 = vmatpush.bf16.msra.mxu0 %v4743
        %5890 = vmatpush.bf16.msra.mxu0 %v4737
        %5891 = vmatpush.bf16.msra.mxu0 %v4731
        %5892 = vmatpush.bf16.msra.mxu0 %v4725
        %5893 = vmatpush.bf16.msra.mxu0 %v4719
        %5894 = vmatpush.bf16.msra.mxu0 %v4713
        %5895 = vmatpush.bf16.msra.mxu0 %v4707
        %5896 = vmatpush.bf16.msra.mxu0 %v4701
        %5897 = vmatmul.bf16.gmra.mxu0 %v1019
        %v5898 = vpop.f32.mrf.mxu0
        %v5899 = vadd.f32 %v5880, %v5898
        %v5900 = vpop.f32.mrf.mxu0
        %v5901 = vadd.f32 %v5882, %v5900
        %5902 = vmatmul.bf16.gmra.mxu0 %v1035
        %v5903 = vpop.f32.mrf.mxu0
        %v5904 = vadd.f32 %v5885, %v5903
        %v5905 = vpop.f32.mrf.mxu0
        %v5906 = vadd.f32 %v5887, %v5905
        %5907 = vdwg.mxu0
        %5908 = vmatpush.bf16.msra.mxu0 %v4791
        %5909 = vmatpush.bf16.msra.mxu0 %v4785
        %5910 = vmatpush.bf16.msra.mxu0 %v4779
        %5911 = vmatpush.bf16.msra.mxu0 %v4773
        %5912 = vmatpush.bf16.msra.mxu0 %v4767
        %5913 = vmatpush.bf16.msra.mxu0 %v4761
        %5914 = vmatpush.bf16.msra.mxu0 %v4755
        %5915 = vmatpush.bf16.msra.mxu0 %v4749
        %5916 = vmatmul.bf16.gmra.mxu0 %v1020
        %v5917 = vpop.f32.mrf.mxu0
        %v5918 = vadd.f32 %v5899, %v5917
        %v5919 = vpop.f32.mrf.mxu0
        %v5920 = vadd.f32 %v5901, %v5919
        %5921 = vmatmul.bf16.gmra.mxu0 %v1036
        %v5922 = vpop.f32.mrf.mxu0
        %v5923 = vadd.f32 %v5904, %v5922
        %v5924 = vpop.f32.mrf.mxu0
        %v5925 = vadd.f32 %v5906, %v5924
        %5926 = vdwg.mxu0
        %5927 = vmatpush.bf16.msra.mxu0 %v4839
        %5928 = vmatpush.bf16.msra.mxu0 %v4833
        %5929 = vmatpush.bf16.msra.mxu0 %v4827
        %5930 = vmatpush.bf16.msra.mxu0 %v4821
        %5931 = vmatpush.bf16.msra.mxu0 %v4815
        %5932 = vmatpush.bf16.msra.mxu0 %v4809
        %5933 = vmatpush.bf16.msra.mxu0 %v4803
        %5934 = vmatpush.bf16.msra.mxu0 %v4797
        %5935 = vmatmul.bf16.gmra.mxu0 %v1021
        %v5936 = vpop.f32.mrf.mxu0
        %v5937 = vadd.f32 %v5918, %v5936
        %v5938 = vpop.f32.mrf.mxu0
        %v5939 = vadd.f32 %v5920, %v5938
        %5940 = vmatmul.bf16.gmra.mxu0 %v1037
        %v5941 = vpop.f32.mrf.mxu0
        %v5942 = vadd.f32 %v5923, %v5941
        %v5943 = vpop.f32.mrf.mxu0
        %v5944 = vadd.f32 %v5925, %v5943
        %5945 = vdwg.mxu0
        %5946 = vmatpush.bf16.msra.mxu0 %v4887
        %5947 = vmatpush.bf16.msra.mxu0 %v4881
        %5948 = vmatpush.bf16.msra.mxu0 %v4875
        %5949 = vmatpush.bf16.msra.mxu0 %v4869
        %5950 = vmatpush.bf16.msra.mxu0 %v4863
        %5951 = vmatpush.bf16.msra.mxu0 %v4857
        %5952 = vmatpush.bf16.msra.mxu0 %v4851
        %5953 = vmatpush.bf16.msra.mxu0 %v4845
        %5954 = vmatmul.bf16.gmra.mxu0 %v1022
        %v5955 = vpop.f32.mrf.mxu0
        %v5956 = vadd.f32 %v5937, %v5955
        %v5957 = vpop.f32.mrf.mxu0
        %v5958 = vadd.f32 %v5939, %v5957
        %5959 = vmatmul.bf16.gmra.mxu0 %v1038
        %v5960 = vpop.f32.mrf.mxu0
        %v5961 = vadd.f32 %v5942, %v5960
        %v5962 = vpop.f32.mrf.mxu0
        %v5963 = vadd.f32 %v5944, %v5962
        %5964 = vdwg.mxu0
        %5965 = vmatpush.bf16.msra.mxu0 %v4168
        %5966 = vmatpush.bf16.msra.mxu0 %v4162
        %5967 = vmatpush.bf16.msra.mxu0 %v4156
        %5968 = vmatpush.bf16.msra.mxu0 %v4150
        %5969 = vmatpush.bf16.msra.mxu0 %v4144
        %5970 = vmatpush.bf16.msra.mxu0 %v4138
        %5971 = vmatpush.bf16.msra.mxu0 %v4132
        %5972 = vmatpush.bf16.msra.mxu0 %v4126
        %5973 = vmatmul.bf16.gmra.mxu0 %v1007
        %v5974 = vpop.f32.mrf.mxu0
        %v5975 = vadd.f32 %v1810, %v5974
        %v5976 = vpop.f32.mrf.mxu0
        %v5977 = vadd.f32 %v1810, %v5976
        %5978 = vmatmul.bf16.gmra.mxu0 %v1023
        %v5979 = vpop.f32.mrf.mxu0
        %v5980 = vadd.f32 %v1810, %v5979
        %v5981 = vpop.f32.mrf.mxu0
        %v5982 = vadd.f32 %v1810, %v5981
        %5983 = vdwg.mxu0
        %5984 = vmatpush.bf16.msra.mxu0 %v4216
        %5985 = vmatpush.bf16.msra.mxu0 %v4210
        %5986 = vmatpush.bf16.msra.mxu0 %v4204
        %5987 = vmatpush.bf16.msra.mxu0 %v4198
        %5988 = vmatpush.bf16.msra.mxu0 %v4192
        %5989 = vmatpush.bf16.msra.mxu0 %v4186
        %5990 = vmatpush.bf16.msra.mxu0 %v4180
        %5991 = vmatpush.bf16.msra.mxu0 %v4174
        %5992 = vmatmul.bf16.gmra.mxu0 %v1008
        %v5993 = vpop.f32.mrf.mxu0
        %v5994 = vadd.f32 %v5975, %v5993
        %v5995 = vpop.f32.mrf.mxu0
        %v5996 = vadd.f32 %v5977, %v5995
        %5997 = vmatmul.bf16.gmra.mxu0 %v1024
        %v5998 = vpop.f32.mrf.mxu0
        %v5999 = vadd.f32 %v5980, %v5998
        %v6000 = vpop.f32.mrf.mxu0
        %v6001 = vadd.f32 %v5982, %v6000
        %6002 = vdwg.mxu0
        %6003 = vmatpush.bf16.msra.mxu0 %v4264
        %6004 = vmatpush.bf16.msra.mxu0 %v4258
        %6005 = vmatpush.bf16.msra.mxu0 %v4252
        %6006 = vmatpush.bf16.msra.mxu0 %v4246
        %6007 = vmatpush.bf16.msra.mxu0 %v4240
        %6008 = vmatpush.bf16.msra.mxu0 %v4234
        %6009 = vmatpush.bf16.msra.mxu0 %v4228
        %6010 = vmatpush.bf16.msra.mxu0 %v4222
        %6011 = vmatmul.bf16.gmra.mxu0 %v1009
        %v6012 = vpop.f32.mrf.mxu0
        %v6013 = vadd.f32 %v5994, %v6012
        %v6014 = vpop.f32.mrf.mxu0
        %v6015 = vadd.f32 %v5996, %v6014
        %6016 = vmatmul.bf16.gmra.mxu0 %v1025
        %v6017 = vpop.f32.mrf.mxu0
        %v6018 = vadd.f32 %v5999, %v6017
        %v6019 = vpop.f32.mrf.mxu0
        %v6020 = vadd.f32 %v6001, %v6019
        %6021 = vdwg.mxu0
        %6022 = vmatpush.bf16.msra.mxu0 %v4312
        %6023 = vmatpush.bf16.msra.mxu0 %v4306
        %6024 = vmatpush.bf16.msra.mxu0 %v4300
        %6025 = vmatpush.bf16.msra.mxu0 %v4294
        %6026 = vmatpush.bf16.msra.mxu0 %v4288
        %6027 = vmatpush.bf16.msra.mxu0 %v4282
        %6028 = vmatpush.bf16.msra.mxu0 %v4276
        %6029 = vmatpush.bf16.msra.mxu0 %v4270
        %6030 = vmatmul.bf16.gmra.mxu0 %v1010
        %v6031 = vpop.f32.mrf.mxu0
        %v6032 = vadd.f32 %v6013, %v6031
        %v6033 = vpop.f32.mrf.mxu0
        %v6034 = vadd.f32 %v6015, %v6033
        %6035 = vmatmul.bf16.gmra.mxu0 %v1026
        %v6036 = vpop.f32.mrf.mxu0
        %v6037 = vadd.f32 %v6018, %v6036
        %v6038 = vpop.f32.mrf.mxu0
        %v6039 = vadd.f32 %v6020, %v6038
        %6040 = vdwg.mxu0
        %6041 = vmatpush.bf16.msra.mxu0 %v4360
        %6042 = vmatpush.bf16.msra.mxu0 %v4354
        %6043 = vmatpush.bf16.msra.mxu0 %v4348
        %6044 = vmatpush.bf16.msra.mxu0 %v4342
        %6045 = vmatpush.bf16.msra.mxu0 %v4336
        %6046 = vmatpush.bf16.msra.mxu0 %v4330
        %6047 = vmatpush.bf16.msra.mxu0 %v4324
        %6048 = vmatpush.bf16.msra.mxu0 %v4318
        %6049 = vmatmul.bf16.gmra.mxu0 %v1011
        %v6050 = vpop.f32.mrf.mxu0
        %v6051 = vadd.f32 %v6032, %v6050
        %v6052 = vpop.f32.mrf.mxu0
        %v6053 = vadd.f32 %v6034, %v6052
        %6054 = vmatmul.bf16.gmra.mxu0 %v1027
        %v6055 = vpop.f32.mrf.mxu0
        %v6056 = vadd.f32 %v6037, %v6055
        %v6057 = vpop.f32.mrf.mxu0
        %v6058 = vadd.f32 %v6039, %v6057
        %6059 = vdwg.mxu0
        %6060 = vmatpush.bf16.msra.mxu0 %v4408
        %6061 = vmatpush.bf16.msra.mxu0 %v4402
        %6062 = vmatpush.bf16.msra.mxu0 %v4396
        %6063 = vmatpush.bf16.msra.mxu0 %v4390
        %6064 = vmatpush.bf16.msra.mxu0 %v4384
        %6065 = vmatpush.bf16.msra.mxu0 %v4378
        %6066 = vmatpush.bf16.msra.mxu0 %v4372
        %6067 = vmatpush.bf16.msra.mxu0 %v4366
        %6068 = vmatmul.bf16.gmra.mxu0 %v1012
        %v6069 = vpop.f32.mrf.mxu0
        %v6070 = vadd.f32 %v6051, %v6069
        %v6071 = vpop.f32.mrf.mxu0
        %v6072 = vadd.f32 %v6053, %v6071
        %6073 = vmatmul.bf16.gmra.mxu0 %v1028
        %v6074 = vpop.f32.mrf.mxu0
        %v6075 = vadd.f32 %v6056, %v6074
        %v6076 = vpop.f32.mrf.mxu0
        %v6077 = vadd.f32 %v6058, %v6076
        %6078 = vdwg.mxu0
        %6079 = vmatpush.bf16.msra.mxu0 %v4456
        %6080 = vmatpush.bf16.msra.mxu0 %v4450
        %6081 = vmatpush.bf16.msra.mxu0 %v4444
        %6082 = vmatpush.bf16.msra.mxu0 %v4438
        %6083 = vmatpush.bf16.msra.mxu0 %v4432
        %6084 = vmatpush.bf16.msra.mxu0 %v4426
        %6085 = vmatpush.bf16.msra.mxu0 %v4420
        %6086 = vmatpush.bf16.msra.mxu0 %v4414
        %6087 = vmatmul.bf16.gmra.mxu0 %v1013
        %v6088 = vpop.f32.mrf.mxu0
        %v6089 = vadd.f32 %v6070, %v6088
        %v6090 = vpop.f32.mrf.mxu0
        %v6091 = vadd.f32 %v6072, %v6090
        %6092 = vmatmul.bf16.gmra.mxu0 %v1029
        %v6093 = vpop.f32.mrf.mxu0
        %v6094 = vadd.f32 %v6075, %v6093
        %v6095 = vpop.f32.mrf.mxu0
        %v6096 = vadd.f32 %v6077, %v6095
        %6097 = vdwg.mxu0
        %6098 = vmatpush.bf16.msra.mxu0 %v4504
        %6099 = vmatpush.bf16.msra.mxu0 %v4498
        %6100 = vmatpush.bf16.msra.mxu0 %v4492
        %6101 = vmatpush.bf16.msra.mxu0 %v4486
        %6102 = vmatpush.bf16.msra.mxu0 %v4480
        %6103 = vmatpush.bf16.msra.mxu0 %v4474
        %6104 = vmatpush.bf16.msra.mxu0 %v4468
        %6105 = vmatpush.bf16.msra.mxu0 %v4462
        %6106 = vmatmul.bf16.gmra.mxu0 %v1014
        %v6107 = vpop.f32.mrf.mxu0
        %v6108 = vadd.f32 %v6089, %v6107
        %v6109 = vpop.f32.mrf.mxu0
        %v6110 = vadd.f32 %v6091, %v6109
        %6111 = vmatmul.bf16.gmra.mxu0 %v1030
        %v6112 = vpop.f32.mrf.mxu0
        %v6113 = vadd.f32 %v6094, %v6112
        %v6114 = vpop.f32.mrf.mxu0
        %v6115 = vadd.f32 %v6096, %v6114
        %6116 = vdwg.mxu0
        %6117 = vmatpush.bf16.msra.mxu0 %v4552
        %6118 = vmatpush.bf16.msra.mxu0 %v4546
        %6119 = vmatpush.bf16.msra.mxu0 %v4540
        %6120 = vmatpush.bf16.msra.mxu0 %v4534
        %6121 = vmatpush.bf16.msra.mxu0 %v4528
        %6122 = vmatpush.bf16.msra.mxu0 %v4522
        %6123 = vmatpush.bf16.msra.mxu0 %v4516
        %6124 = vmatpush.bf16.msra.mxu0 %v4510
        %6125 = vmatmul.bf16.gmra.mxu0 %v1015
        %v6126 = vpop.f32.mrf.mxu0
        %v6127 = vadd.f32 %v6108, %v6126
        %v6128 = vpop.f32.mrf.mxu0
        %v6129 = vadd.f32 %v6110, %v6128
        %6130 = vmatmul.bf16.gmra.mxu0 %v1031
        %v6131 = vpop.f32.mrf.mxu0
        %v6132 = vadd.f32 %v6113, %v6131
        %v6133 = vpop.f32.mrf.mxu0
        %v6134 = vadd.f32 %v6115, %v6133
        %6135 = vdwg.mxu0
        %6136 = vmatpush.bf16.msra.mxu0 %v4600
        %6137 = vmatpush.bf16.msra.mxu0 %v4594
        %6138 = vmatpush.bf16.msra.mxu0 %v4588
        %6139 = vmatpush.bf16.msra.mxu0 %v4582
        %6140 = vmatpush.bf16.msra.mxu0 %v4576
        %6141 = vmatpush.bf16.msra.mxu0 %v4570
        %6142 = vmatpush.bf16.msra.mxu0 %v4564
        %6143 = vmatpush.bf16.msra.mxu0 %v4558
        %6144 = vmatmul.bf16.gmra.mxu0 %v1016
        %v6145 = vpop.f32.mrf.mxu0
        %v6146 = vadd.f32 %v6127, %v6145
        %v6147 = vpop.f32.mrf.mxu0
        %v6148 = vadd.f32 %v6129, %v6147
        %6149 = vmatmul.bf16.gmra.mxu0 %v1032
        %v6150 = vpop.f32.mrf.mxu0
        %v6151 = vadd.f32 %v6132, %v6150
        %v6152 = vpop.f32.mrf.mxu0
        %v6153 = vadd.f32 %v6134, %v6152
        %6154 = vdwg.mxu0
        %6155 = vmatpush.bf16.msra.mxu0 %v4648
        %6156 = vmatpush.bf16.msra.mxu0 %v4642
        %6157 = vmatpush.bf16.msra.mxu0 %v4636
        %6158 = vmatpush.bf16.msra.mxu0 %v4630
        %6159 = vmatpush.bf16.msra.mxu0 %v4624
        %6160 = vmatpush.bf16.msra.mxu0 %v4618
        %6161 = vmatpush.bf16.msra.mxu0 %v4612
        %6162 = vmatpush.bf16.msra.mxu0 %v4606
        %6163 = vmatmul.bf16.gmra.mxu0 %v1017
        %v6164 = vpop.f32.mrf.mxu0
        %v6165 = vadd.f32 %v6146, %v6164
        %v6166 = vpop.f32.mrf.mxu0
        %v6167 = vadd.f32 %v6148, %v6166
        %6168 = vmatmul.bf16.gmra.mxu0 %v1033
        %v6169 = vpop.f32.mrf.mxu0
        %v6170 = vadd.f32 %v6151, %v6169
        %v6171 = vpop.f32.mrf.mxu0
        %v6172 = vadd.f32 %v6153, %v6171
        %6173 = vdwg.mxu0
        %6174 = vmatpush.bf16.msra.mxu0 %v4696
        %6175 = vmatpush.bf16.msra.mxu0 %v4690
        %6176 = vmatpush.bf16.msra.mxu0 %v4684
        %6177 = vmatpush.bf16.msra.mxu0 %v4678
        %6178 = vmatpush.bf16.msra.mxu0 %v4672
        %6179 = vmatpush.bf16.msra.mxu0 %v4666
        %6180 = vmatpush.bf16.msra.mxu0 %v4660
        %6181 = vmatpush.bf16.msra.mxu0 %v4654
        %6182 = vmatmul.bf16.gmra.mxu0 %v1018
        %v6183 = vpop.f32.mrf.mxu0
        %v6184 = vadd.f32 %v6165, %v6183
        %v6185 = vpop.f32.mrf.mxu0
        %v6186 = vadd.f32 %v6167, %v6185
        %6187 = vmatmul.bf16.gmra.mxu0 %v1034
        %v6188 = vpop.f32.mrf.mxu0
        %v6189 = vadd.f32 %v6170, %v6188
        %v6190 = vpop.f32.mrf.mxu0
        %v6191 = vadd.f32 %v6172, %v6190
        %6192 = vdwg.mxu0
        %6193 = vmatpush.bf16.msra.mxu0 %v4744
        %6194 = vmatpush.bf16.msra.mxu0 %v4738
        %6195 = vmatpush.bf16.msra.mxu0 %v4732
        %6196 = vmatpush.bf16.msra.mxu0 %v4726
        %6197 = vmatpush.bf16.msra.mxu0 %v4720
        %6198 = vmatpush.bf16.msra.mxu0 %v4714
        %6199 = vmatpush.bf16.msra.mxu0 %v4708
        %6200 = vmatpush.bf16.msra.mxu0 %v4702
        %6201 = vmatmul.bf16.gmra.mxu0 %v1019
        %v6202 = vpop.f32.mrf.mxu0
        %v6203 = vadd.f32 %v6184, %v6202
        %v6204 = vpop.f32.mrf.mxu0
        %v6205 = vadd.f32 %v6186, %v6204
        %6206 = vmatmul.bf16.gmra.mxu0 %v1035
        %v6207 = vpop.f32.mrf.mxu0
        %v6208 = vadd.f32 %v6189, %v6207
        %v6209 = vpop.f32.mrf.mxu0
        %v6210 = vadd.f32 %v6191, %v6209
        %6211 = vdwg.mxu0
        %6212 = vmatpush.bf16.msra.mxu0 %v4792
        %6213 = vmatpush.bf16.msra.mxu0 %v4786
        %6214 = vmatpush.bf16.msra.mxu0 %v4780
        %6215 = vmatpush.bf16.msra.mxu0 %v4774
        %6216 = vmatpush.bf16.msra.mxu0 %v4768
        %6217 = vmatpush.bf16.msra.mxu0 %v4762
        %6218 = vmatpush.bf16.msra.mxu0 %v4756
        %6219 = vmatpush.bf16.msra.mxu0 %v4750
        %6220 = vmatmul.bf16.gmra.mxu0 %v1020
        %v6221 = vpop.f32.mrf.mxu0
        %v6222 = vadd.f32 %v6203, %v6221
        %v6223 = vpop.f32.mrf.mxu0
        %v6224 = vadd.f32 %v6205, %v6223
        %6225 = vmatmul.bf16.gmra.mxu0 %v1036
        %v6226 = vpop.f32.mrf.mxu0
        %v6227 = vadd.f32 %v6208, %v6226
        %v6228 = vpop.f32.mrf.mxu0
        %v6229 = vadd.f32 %v6210, %v6228
        %6230 = vdwg.mxu0
        %6231 = vmatpush.bf16.msra.mxu0 %v4840
        %6232 = vmatpush.bf16.msra.mxu0 %v4834
        %6233 = vmatpush.bf16.msra.mxu0 %v4828
        %6234 = vmatpush.bf16.msra.mxu0 %v4822
        %6235 = vmatpush.bf16.msra.mxu0 %v4816
        %6236 = vmatpush.bf16.msra.mxu0 %v4810
        %6237 = vmatpush.bf16.msra.mxu0 %v4804
        %6238 = vmatpush.bf16.msra.mxu0 %v4798
        %6239 = vmatmul.bf16.gmra.mxu0 %v1021
        %v6240 = vpop.f32.mrf.mxu0
        %v6241 = vadd.f32 %v6222, %v6240
        %v6242 = vpop.f32.mrf.mxu0
        %v6243 = vadd.f32 %v6224, %v6242
        %6244 = vmatmul.bf16.gmra.mxu0 %v1037
        %v6245 = vpop.f32.mrf.mxu0
        %v6246 = vadd.f32 %v6227, %v6245
        %v6247 = vpop.f32.mrf.mxu0
        %v6248 = vadd.f32 %v6229, %v6247
        %6249 = vdwg.mxu0
        %6250 = vmatpush.bf16.msra.mxu0 %v4888
        %6251 = vmatpush.bf16.msra.mxu0 %v4882
        %6252 = vmatpush.bf16.msra.mxu0 %v4876
        %6253 = vmatpush.bf16.msra.mxu0 %v4870
        %6254 = vmatpush.bf16.msra.mxu0 %v4864
        %6255 = vmatpush.bf16.msra.mxu0 %v4858
        %6256 = vmatpush.bf16.msra.mxu0 %v4852
        %6257 = vmatpush.bf16.msra.mxu0 %v4846
        %6258 = vmatmul.bf16.gmra.mxu0 %v1022
        %v6259 = vpop.f32.mrf.mxu0
        %v6260 = vadd.f32 %v6241, %v6259
        %v6261 = vpop.f32.mrf.mxu0
        %v6262 = vadd.f32 %v6243, %v6261
        %6263 = vmatmul.bf16.gmra.mxu0 %v1038
        %v6264 = vpop.f32.mrf.mxu0
        %v6265 = vadd.f32 %v6246, %v6264
        %v6266 = vpop.f32.mrf.mxu0
        %v6267 = vadd.f32 %v6248, %v6266
        %6268 = vdwg.mxu0
        %6269 = vmatpush.bf16.msra.mxu0 %v4169
        %6270 = vmatpush.bf16.msra.mxu0 %v4163
        %6271 = vmatpush.bf16.msra.mxu0 %v4157
        %6272 = vmatpush.bf16.msra.mxu0 %v4151
        %6273 = vmatpush.bf16.msra.mxu0 %v4145
        %6274 = vmatpush.bf16.msra.mxu0 %v4139
        %6275 = vmatpush.bf16.msra.mxu0 %v4133
        %6276 = vmatpush.bf16.msra.mxu0 %v4127
        %6277 = vmatmul.bf16.gmra.mxu0 %v1007
        %v6278 = vpop.f32.mrf.mxu0
        %v6279 = vadd.f32 %v1811, %v6278
        %v6280 = vpop.f32.mrf.mxu0
        %v6281 = vadd.f32 %v1811, %v6280
        %6282 = vmatmul.bf16.gmra.mxu0 %v1023
        %v6283 = vpop.f32.mrf.mxu0
        %v6284 = vadd.f32 %v1811, %v6283
        %v6285 = vpop.f32.mrf.mxu0
        %v6286 = vadd.f32 %v1811, %v6285
        %6287 = vdwg.mxu0
        %6288 = vmatpush.bf16.msra.mxu0 %v4217
        %6289 = vmatpush.bf16.msra.mxu0 %v4211
        %6290 = vmatpush.bf16.msra.mxu0 %v4205
        %6291 = vmatpush.bf16.msra.mxu0 %v4199
        %6292 = vmatpush.bf16.msra.mxu0 %v4193
        %6293 = vmatpush.bf16.msra.mxu0 %v4187
        %6294 = vmatpush.bf16.msra.mxu0 %v4181
        %6295 = vmatpush.bf16.msra.mxu0 %v4175
        %6296 = vmatmul.bf16.gmra.mxu0 %v1008
        %v6297 = vpop.f32.mrf.mxu0
        %v6298 = vadd.f32 %v6279, %v6297
        %v6299 = vpop.f32.mrf.mxu0
        %v6300 = vadd.f32 %v6281, %v6299
        %6301 = vmatmul.bf16.gmra.mxu0 %v1024
        %v6302 = vpop.f32.mrf.mxu0
        %v6303 = vadd.f32 %v6284, %v6302
        %v6304 = vpop.f32.mrf.mxu0
        %v6305 = vadd.f32 %v6286, %v6304
        %6306 = vdwg.mxu0
        %6307 = vmatpush.bf16.msra.mxu0 %v4265
        %6308 = vmatpush.bf16.msra.mxu0 %v4259
        %6309 = vmatpush.bf16.msra.mxu0 %v4253
        %6310 = vmatpush.bf16.msra.mxu0 %v4247
        %6311 = vmatpush.bf16.msra.mxu0 %v4241
        %6312 = vmatpush.bf16.msra.mxu0 %v4235
        %6313 = vmatpush.bf16.msra.mxu0 %v4229
        %6314 = vmatpush.bf16.msra.mxu0 %v4223
        %6315 = vmatmul.bf16.gmra.mxu0 %v1009
        %v6316 = vpop.f32.mrf.mxu0
        %v6317 = vadd.f32 %v6298, %v6316
        %v6318 = vpop.f32.mrf.mxu0
        %v6319 = vadd.f32 %v6300, %v6318
        %6320 = vmatmul.bf16.gmra.mxu0 %v1025
        %v6321 = vpop.f32.mrf.mxu0
        %v6322 = vadd.f32 %v6303, %v6321
        %v6323 = vpop.f32.mrf.mxu0
        %v6324 = vadd.f32 %v6305, %v6323
        %6325 = vdwg.mxu0
        %6326 = vmatpush.bf16.msra.mxu0 %v4313
        %6327 = vmatpush.bf16.msra.mxu0 %v4307
        %6328 = vmatpush.bf16.msra.mxu0 %v4301
        %6329 = vmatpush.bf16.msra.mxu0 %v4295
        %6330 = vmatpush.bf16.msra.mxu0 %v4289
        %6331 = vmatpush.bf16.msra.mxu0 %v4283
        %6332 = vmatpush.bf16.msra.mxu0 %v4277
        %6333 = vmatpush.bf16.msra.mxu0 %v4271
        %6334 = vmatmul.bf16.gmra.mxu0 %v1010
        %v6335 = vpop.f32.mrf.mxu0
        %v6336 = vadd.f32 %v6317, %v6335
        %v6337 = vpop.f32.mrf.mxu0
        %v6338 = vadd.f32 %v6319, %v6337
        %6339 = vmatmul.bf16.gmra.mxu0 %v1026
        %v6340 = vpop.f32.mrf.mxu0
        %v6341 = vadd.f32 %v6322, %v6340
        %v6342 = vpop.f32.mrf.mxu0
        %v6343 = vadd.f32 %v6324, %v6342
        %6344 = vdwg.mxu0
        %6345 = vmatpush.bf16.msra.mxu0 %v4361
        %6346 = vmatpush.bf16.msra.mxu0 %v4355
        %6347 = vmatpush.bf16.msra.mxu0 %v4349
        %6348 = vmatpush.bf16.msra.mxu0 %v4343
        %6349 = vmatpush.bf16.msra.mxu0 %v4337
        %6350 = vmatpush.bf16.msra.mxu0 %v4331
        %6351 = vmatpush.bf16.msra.mxu0 %v4325
        %6352 = vmatpush.bf16.msra.mxu0 %v4319
        %6353 = vmatmul.bf16.gmra.mxu0 %v1011
        %v6354 = vpop.f32.mrf.mxu0
        %v6355 = vadd.f32 %v6336, %v6354
        %v6356 = vpop.f32.mrf.mxu0
        %v6357 = vadd.f32 %v6338, %v6356
        %6358 = vmatmul.bf16.gmra.mxu0 %v1027
        %v6359 = vpop.f32.mrf.mxu0
        %v6360 = vadd.f32 %v6341, %v6359
        %v6361 = vpop.f32.mrf.mxu0
        %v6362 = vadd.f32 %v6343, %v6361
        %6363 = vdwg.mxu0
        %6364 = vmatpush.bf16.msra.mxu0 %v4409
        %6365 = vmatpush.bf16.msra.mxu0 %v4403
        %6366 = vmatpush.bf16.msra.mxu0 %v4397
        %6367 = vmatpush.bf16.msra.mxu0 %v4391
        %6368 = vmatpush.bf16.msra.mxu0 %v4385
        %6369 = vmatpush.bf16.msra.mxu0 %v4379
        %6370 = vmatpush.bf16.msra.mxu0 %v4373
        %6371 = vmatpush.bf16.msra.mxu0 %v4367
        %6372 = vmatmul.bf16.gmra.mxu0 %v1012
        %v6373 = vpop.f32.mrf.mxu0
        %v6374 = vadd.f32 %v6355, %v6373
        %v6375 = vpop.f32.mrf.mxu0
        %v6376 = vadd.f32 %v6357, %v6375
        %6377 = vmatmul.bf16.gmra.mxu0 %v1028
        %v6378 = vpop.f32.mrf.mxu0
        %v6379 = vadd.f32 %v6360, %v6378
        %v6380 = vpop.f32.mrf.mxu0
        %v6381 = vadd.f32 %v6362, %v6380
        %6382 = vdwg.mxu0
        %6383 = vmatpush.bf16.msra.mxu0 %v4457
        %6384 = vmatpush.bf16.msra.mxu0 %v4451
        %6385 = vmatpush.bf16.msra.mxu0 %v4445
        %6386 = vmatpush.bf16.msra.mxu0 %v4439
        %6387 = vmatpush.bf16.msra.mxu0 %v4433
        %6388 = vmatpush.bf16.msra.mxu0 %v4427
        %6389 = vmatpush.bf16.msra.mxu0 %v4421
        %6390 = vmatpush.bf16.msra.mxu0 %v4415
        %6391 = vmatmul.bf16.gmra.mxu0 %v1013
        %v6392 = vpop.f32.mrf.mxu0
        %v6393 = vadd.f32 %v6374, %v6392
        %v6394 = vpop.f32.mrf.mxu0
        %v6395 = vadd.f32 %v6376, %v6394
        %6396 = vmatmul.bf16.gmra.mxu0 %v1029
        %v6397 = vpop.f32.mrf.mxu0
        %v6398 = vadd.f32 %v6379, %v6397
        %v6399 = vpop.f32.mrf.mxu0
        %v6400 = vadd.f32 %v6381, %v6399
        %6401 = vdwg.mxu0
        %6402 = vmatpush.bf16.msra.mxu0 %v4505
        %6403 = vmatpush.bf16.msra.mxu0 %v4499
        %6404 = vmatpush.bf16.msra.mxu0 %v4493
        %6405 = vmatpush.bf16.msra.mxu0 %v4487
        %6406 = vmatpush.bf16.msra.mxu0 %v4481
        %6407 = vmatpush.bf16.msra.mxu0 %v4475
        %6408 = vmatpush.bf16.msra.mxu0 %v4469
        %6409 = vmatpush.bf16.msra.mxu0 %v4463
        %6410 = vmatmul.bf16.gmra.mxu0 %v1014
        %v6411 = vpop.f32.mrf.mxu0
        %v6412 = vadd.f32 %v6393, %v6411
        %v6413 = vpop.f32.mrf.mxu0
        %v6414 = vadd.f32 %v6395, %v6413
        %6415 = vmatmul.bf16.gmra.mxu0 %v1030
        %v6416 = vpop.f32.mrf.mxu0
        %v6417 = vadd.f32 %v6398, %v6416
        %v6418 = vpop.f32.mrf.mxu0
        %v6419 = vadd.f32 %v6400, %v6418
        %6420 = vdwg.mxu0
        %6421 = vmatpush.bf16.msra.mxu0 %v4553
        %6422 = vmatpush.bf16.msra.mxu0 %v4547
        %6423 = vmatpush.bf16.msra.mxu0 %v4541
        %6424 = vmatpush.bf16.msra.mxu0 %v4535
        %6425 = vmatpush.bf16.msra.mxu0 %v4529
        %6426 = vmatpush.bf16.msra.mxu0 %v4523
        %6427 = vmatpush.bf16.msra.mxu0 %v4517
        %6428 = vmatpush.bf16.msra.mxu0 %v4511
        %6429 = vmatmul.bf16.gmra.mxu0 %v1015
        %v6430 = vpop.f32.mrf.mxu0
        %v6431 = vadd.f32 %v6412, %v6430
        %v6432 = vpop.f32.mrf.mxu0
        %v6433 = vadd.f32 %v6414, %v6432
        %6434 = vmatmul.bf16.gmra.mxu0 %v1031
        %v6435 = vpop.f32.mrf.mxu0
        %v6436 = vadd.f32 %v6417, %v6435
        %v6437 = vpop.f32.mrf.mxu0
        %v6438 = vadd.f32 %v6419, %v6437
        %6439 = vdwg.mxu0
        %6440 = vmatpush.bf16.msra.mxu0 %v4601
        %6441 = vmatpush.bf16.msra.mxu0 %v4595
        %6442 = vmatpush.bf16.msra.mxu0 %v4589
        %6443 = vmatpush.bf16.msra.mxu0 %v4583
        %6444 = vmatpush.bf16.msra.mxu0 %v4577
        %6445 = vmatpush.bf16.msra.mxu0 %v4571
        %6446 = vmatpush.bf16.msra.mxu0 %v4565
        %6447 = vmatpush.bf16.msra.mxu0 %v4559
        %6448 = vmatmul.bf16.gmra.mxu0 %v1016
        %v6449 = vpop.f32.mrf.mxu0
        %v6450 = vadd.f32 %v6431, %v6449
        %v6451 = vpop.f32.mrf.mxu0
        %v6452 = vadd.f32 %v6433, %v6451
        %6453 = vmatmul.bf16.gmra.mxu0 %v1032
        %v6454 = vpop.f32.mrf.mxu0
        %v6455 = vadd.f32 %v6436, %v6454
        %v6456 = vpop.f32.mrf.mxu0
        %v6457 = vadd.f32 %v6438, %v6456
        %6458 = vdwg.mxu0
        %6459 = vmatpush.bf16.msra.mxu0 %v4649
        %6460 = vmatpush.bf16.msra.mxu0 %v4643
        %6461 = vmatpush.bf16.msra.mxu0 %v4637
        %6462 = vmatpush.bf16.msra.mxu0 %v4631
        %6463 = vmatpush.bf16.msra.mxu0 %v4625
        %6464 = vmatpush.bf16.msra.mxu0 %v4619
        %6465 = vmatpush.bf16.msra.mxu0 %v4613
        %6466 = vmatpush.bf16.msra.mxu0 %v4607
        %6467 = vmatmul.bf16.gmra.mxu0 %v1017
        %v6468 = vpop.f32.mrf.mxu0
        %v6469 = vadd.f32 %v6450, %v6468
        %v6470 = vpop.f32.mrf.mxu0
        %v6471 = vadd.f32 %v6452, %v6470
        %6472 = vmatmul.bf16.gmra.mxu0 %v1033
        %v6473 = vpop.f32.mrf.mxu0
        %v6474 = vadd.f32 %v6455, %v6473
        %v6475 = vpop.f32.mrf.mxu0
        %v6476 = vadd.f32 %v6457, %v6475
        %6477 = vdwg.mxu0
        %6478 = vmatpush.bf16.msra.mxu0 %v4697
        %6479 = vmatpush.bf16.msra.mxu0 %v4691
        %6480 = vmatpush.bf16.msra.mxu0 %v4685
        %6481 = vmatpush.bf16.msra.mxu0 %v4679
        %6482 = vmatpush.bf16.msra.mxu0 %v4673
        %6483 = vmatpush.bf16.msra.mxu0 %v4667
        %6484 = vmatpush.bf16.msra.mxu0 %v4661
        %6485 = vmatpush.bf16.msra.mxu0 %v4655
        %6486 = vmatmul.bf16.gmra.mxu0 %v1018
        %v6487 = vpop.f32.mrf.mxu0
        %v6488 = vadd.f32 %v6469, %v6487
        %v6489 = vpop.f32.mrf.mxu0
        %v6490 = vadd.f32 %v6471, %v6489
        %6491 = vmatmul.bf16.gmra.mxu0 %v1034
        %v6492 = vpop.f32.mrf.mxu0
        %v6493 = vadd.f32 %v6474, %v6492
        %v6494 = vpop.f32.mrf.mxu0
        %v6495 = vadd.f32 %v6476, %v6494
        %6496 = vdwg.mxu0
        %6497 = vmatpush.bf16.msra.mxu0 %v4745
        %6498 = vmatpush.bf16.msra.mxu0 %v4739
        %6499 = vmatpush.bf16.msra.mxu0 %v4733
        %6500 = vmatpush.bf16.msra.mxu0 %v4727
        %6501 = vmatpush.bf16.msra.mxu0 %v4721
        %6502 = vmatpush.bf16.msra.mxu0 %v4715
        %6503 = vmatpush.bf16.msra.mxu0 %v4709
        %6504 = vmatpush.bf16.msra.mxu0 %v4703
        %6505 = vmatmul.bf16.gmra.mxu0 %v1019
        %v6506 = vpop.f32.mrf.mxu0
        %v6507 = vadd.f32 %v6488, %v6506
        %v6508 = vpop.f32.mrf.mxu0
        %v6509 = vadd.f32 %v6490, %v6508
        %6510 = vmatmul.bf16.gmra.mxu0 %v1035
        %v6511 = vpop.f32.mrf.mxu0
        %v6512 = vadd.f32 %v6493, %v6511
        %v6513 = vpop.f32.mrf.mxu0
        %v6514 = vadd.f32 %v6495, %v6513
        %6515 = vdwg.mxu0
        %6516 = vmatpush.bf16.msra.mxu0 %v4793
        %6517 = vmatpush.bf16.msra.mxu0 %v4787
        %6518 = vmatpush.bf16.msra.mxu0 %v4781
        %6519 = vmatpush.bf16.msra.mxu0 %v4775
        %6520 = vmatpush.bf16.msra.mxu0 %v4769
        %6521 = vmatpush.bf16.msra.mxu0 %v4763
        %6522 = vmatpush.bf16.msra.mxu0 %v4757
        %6523 = vmatpush.bf16.msra.mxu0 %v4751
        %6524 = vmatmul.bf16.gmra.mxu0 %v1020
        %v6525 = vpop.f32.mrf.mxu0
        %v6526 = vadd.f32 %v6507, %v6525
        %v6527 = vpop.f32.mrf.mxu0
        %v6528 = vadd.f32 %v6509, %v6527
        %6529 = vmatmul.bf16.gmra.mxu0 %v1036
        %v6530 = vpop.f32.mrf.mxu0
        %v6531 = vadd.f32 %v6512, %v6530
        %v6532 = vpop.f32.mrf.mxu0
        %v6533 = vadd.f32 %v6514, %v6532
        %6534 = vdwg.mxu0
        %6535 = vmatpush.bf16.msra.mxu0 %v4841
        %6536 = vmatpush.bf16.msra.mxu0 %v4835
        %6537 = vmatpush.bf16.msra.mxu0 %v4829
        %6538 = vmatpush.bf16.msra.mxu0 %v4823
        %6539 = vmatpush.bf16.msra.mxu0 %v4817
        %6540 = vmatpush.bf16.msra.mxu0 %v4811
        %6541 = vmatpush.bf16.msra.mxu0 %v4805
        %6542 = vmatpush.bf16.msra.mxu0 %v4799
        %6543 = vmatmul.bf16.gmra.mxu0 %v1021
        %v6544 = vpop.f32.mrf.mxu0
        %v6545 = vadd.f32 %v6526, %v6544
        %v6546 = vpop.f32.mrf.mxu0
        %v6547 = vadd.f32 %v6528, %v6546
        %6548 = vmatmul.bf16.gmra.mxu0 %v1037
        %v6549 = vpop.f32.mrf.mxu0
        %v6550 = vadd.f32 %v6531, %v6549
        %v6551 = vpop.f32.mrf.mxu0
        %v6552 = vadd.f32 %v6533, %v6551
        %6553 = vdwg.mxu0
        %6554 = vmatpush.bf16.msra.mxu0 %v4889
        %6555 = vmatpush.bf16.msra.mxu0 %v4883
        %6556 = vmatpush.bf16.msra.mxu0 %v4877
        %6557 = vmatpush.bf16.msra.mxu0 %v4871
        %6558 = vmatpush.bf16.msra.mxu0 %v4865
        %6559 = vmatpush.bf16.msra.mxu0 %v4859
        %6560 = vmatpush.bf16.msra.mxu0 %v4853
        %6561 = vmatpush.bf16.msra.mxu0 %v4847
        %6562 = vmatmul.bf16.gmra.mxu0 %v1022
        %v6563 = vpop.f32.mrf.mxu0
        %v6564 = vadd.f32 %v6545, %v6563
        %v6565 = vpop.f32.mrf.mxu0
        %v6566 = vadd.f32 %v6547, %v6565
        %6567 = vmatmul.bf16.gmra.mxu0 %v1038
        %v6568 = vpop.f32.mrf.mxu0
        %v6569 = vadd.f32 %v6550, %v6568
        %v6570 = vpop.f32.mrf.mxu0
        %v6571 = vadd.f32 %v6552, %v6570
        %6572 = vdwg.mxu0
        %6573 = vmatpush.bf16.msra.mxu0 %v4170
        %6574 = vmatpush.bf16.msra.mxu0 %v4164
        %6575 = vmatpush.bf16.msra.mxu0 %v4158
        %6576 = vmatpush.bf16.msra.mxu0 %v4152
        %6577 = vmatpush.bf16.msra.mxu0 %v4146
        %6578 = vmatpush.bf16.msra.mxu0 %v4140
        %6579 = vmatpush.bf16.msra.mxu0 %v4134
        %6580 = vmatpush.bf16.msra.mxu0 %v4128
        %6581 = vmatmul.bf16.gmra.mxu0 %v1007
        %v6582 = vpop.f32.mrf.mxu0
        %v6583 = vadd.f32 %v1812, %v6582
        %v6584 = vpop.f32.mrf.mxu0
        %v6585 = vadd.f32 %v1812, %v6584
        %6586 = vmatmul.bf16.gmra.mxu0 %v1023
        %v6587 = vpop.f32.mrf.mxu0
        %v6588 = vadd.f32 %v1812, %v6587
        %v6589 = vpop.f32.mrf.mxu0
        %v6590 = vadd.f32 %v1812, %v6589
        %6591 = vdwg.mxu0
        %6592 = vmatpush.bf16.msra.mxu0 %v4218
        %6593 = vmatpush.bf16.msra.mxu0 %v4212
        %6594 = vmatpush.bf16.msra.mxu0 %v4206
        %6595 = vmatpush.bf16.msra.mxu0 %v4200
        %6596 = vmatpush.bf16.msra.mxu0 %v4194
        %6597 = vmatpush.bf16.msra.mxu0 %v4188
        %6598 = vmatpush.bf16.msra.mxu0 %v4182
        %6599 = vmatpush.bf16.msra.mxu0 %v4176
        %6600 = vmatmul.bf16.gmra.mxu0 %v1008
        %v6601 = vpop.f32.mrf.mxu0
        %v6602 = vadd.f32 %v6583, %v6601
        %v6603 = vpop.f32.mrf.mxu0
        %v6604 = vadd.f32 %v6585, %v6603
        %6605 = vmatmul.bf16.gmra.mxu0 %v1024
        %v6606 = vpop.f32.mrf.mxu0
        %v6607 = vadd.f32 %v6588, %v6606
        %v6608 = vpop.f32.mrf.mxu0
        %v6609 = vadd.f32 %v6590, %v6608
        %6610 = vdwg.mxu0
        %6611 = vmatpush.bf16.msra.mxu0 %v4266
        %6612 = vmatpush.bf16.msra.mxu0 %v4260
        %6613 = vmatpush.bf16.msra.mxu0 %v4254
        %6614 = vmatpush.bf16.msra.mxu0 %v4248
        %6615 = vmatpush.bf16.msra.mxu0 %v4242
        %6616 = vmatpush.bf16.msra.mxu0 %v4236
        %6617 = vmatpush.bf16.msra.mxu0 %v4230
        %6618 = vmatpush.bf16.msra.mxu0 %v4224
        %6619 = vmatmul.bf16.gmra.mxu0 %v1009
        %v6620 = vpop.f32.mrf.mxu0
        %v6621 = vadd.f32 %v6602, %v6620
        %v6622 = vpop.f32.mrf.mxu0
        %v6623 = vadd.f32 %v6604, %v6622
        %6624 = vmatmul.bf16.gmra.mxu0 %v1025
        %v6625 = vpop.f32.mrf.mxu0
        %v6626 = vadd.f32 %v6607, %v6625
        %v6627 = vpop.f32.mrf.mxu0
        %v6628 = vadd.f32 %v6609, %v6627
        %6629 = vdwg.mxu0
        %6630 = vmatpush.bf16.msra.mxu0 %v4314
        %6631 = vmatpush.bf16.msra.mxu0 %v4308
        %6632 = vmatpush.bf16.msra.mxu0 %v4302
        %6633 = vmatpush.bf16.msra.mxu0 %v4296
        %6634 = vmatpush.bf16.msra.mxu0 %v4290
        %6635 = vmatpush.bf16.msra.mxu0 %v4284
        %6636 = vmatpush.bf16.msra.mxu0 %v4278
        %6637 = vmatpush.bf16.msra.mxu0 %v4272
        %6638 = vmatmul.bf16.gmra.mxu0 %v1010
        %v6639 = vpop.f32.mrf.mxu0
        %v6640 = vadd.f32 %v6621, %v6639
        %v6641 = vpop.f32.mrf.mxu0
        %v6642 = vadd.f32 %v6623, %v6641
        %6643 = vmatmul.bf16.gmra.mxu0 %v1026
        %v6644 = vpop.f32.mrf.mxu0
        %v6645 = vadd.f32 %v6626, %v6644
        %v6646 = vpop.f32.mrf.mxu0
        %v6647 = vadd.f32 %v6628, %v6646
        %6648 = vdwg.mxu0
        %6649 = vmatpush.bf16.msra.mxu0 %v4362
        %6650 = vmatpush.bf16.msra.mxu0 %v4356
        %6651 = vmatpush.bf16.msra.mxu0 %v4350
        %6652 = vmatpush.bf16.msra.mxu0 %v4344
        %6653 = vmatpush.bf16.msra.mxu0 %v4338
        %6654 = vmatpush.bf16.msra.mxu0 %v4332
        %6655 = vmatpush.bf16.msra.mxu0 %v4326
        %6656 = vmatpush.bf16.msra.mxu0 %v4320
        %6657 = vmatmul.bf16.gmra.mxu0 %v1011
        %v6658 = vpop.f32.mrf.mxu0
        %v6659 = vadd.f32 %v6640, %v6658
        %v6660 = vpop.f32.mrf.mxu0
        %v6661 = vadd.f32 %v6642, %v6660
        %6662 = vmatmul.bf16.gmra.mxu0 %v1027
        %v6663 = vpop.f32.mrf.mxu0
        %v6664 = vadd.f32 %v6645, %v6663
        %v6665 = vpop.f32.mrf.mxu0
        %v6666 = vadd.f32 %v6647, %v6665
        %6667 = vdwg.mxu0
        %6668 = vmatpush.bf16.msra.mxu0 %v4410
        %6669 = vmatpush.bf16.msra.mxu0 %v4404
        %6670 = vmatpush.bf16.msra.mxu0 %v4398
        %6671 = vmatpush.bf16.msra.mxu0 %v4392
        %6672 = vmatpush.bf16.msra.mxu0 %v4386
        %6673 = vmatpush.bf16.msra.mxu0 %v4380
        %6674 = vmatpush.bf16.msra.mxu0 %v4374
        %6675 = vmatpush.bf16.msra.mxu0 %v4368
        %6676 = vmatmul.bf16.gmra.mxu0 %v1012
        %v6677 = vpop.f32.mrf.mxu0
        %v6678 = vadd.f32 %v6659, %v6677
        %v6679 = vpop.f32.mrf.mxu0
        %v6680 = vadd.f32 %v6661, %v6679
        %6681 = vmatmul.bf16.gmra.mxu0 %v1028
        %v6682 = vpop.f32.mrf.mxu0
        %v6683 = vadd.f32 %v6664, %v6682
        %v6684 = vpop.f32.mrf.mxu0
        %v6685 = vadd.f32 %v6666, %v6684
        %6686 = vdwg.mxu0
        %6687 = vmatpush.bf16.msra.mxu0 %v4458
        %6688 = vmatpush.bf16.msra.mxu0 %v4452
        %6689 = vmatpush.bf16.msra.mxu0 %v4446
        %6690 = vmatpush.bf16.msra.mxu0 %v4440
        %6691 = vmatpush.bf16.msra.mxu0 %v4434
        %6692 = vmatpush.bf16.msra.mxu0 %v4428
        %6693 = vmatpush.bf16.msra.mxu0 %v4422
        %6694 = vmatpush.bf16.msra.mxu0 %v4416
        %6695 = vmatmul.bf16.gmra.mxu0 %v1013
        %v6696 = vpop.f32.mrf.mxu0
        %v6697 = vadd.f32 %v6678, %v6696
        %v6698 = vpop.f32.mrf.mxu0
        %v6699 = vadd.f32 %v6680, %v6698
        %6700 = vmatmul.bf16.gmra.mxu0 %v1029
        %v6701 = vpop.f32.mrf.mxu0
        %v6702 = vadd.f32 %v6683, %v6701
        %v6703 = vpop.f32.mrf.mxu0
        %v6704 = vadd.f32 %v6685, %v6703
        %6705 = vdwg.mxu0
        %6706 = vmatpush.bf16.msra.mxu0 %v4506
        %6707 = vmatpush.bf16.msra.mxu0 %v4500
        %6708 = vmatpush.bf16.msra.mxu0 %v4494
        %6709 = vmatpush.bf16.msra.mxu0 %v4488
        %6710 = vmatpush.bf16.msra.mxu0 %v4482
        %6711 = vmatpush.bf16.msra.mxu0 %v4476
        %6712 = vmatpush.bf16.msra.mxu0 %v4470
        %6713 = vmatpush.bf16.msra.mxu0 %v4464
        %6714 = vmatmul.bf16.gmra.mxu0 %v1014
        %v6715 = vpop.f32.mrf.mxu0
        %v6716 = vadd.f32 %v6697, %v6715
        %v6717 = vpop.f32.mrf.mxu0
        %v6718 = vadd.f32 %v6699, %v6717
        %6719 = vmatmul.bf16.gmra.mxu0 %v1030
        %v6720 = vpop.f32.mrf.mxu0
        %v6721 = vadd.f32 %v6702, %v6720
        %v6722 = vpop.f32.mrf.mxu0
        %v6723 = vadd.f32 %v6704, %v6722
        %6724 = vdwg.mxu0
        %6725 = vmatpush.bf16.msra.mxu0 %v4554
        %6726 = vmatpush.bf16.msra.mxu0 %v4548
        %6727 = vmatpush.bf16.msra.mxu0 %v4542
        %6728 = vmatpush.bf16.msra.mxu0 %v4536
        %6729 = vmatpush.bf16.msra.mxu0 %v4530
        %6730 = vmatpush.bf16.msra.mxu0 %v4524
        %6731 = vmatpush.bf16.msra.mxu0 %v4518
        %6732 = vmatpush.bf16.msra.mxu0 %v4512
        %6733 = vmatmul.bf16.gmra.mxu0 %v1015
        %v6734 = vpop.f32.mrf.mxu0
        %v6735 = vadd.f32 %v6716, %v6734
        %v6736 = vpop.f32.mrf.mxu0
        %v6737 = vadd.f32 %v6718, %v6736
        %6738 = vmatmul.bf16.gmra.mxu0 %v1031
        %v6739 = vpop.f32.mrf.mxu0
        %v6740 = vadd.f32 %v6721, %v6739
        %v6741 = vpop.f32.mrf.mxu0
        %v6742 = vadd.f32 %v6723, %v6741
        %6743 = vdwg.mxu0
        %6744 = vmatpush.bf16.msra.mxu0 %v4602
        %6745 = vmatpush.bf16.msra.mxu0 %v4596
        %6746 = vmatpush.bf16.msra.mxu0 %v4590
        %6747 = vmatpush.bf16.msra.mxu0 %v4584
        %6748 = vmatpush.bf16.msra.mxu0 %v4578
        %6749 = vmatpush.bf16.msra.mxu0 %v4572
        %6750 = vmatpush.bf16.msra.mxu0 %v4566
        %6751 = vmatpush.bf16.msra.mxu0 %v4560
        %6752 = vmatmul.bf16.gmra.mxu0 %v1016
        %v6753 = vpop.f32.mrf.mxu0
        %v6754 = vadd.f32 %v6735, %v6753
        %v6755 = vpop.f32.mrf.mxu0
        %v6756 = vadd.f32 %v6737, %v6755
        %6757 = vmatmul.bf16.gmra.mxu0 %v1032
        %v6758 = vpop.f32.mrf.mxu0
        %v6759 = vadd.f32 %v6740, %v6758
        %v6760 = vpop.f32.mrf.mxu0
        %v6761 = vadd.f32 %v6742, %v6760
        %6762 = vdwg.mxu0
        %6763 = vmatpush.bf16.msra.mxu0 %v4650
        %6764 = vmatpush.bf16.msra.mxu0 %v4644
        %6765 = vmatpush.bf16.msra.mxu0 %v4638
        %6766 = vmatpush.bf16.msra.mxu0 %v4632
        %6767 = vmatpush.bf16.msra.mxu0 %v4626
        %6768 = vmatpush.bf16.msra.mxu0 %v4620
        %6769 = vmatpush.bf16.msra.mxu0 %v4614
        %6770 = vmatpush.bf16.msra.mxu0 %v4608
        %6771 = vmatmul.bf16.gmra.mxu0 %v1017
        %v6772 = vpop.f32.mrf.mxu0
        %v6773 = vadd.f32 %v6754, %v6772
        %v6774 = vpop.f32.mrf.mxu0
        %v6775 = vadd.f32 %v6756, %v6774
        %6776 = vmatmul.bf16.gmra.mxu0 %v1033
        %v6777 = vpop.f32.mrf.mxu0
        %v6778 = vadd.f32 %v6759, %v6777
        %v6779 = vpop.f32.mrf.mxu0
        %v6780 = vadd.f32 %v6761, %v6779
        %6781 = vdwg.mxu0
        %6782 = vmatpush.bf16.msra.mxu0 %v4698
        %6783 = vmatpush.bf16.msra.mxu0 %v4692
        %6784 = vmatpush.bf16.msra.mxu0 %v4686
        %6785 = vmatpush.bf16.msra.mxu0 %v4680
        %6786 = vmatpush.bf16.msra.mxu0 %v4674
        %6787 = vmatpush.bf16.msra.mxu0 %v4668
        %6788 = vmatpush.bf16.msra.mxu0 %v4662
        %6789 = vmatpush.bf16.msra.mxu0 %v4656
        %6790 = vmatmul.bf16.gmra.mxu0 %v1018
        %v6791 = vpop.f32.mrf.mxu0
        %v6792 = vadd.f32 %v6773, %v6791
        %v6793 = vpop.f32.mrf.mxu0
        %v6794 = vadd.f32 %v6775, %v6793
        %6795 = vmatmul.bf16.gmra.mxu0 %v1034
        %v6796 = vpop.f32.mrf.mxu0
        %v6797 = vadd.f32 %v6778, %v6796
        %v6798 = vpop.f32.mrf.mxu0
        %v6799 = vadd.f32 %v6780, %v6798
        %6800 = vdwg.mxu0
        %6801 = vmatpush.bf16.msra.mxu0 %v4746
        %6802 = vmatpush.bf16.msra.mxu0 %v4740
        %6803 = vmatpush.bf16.msra.mxu0 %v4734
        %6804 = vmatpush.bf16.msra.mxu0 %v4728
        %6805 = vmatpush.bf16.msra.mxu0 %v4722
        %6806 = vmatpush.bf16.msra.mxu0 %v4716
        %6807 = vmatpush.bf16.msra.mxu0 %v4710
        %6808 = vmatpush.bf16.msra.mxu0 %v4704
        %6809 = vmatmul.bf16.gmra.mxu0 %v1019
        %v6810 = vpop.f32.mrf.mxu0
        %v6811 = vadd.f32 %v6792, %v6810
        %v6812 = vpop.f32.mrf.mxu0
        %v6813 = vadd.f32 %v6794, %v6812
        %6814 = vmatmul.bf16.gmra.mxu0 %v1035
        %v6815 = vpop.f32.mrf.mxu0
        %v6816 = vadd.f32 %v6797, %v6815
        %v6817 = vpop.f32.mrf.mxu0
        %v6818 = vadd.f32 %v6799, %v6817
        %6819 = vdwg.mxu0
        %6820 = vmatpush.bf16.msra.mxu0 %v4794
        %6821 = vmatpush.bf16.msra.mxu0 %v4788
        %6822 = vmatpush.bf16.msra.mxu0 %v4782
        %6823 = vmatpush.bf16.msra.mxu0 %v4776
        %6824 = vmatpush.bf16.msra.mxu0 %v4770
        %6825 = vmatpush.bf16.msra.mxu0 %v4764
        %6826 = vmatpush.bf16.msra.mxu0 %v4758
        %6827 = vmatpush.bf16.msra.mxu0 %v4752
        %6828 = vmatmul.bf16.gmra.mxu0 %v1020
        %v6829 = vpop.f32.mrf.mxu0
        %v6830 = vadd.f32 %v6811, %v6829
        %v6831 = vpop.f32.mrf.mxu0
        %v6832 = vadd.f32 %v6813, %v6831
        %6833 = vmatmul.bf16.gmra.mxu0 %v1036
        %v6834 = vpop.f32.mrf.mxu0
        %v6835 = vadd.f32 %v6816, %v6834
        %v6836 = vpop.f32.mrf.mxu0
        %v6837 = vadd.f32 %v6818, %v6836
        %6838 = vdwg.mxu0
        %6839 = vmatpush.bf16.msra.mxu0 %v4842
        %6840 = vmatpush.bf16.msra.mxu0 %v4836
        %6841 = vmatpush.bf16.msra.mxu0 %v4830
        %6842 = vmatpush.bf16.msra.mxu0 %v4824
        %6843 = vmatpush.bf16.msra.mxu0 %v4818
        %6844 = vmatpush.bf16.msra.mxu0 %v4812
        %6845 = vmatpush.bf16.msra.mxu0 %v4806
        %6846 = vmatpush.bf16.msra.mxu0 %v4800
        %6847 = vmatmul.bf16.gmra.mxu0 %v1021
        %v6848 = vpop.f32.mrf.mxu0
        %v6849 = vadd.f32 %v6830, %v6848
        %v6850 = vpop.f32.mrf.mxu0
        %v6851 = vadd.f32 %v6832, %v6850
        %6852 = vmatmul.bf16.gmra.mxu0 %v1037
        %v6853 = vpop.f32.mrf.mxu0
        %v6854 = vadd.f32 %v6835, %v6853
        %v6855 = vpop.f32.mrf.mxu0
        %v6856 = vadd.f32 %v6837, %v6855
        %6857 = vdwg.mxu0
        %6858 = vmatpush.bf16.msra.mxu0 %v4890
        %6859 = vmatpush.bf16.msra.mxu0 %v4884
        %6860 = vmatpush.bf16.msra.mxu0 %v4878
        %6861 = vmatpush.bf16.msra.mxu0 %v4872
        %6862 = vmatpush.bf16.msra.mxu0 %v4866
        %6863 = vmatpush.bf16.msra.mxu0 %v4860
        %6864 = vmatpush.bf16.msra.mxu0 %v4854
        %6865 = vmatpush.bf16.msra.mxu0 %v4848
        %6866 = vmatmul.bf16.gmra.mxu0 %v1022
        %v6867 = vpop.f32.mrf.mxu0
        %v6868 = vadd.f32 %v6849, %v6867
        %v6869 = vpop.f32.mrf.mxu0
        %v6870 = vadd.f32 %v6851, %v6869
        %6871 = vmatmul.bf16.gmra.mxu0 %v1038
        %v6872 = vpop.f32.mrf.mxu0
        %v6873 = vadd.f32 %v6854, %v6872
        %v6874 = vpop.f32.mrf.mxu0
        %v6875 = vadd.f32 %v6856, %v6874
        %6876 = vdwg.mxu0
        %6877 = vmatpush.bf16.msra.mxu0 %v4171
        %6878 = vmatpush.bf16.msra.mxu0 %v4165
        %6879 = vmatpush.bf16.msra.mxu0 %v4159
        %6880 = vmatpush.bf16.msra.mxu0 %v4153
        %6881 = vmatpush.bf16.msra.mxu0 %v4147
        %6882 = vmatpush.bf16.msra.mxu0 %v4141
        %6883 = vmatpush.bf16.msra.mxu0 %v4135
        %6884 = vmatpush.bf16.msra.mxu0 %v4129
        %6885 = vmatmul.bf16.gmra.mxu0 %v1007
        %v6886 = vpop.f32.mrf.mxu0
        %v6887 = vadd.f32 %v1813, %v6886
        %v6888 = vpop.f32.mrf.mxu0
        %v6889 = vadd.f32 %v1813, %v6888
        %6890 = vmatmul.bf16.gmra.mxu0 %v1023
        %v6891 = vpop.f32.mrf.mxu0
        %v6892 = vadd.f32 %v1813, %v6891
        %v6893 = vpop.f32.mrf.mxu0
        %v6894 = vadd.f32 %v1813, %v6893
        %6895 = vdwg.mxu0
        %6896 = vmatpush.bf16.msra.mxu0 %v4219
        %6897 = vmatpush.bf16.msra.mxu0 %v4213
        %6898 = vmatpush.bf16.msra.mxu0 %v4207
        %6899 = vmatpush.bf16.msra.mxu0 %v4201
        %6900 = vmatpush.bf16.msra.mxu0 %v4195
        %6901 = vmatpush.bf16.msra.mxu0 %v4189
        %6902 = vmatpush.bf16.msra.mxu0 %v4183
        %6903 = vmatpush.bf16.msra.mxu0 %v4177
        %6904 = vmatmul.bf16.gmra.mxu0 %v1008
        %v6905 = vpop.f32.mrf.mxu0
        %v6906 = vadd.f32 %v6887, %v6905
        %v6907 = vpop.f32.mrf.mxu0
        %v6908 = vadd.f32 %v6889, %v6907
        %6909 = vmatmul.bf16.gmra.mxu0 %v1024
        %v6910 = vpop.f32.mrf.mxu0
        %v6911 = vadd.f32 %v6892, %v6910
        %v6912 = vpop.f32.mrf.mxu0
        %v6913 = vadd.f32 %v6894, %v6912
        %6914 = vdwg.mxu0
        %6915 = vmatpush.bf16.msra.mxu0 %v4267
        %6916 = vmatpush.bf16.msra.mxu0 %v4261
        %6917 = vmatpush.bf16.msra.mxu0 %v4255
        %6918 = vmatpush.bf16.msra.mxu0 %v4249
        %6919 = vmatpush.bf16.msra.mxu0 %v4243
        %6920 = vmatpush.bf16.msra.mxu0 %v4237
        %6921 = vmatpush.bf16.msra.mxu0 %v4231
        %6922 = vmatpush.bf16.msra.mxu0 %v4225
        %6923 = vmatmul.bf16.gmra.mxu0 %v1009
        %v6924 = vpop.f32.mrf.mxu0
        %v6925 = vadd.f32 %v6906, %v6924
        %v6926 = vpop.f32.mrf.mxu0
        %v6927 = vadd.f32 %v6908, %v6926
        %6928 = vmatmul.bf16.gmra.mxu0 %v1025
        %v6929 = vpop.f32.mrf.mxu0
        %v6930 = vadd.f32 %v6911, %v6929
        %v6931 = vpop.f32.mrf.mxu0
        %v6932 = vadd.f32 %v6913, %v6931
        %6933 = vdwg.mxu0
        %6934 = vmatpush.bf16.msra.mxu0 %v4315
        %6935 = vmatpush.bf16.msra.mxu0 %v4309
        %6936 = vmatpush.bf16.msra.mxu0 %v4303
        %6937 = vmatpush.bf16.msra.mxu0 %v4297
        %6938 = vmatpush.bf16.msra.mxu0 %v4291
        %6939 = vmatpush.bf16.msra.mxu0 %v4285
        %6940 = vmatpush.bf16.msra.mxu0 %v4279
        %6941 = vmatpush.bf16.msra.mxu0 %v4273
        %6942 = vmatmul.bf16.gmra.mxu0 %v1010
        %v6943 = vpop.f32.mrf.mxu0
        %v6944 = vadd.f32 %v6925, %v6943
        %v6945 = vpop.f32.mrf.mxu0
        %v6946 = vadd.f32 %v6927, %v6945
        %6947 = vmatmul.bf16.gmra.mxu0 %v1026
        %v6948 = vpop.f32.mrf.mxu0
        %v6949 = vadd.f32 %v6930, %v6948
        %v6950 = vpop.f32.mrf.mxu0
        %v6951 = vadd.f32 %v6932, %v6950
        %6952 = vdwg.mxu0
        %6953 = vmatpush.bf16.msra.mxu0 %v4363
        %6954 = vmatpush.bf16.msra.mxu0 %v4357
        %6955 = vmatpush.bf16.msra.mxu0 %v4351
        %6956 = vmatpush.bf16.msra.mxu0 %v4345
        %6957 = vmatpush.bf16.msra.mxu0 %v4339
        %6958 = vmatpush.bf16.msra.mxu0 %v4333
        %6959 = vmatpush.bf16.msra.mxu0 %v4327
        %6960 = vmatpush.bf16.msra.mxu0 %v4321
        %6961 = vmatmul.bf16.gmra.mxu0 %v1011
        %v6962 = vpop.f32.mrf.mxu0
        %v6963 = vadd.f32 %v6944, %v6962
        %v6964 = vpop.f32.mrf.mxu0
        %v6965 = vadd.f32 %v6946, %v6964
        %6966 = vmatmul.bf16.gmra.mxu0 %v1027
        %v6967 = vpop.f32.mrf.mxu0
        %v6968 = vadd.f32 %v6949, %v6967
        %v6969 = vpop.f32.mrf.mxu0
        %v6970 = vadd.f32 %v6951, %v6969
        %6971 = vdwg.mxu0
        %6972 = vmatpush.bf16.msra.mxu0 %v4411
        %6973 = vmatpush.bf16.msra.mxu0 %v4405
        %6974 = vmatpush.bf16.msra.mxu0 %v4399
        %6975 = vmatpush.bf16.msra.mxu0 %v4393
        %6976 = vmatpush.bf16.msra.mxu0 %v4387
        %6977 = vmatpush.bf16.msra.mxu0 %v4381
        %6978 = vmatpush.bf16.msra.mxu0 %v4375
        %6979 = vmatpush.bf16.msra.mxu0 %v4369
        %6980 = vmatmul.bf16.gmra.mxu0 %v1012
        %v6981 = vpop.f32.mrf.mxu0
        %v6982 = vadd.f32 %v6963, %v6981
        %v6983 = vpop.f32.mrf.mxu0
        %v6984 = vadd.f32 %v6965, %v6983
        %6985 = vmatmul.bf16.gmra.mxu0 %v1028
        %v6986 = vpop.f32.mrf.mxu0
        %v6987 = vadd.f32 %v6968, %v6986
        %v6988 = vpop.f32.mrf.mxu0
        %v6989 = vadd.f32 %v6970, %v6988
        %6990 = vdwg.mxu0
        %6991 = vmatpush.bf16.msra.mxu0 %v4459
        %6992 = vmatpush.bf16.msra.mxu0 %v4453
        %6993 = vmatpush.bf16.msra.mxu0 %v4447
        %6994 = vmatpush.bf16.msra.mxu0 %v4441
        %6995 = vmatpush.bf16.msra.mxu0 %v4435
        %6996 = vmatpush.bf16.msra.mxu0 %v4429
        %6997 = vmatpush.bf16.msra.mxu0 %v4423
        %6998 = vmatpush.bf16.msra.mxu0 %v4417
        %6999 = vmatmul.bf16.gmra.mxu0 %v1013
        %v7000 = vpop.f32.mrf.mxu0
        %v7001 = vadd.f32 %v6982, %v7000
        %v7002 = vpop.f32.mrf.mxu0
        %v7003 = vadd.f32 %v6984, %v7002
        %7004 = vmatmul.bf16.gmra.mxu0 %v1029
        %v7005 = vpop.f32.mrf.mxu0
        %v7006 = vadd.f32 %v6987, %v7005
        %v7007 = vpop.f32.mrf.mxu0
        %v7008 = vadd.f32 %v6989, %v7007
        %7009 = vdwg.mxu0
        %7010 = vmatpush.bf16.msra.mxu0 %v4507
        %7011 = vmatpush.bf16.msra.mxu0 %v4501
        %7012 = vmatpush.bf16.msra.mxu0 %v4495
        %7013 = vmatpush.bf16.msra.mxu0 %v4489
        %7014 = vmatpush.bf16.msra.mxu0 %v4483
        %7015 = vmatpush.bf16.msra.mxu0 %v4477
        %7016 = vmatpush.bf16.msra.mxu0 %v4471
        %7017 = vmatpush.bf16.msra.mxu0 %v4465
        %7018 = vmatmul.bf16.gmra.mxu0 %v1014
        %v7019 = vpop.f32.mrf.mxu0
        %v7020 = vadd.f32 %v7001, %v7019
        %v7021 = vpop.f32.mrf.mxu0
        %v7022 = vadd.f32 %v7003, %v7021
        %7023 = vmatmul.bf16.gmra.mxu0 %v1030
        %v7024 = vpop.f32.mrf.mxu0
        %v7025 = vadd.f32 %v7006, %v7024
        %v7026 = vpop.f32.mrf.mxu0
        %v7027 = vadd.f32 %v7008, %v7026
        %7028 = vdwg.mxu0
        %7029 = vmatpush.bf16.msra.mxu0 %v4555
        %7030 = vmatpush.bf16.msra.mxu0 %v4549
        %7031 = vmatpush.bf16.msra.mxu0 %v4543
        %7032 = vmatpush.bf16.msra.mxu0 %v4537
        %7033 = vmatpush.bf16.msra.mxu0 %v4531
        %7034 = vmatpush.bf16.msra.mxu0 %v4525
        %7035 = vmatpush.bf16.msra.mxu0 %v4519
        %7036 = vmatpush.bf16.msra.mxu0 %v4513
        %7037 = vmatmul.bf16.gmra.mxu0 %v1015
        %v7038 = vpop.f32.mrf.mxu0
        %v7039 = vadd.f32 %v7020, %v7038
        %v7040 = vpop.f32.mrf.mxu0
        %v7041 = vadd.f32 %v7022, %v7040
        %7042 = vmatmul.bf16.gmra.mxu0 %v1031
        %v7043 = vpop.f32.mrf.mxu0
        %v7044 = vadd.f32 %v7025, %v7043
        %v7045 = vpop.f32.mrf.mxu0
        %v7046 = vadd.f32 %v7027, %v7045
        %7047 = vdwg.mxu0
        %7048 = vmatpush.bf16.msra.mxu0 %v4603
        %7049 = vmatpush.bf16.msra.mxu0 %v4597
        %7050 = vmatpush.bf16.msra.mxu0 %v4591
        %7051 = vmatpush.bf16.msra.mxu0 %v4585
        %7052 = vmatpush.bf16.msra.mxu0 %v4579
        %7053 = vmatpush.bf16.msra.mxu0 %v4573
        %7054 = vmatpush.bf16.msra.mxu0 %v4567
        %7055 = vmatpush.bf16.msra.mxu0 %v4561
        %7056 = vmatmul.bf16.gmra.mxu0 %v1016
        %v7057 = vpop.f32.mrf.mxu0
        %v7058 = vadd.f32 %v7039, %v7057
        %v7059 = vpop.f32.mrf.mxu0
        %v7060 = vadd.f32 %v7041, %v7059
        %7061 = vmatmul.bf16.gmra.mxu0 %v1032
        %v7062 = vpop.f32.mrf.mxu0
        %v7063 = vadd.f32 %v7044, %v7062
        %v7064 = vpop.f32.mrf.mxu0
        %v7065 = vadd.f32 %v7046, %v7064
        %7066 = vdwg.mxu0
        %7067 = vmatpush.bf16.msra.mxu0 %v4651
        %7068 = vmatpush.bf16.msra.mxu0 %v4645
        %7069 = vmatpush.bf16.msra.mxu0 %v4639
        %7070 = vmatpush.bf16.msra.mxu0 %v4633
        %7071 = vmatpush.bf16.msra.mxu0 %v4627
        %7072 = vmatpush.bf16.msra.mxu0 %v4621
        %7073 = vmatpush.bf16.msra.mxu0 %v4615
        %7074 = vmatpush.bf16.msra.mxu0 %v4609
        %7075 = vmatmul.bf16.gmra.mxu0 %v1017
        %v7076 = vpop.f32.mrf.mxu0
        %v7077 = vadd.f32 %v7058, %v7076
        %v7078 = vpop.f32.mrf.mxu0
        %v7079 = vadd.f32 %v7060, %v7078
        %7080 = vmatmul.bf16.gmra.mxu0 %v1033
        %v7081 = vpop.f32.mrf.mxu0
        %v7082 = vadd.f32 %v7063, %v7081
        %v7083 = vpop.f32.mrf.mxu0
        %v7084 = vadd.f32 %v7065, %v7083
        %7085 = vdwg.mxu0
        %7086 = vmatpush.bf16.msra.mxu0 %v4699
        %7087 = vmatpush.bf16.msra.mxu0 %v4693
        %7088 = vmatpush.bf16.msra.mxu0 %v4687
        %7089 = vmatpush.bf16.msra.mxu0 %v4681
        %7090 = vmatpush.bf16.msra.mxu0 %v4675
        %7091 = vmatpush.bf16.msra.mxu0 %v4669
        %7092 = vmatpush.bf16.msra.mxu0 %v4663
        %7093 = vmatpush.bf16.msra.mxu0 %v4657
        %7094 = vmatmul.bf16.gmra.mxu0 %v1018
        %v7095 = vpop.f32.mrf.mxu0
        %v7096 = vadd.f32 %v7077, %v7095
        %v7097 = vpop.f32.mrf.mxu0
        %v7098 = vadd.f32 %v7079, %v7097
        %7099 = vmatmul.bf16.gmra.mxu0 %v1034
        %v7100 = vpop.f32.mrf.mxu0
        %v7101 = vadd.f32 %v7082, %v7100
        %v7102 = vpop.f32.mrf.mxu0
        %v7103 = vadd.f32 %v7084, %v7102
        %7104 = vdwg.mxu0
        %7105 = vmatpush.bf16.msra.mxu0 %v4747
        %7106 = vmatpush.bf16.msra.mxu0 %v4741
        %7107 = vmatpush.bf16.msra.mxu0 %v4735
        %7108 = vmatpush.bf16.msra.mxu0 %v4729
        %7109 = vmatpush.bf16.msra.mxu0 %v4723
        %7110 = vmatpush.bf16.msra.mxu0 %v4717
        %7111 = vmatpush.bf16.msra.mxu0 %v4711
        %7112 = vmatpush.bf16.msra.mxu0 %v4705
        %7113 = vmatmul.bf16.gmra.mxu0 %v1019
        %v7114 = vpop.f32.mrf.mxu0
        %v7115 = vadd.f32 %v7096, %v7114
        %v7116 = vpop.f32.mrf.mxu0
        %v7117 = vadd.f32 %v7098, %v7116
        %7118 = vmatmul.bf16.gmra.mxu0 %v1035
        %v7119 = vpop.f32.mrf.mxu0
        %v7120 = vadd.f32 %v7101, %v7119
        %v7121 = vpop.f32.mrf.mxu0
        %v7122 = vadd.f32 %v7103, %v7121
        %7123 = vdwg.mxu0
        %7124 = vmatpush.bf16.msra.mxu0 %v4795
        %7125 = vmatpush.bf16.msra.mxu0 %v4789
        %7126 = vmatpush.bf16.msra.mxu0 %v4783
        %7127 = vmatpush.bf16.msra.mxu0 %v4777
        %7128 = vmatpush.bf16.msra.mxu0 %v4771
        %7129 = vmatpush.bf16.msra.mxu0 %v4765
        %7130 = vmatpush.bf16.msra.mxu0 %v4759
        %7131 = vmatpush.bf16.msra.mxu0 %v4753
        %7132 = vmatmul.bf16.gmra.mxu0 %v1020
        %v7133 = vpop.f32.mrf.mxu0
        %v7134 = vadd.f32 %v7115, %v7133
        %v7135 = vpop.f32.mrf.mxu0
        %v7136 = vadd.f32 %v7117, %v7135
        %7137 = vmatmul.bf16.gmra.mxu0 %v1036
        %v7138 = vpop.f32.mrf.mxu0
        %v7139 = vadd.f32 %v7120, %v7138
        %v7140 = vpop.f32.mrf.mxu0
        %v7141 = vadd.f32 %v7122, %v7140
        %7142 = vdwg.mxu0
        %7143 = vmatpush.bf16.msra.mxu0 %v4843
        %7144 = vmatpush.bf16.msra.mxu0 %v4837
        %7145 = vmatpush.bf16.msra.mxu0 %v4831
        %7146 = vmatpush.bf16.msra.mxu0 %v4825
        %7147 = vmatpush.bf16.msra.mxu0 %v4819
        %7148 = vmatpush.bf16.msra.mxu0 %v4813
        %7149 = vmatpush.bf16.msra.mxu0 %v4807
        %7150 = vmatpush.bf16.msra.mxu0 %v4801
        %7151 = vmatmul.bf16.gmra.mxu0 %v1021
        %v7152 = vpop.f32.mrf.mxu0
        %v7153 = vadd.f32 %v7134, %v7152
        %v7154 = vpop.f32.mrf.mxu0
        %v7155 = vadd.f32 %v7136, %v7154
        %7156 = vmatmul.bf16.gmra.mxu0 %v1037
        %v7157 = vpop.f32.mrf.mxu0
        %v7158 = vadd.f32 %v7139, %v7157
        %v7159 = vpop.f32.mrf.mxu0
        %v7160 = vadd.f32 %v7141, %v7159
        %7161 = vdwg.mxu0
        %7162 = vmatpush.bf16.msra.mxu0 %v4891
        %7163 = vmatpush.bf16.msra.mxu0 %v4885
        %7164 = vmatpush.bf16.msra.mxu0 %v4879
        %7165 = vmatpush.bf16.msra.mxu0 %v4873
        %7166 = vmatpush.bf16.msra.mxu0 %v4867
        %7167 = vmatpush.bf16.msra.mxu0 %v4861
        %7168 = vmatpush.bf16.msra.mxu0 %v4855
        %7169 = vmatpush.bf16.msra.mxu0 %v4849
        %7170 = vmatmul.bf16.gmra.mxu0 %v1022
        %v7171 = vpop.f32.mrf.mxu0
        %v7172 = vadd.f32 %v7153, %v7171
        %v7173 = vpop.f32.mrf.mxu0
        %v7174 = vadd.f32 %v7155, %v7173
        %7175 = vmatmul.bf16.gmra.mxu0 %v1038
        %v7176 = vpop.f32.mrf.mxu0
        %v7177 = vadd.f32 %v7158, %v7176
        %v7178 = vpop.f32.mrf.mxu0
        %v7179 = vadd.f32 %v7160, %v7178
        %7180 = vdwg.mxu0
        %7181 = vmatpush.bf16.msra.mxu0 %v4172
        %7182 = vmatpush.bf16.msra.mxu0 %v4166
        %7183 = vmatpush.bf16.msra.mxu0 %v4160
        %7184 = vmatpush.bf16.msra.mxu0 %v4154
        %7185 = vmatpush.bf16.msra.mxu0 %v4148
        %7186 = vmatpush.bf16.msra.mxu0 %v4142
        %7187 = vmatpush.bf16.msra.mxu0 %v4136
        %7188 = vmatpush.bf16.msra.mxu0 %v4130
        %7189 = vmatmul.bf16.gmra.mxu0 %v1007
        %v7190 = vpop.f32.mrf.mxu0
        %v7191 = vadd.f32 %v1814, %v7190
        %v7192 = vpop.f32.mrf.mxu0
        %v7193 = vadd.f32 %v1814, %v7192
        %7194 = vmatmul.bf16.gmra.mxu0 %v1023
        %v7195 = vpop.f32.mrf.mxu0
        %v7196 = vadd.f32 %v1814, %v7195
        %v7197 = vpop.f32.mrf.mxu0
        %v7198 = vadd.f32 %v1814, %v7197
        %7199 = vdwg.mxu0
        %7200 = vmatpush.bf16.msra.mxu0 %v4220
        %7201 = vmatpush.bf16.msra.mxu0 %v4214
        %7202 = vmatpush.bf16.msra.mxu0 %v4208
        %7203 = vmatpush.bf16.msra.mxu0 %v4202
        %7204 = vmatpush.bf16.msra.mxu0 %v4196
        %7205 = vmatpush.bf16.msra.mxu0 %v4190
        %7206 = vmatpush.bf16.msra.mxu0 %v4184
        %7207 = vmatpush.bf16.msra.mxu0 %v4178
        %7208 = vmatmul.bf16.gmra.mxu0 %v1008
        %v7209 = vpop.f32.mrf.mxu0
        %v7210 = vadd.f32 %v7191, %v7209
        %v7211 = vpop.f32.mrf.mxu0
        %v7212 = vadd.f32 %v7193, %v7211
        %7213 = vmatmul.bf16.gmra.mxu0 %v1024
        %v7214 = vpop.f32.mrf.mxu0
        %v7215 = vadd.f32 %v7196, %v7214
        %v7216 = vpop.f32.mrf.mxu0
        %v7217 = vadd.f32 %v7198, %v7216
        %7218 = vdwg.mxu0
        %7219 = vmatpush.bf16.msra.mxu0 %v4268
        %7220 = vmatpush.bf16.msra.mxu0 %v4262
        %7221 = vmatpush.bf16.msra.mxu0 %v4256
        %7222 = vmatpush.bf16.msra.mxu0 %v4250
        %7223 = vmatpush.bf16.msra.mxu0 %v4244
        %7224 = vmatpush.bf16.msra.mxu0 %v4238
        %7225 = vmatpush.bf16.msra.mxu0 %v4232
        %7226 = vmatpush.bf16.msra.mxu0 %v4226
        %7227 = vmatmul.bf16.gmra.mxu0 %v1009
        %v7228 = vpop.f32.mrf.mxu0
        %v7229 = vadd.f32 %v7210, %v7228
        %v7230 = vpop.f32.mrf.mxu0
        %v7231 = vadd.f32 %v7212, %v7230
        %7232 = vmatmul.bf16.gmra.mxu0 %v1025
        %v7233 = vpop.f32.mrf.mxu0
        %v7234 = vadd.f32 %v7215, %v7233
        %v7235 = vpop.f32.mrf.mxu0
        %v7236 = vadd.f32 %v7217, %v7235
        %7237 = vdwg.mxu0
        %7238 = vmatpush.bf16.msra.mxu0 %v4316
        %7239 = vmatpush.bf16.msra.mxu0 %v4310
        %7240 = vmatpush.bf16.msra.mxu0 %v4304
        %7241 = vmatpush.bf16.msra.mxu0 %v4298
        %7242 = vmatpush.bf16.msra.mxu0 %v4292
        %7243 = vmatpush.bf16.msra.mxu0 %v4286
        %7244 = vmatpush.bf16.msra.mxu0 %v4280
        %7245 = vmatpush.bf16.msra.mxu0 %v4274
        %7246 = vmatmul.bf16.gmra.mxu0 %v1010
        %v7247 = vpop.f32.mrf.mxu0
        %v7248 = vadd.f32 %v7229, %v7247
        %v7249 = vpop.f32.mrf.mxu0
        %v7250 = vadd.f32 %v7231, %v7249
        %7251 = vmatmul.bf16.gmra.mxu0 %v1026
        %v7252 = vpop.f32.mrf.mxu0
        %v7253 = vadd.f32 %v7234, %v7252
        %v7254 = vpop.f32.mrf.mxu0
        %v7255 = vadd.f32 %v7236, %v7254
        %7256 = vdwg.mxu0
        %7257 = vmatpush.bf16.msra.mxu0 %v4364
        %7258 = vmatpush.bf16.msra.mxu0 %v4358
        %7259 = vmatpush.bf16.msra.mxu0 %v4352
        %7260 = vmatpush.bf16.msra.mxu0 %v4346
        %7261 = vmatpush.bf16.msra.mxu0 %v4340
        %7262 = vmatpush.bf16.msra.mxu0 %v4334
        %7263 = vmatpush.bf16.msra.mxu0 %v4328
        %7264 = vmatpush.bf16.msra.mxu0 %v4322
        %7265 = vmatmul.bf16.gmra.mxu0 %v1011
        %v7266 = vpop.f32.mrf.mxu0
        %v7267 = vadd.f32 %v7248, %v7266
        %v7268 = vpop.f32.mrf.mxu0
        %v7269 = vadd.f32 %v7250, %v7268
        %7270 = vmatmul.bf16.gmra.mxu0 %v1027
        %v7271 = vpop.f32.mrf.mxu0
        %v7272 = vadd.f32 %v7253, %v7271
        %v7273 = vpop.f32.mrf.mxu0
        %v7274 = vadd.f32 %v7255, %v7273
        %7275 = vdwg.mxu0
        %7276 = vmatpush.bf16.msra.mxu0 %v4412
        %7277 = vmatpush.bf16.msra.mxu0 %v4406
        %7278 = vmatpush.bf16.msra.mxu0 %v4400
        %7279 = vmatpush.bf16.msra.mxu0 %v4394
        %7280 = vmatpush.bf16.msra.mxu0 %v4388
        %7281 = vmatpush.bf16.msra.mxu0 %v4382
        %7282 = vmatpush.bf16.msra.mxu0 %v4376
        %7283 = vmatpush.bf16.msra.mxu0 %v4370
        %7284 = vmatmul.bf16.gmra.mxu0 %v1012
        %v7285 = vpop.f32.mrf.mxu0
        %v7286 = vadd.f32 %v7267, %v7285
        %v7287 = vpop.f32.mrf.mxu0
        %v7288 = vadd.f32 %v7269, %v7287
        %7289 = vmatmul.bf16.gmra.mxu0 %v1028
        %v7290 = vpop.f32.mrf.mxu0
        %v7291 = vadd.f32 %v7272, %v7290
        %v7292 = vpop.f32.mrf.mxu0
        %v7293 = vadd.f32 %v7274, %v7292
        %7294 = vdwg.mxu0
        %7295 = vmatpush.bf16.msra.mxu0 %v4460
        %7296 = vmatpush.bf16.msra.mxu0 %v4454
        %7297 = vmatpush.bf16.msra.mxu0 %v4448
        %7298 = vmatpush.bf16.msra.mxu0 %v4442
        %7299 = vmatpush.bf16.msra.mxu0 %v4436
        %7300 = vmatpush.bf16.msra.mxu0 %v4430
        %7301 = vmatpush.bf16.msra.mxu0 %v4424
        %7302 = vmatpush.bf16.msra.mxu0 %v4418
        %7303 = vmatmul.bf16.gmra.mxu0 %v1013
        %v7304 = vpop.f32.mrf.mxu0
        %v7305 = vadd.f32 %v7286, %v7304
        %v7306 = vpop.f32.mrf.mxu0
        %v7307 = vadd.f32 %v7288, %v7306
        %7308 = vmatmul.bf16.gmra.mxu0 %v1029
        %v7309 = vpop.f32.mrf.mxu0
        %v7310 = vadd.f32 %v7291, %v7309
        %v7311 = vpop.f32.mrf.mxu0
        %v7312 = vadd.f32 %v7293, %v7311
        %7313 = vdwg.mxu0
        %7314 = vmatpush.bf16.msra.mxu0 %v4508
        %7315 = vmatpush.bf16.msra.mxu0 %v4502
        %7316 = vmatpush.bf16.msra.mxu0 %v4496
        %7317 = vmatpush.bf16.msra.mxu0 %v4490
        %7318 = vmatpush.bf16.msra.mxu0 %v4484
        %7319 = vmatpush.bf16.msra.mxu0 %v4478
        %7320 = vmatpush.bf16.msra.mxu0 %v4472
        %7321 = vmatpush.bf16.msra.mxu0 %v4466
        %7322 = vmatmul.bf16.gmra.mxu0 %v1014
        %v7323 = vpop.f32.mrf.mxu0
        %v7324 = vadd.f32 %v7305, %v7323
        %v7325 = vpop.f32.mrf.mxu0
        %v7326 = vadd.f32 %v7307, %v7325
        %7327 = vmatmul.bf16.gmra.mxu0 %v1030
        %v7328 = vpop.f32.mrf.mxu0
        %v7329 = vadd.f32 %v7310, %v7328
        %v7330 = vpop.f32.mrf.mxu0
        %v7331 = vadd.f32 %v7312, %v7330
        %7332 = vdwg.mxu0
        %7333 = vmatpush.bf16.msra.mxu0 %v4556
        %7334 = vmatpush.bf16.msra.mxu0 %v4550
        %7335 = vmatpush.bf16.msra.mxu0 %v4544
        %7336 = vmatpush.bf16.msra.mxu0 %v4538
        %7337 = vmatpush.bf16.msra.mxu0 %v4532
        %7338 = vmatpush.bf16.msra.mxu0 %v4526
        %7339 = vmatpush.bf16.msra.mxu0 %v4520
        %7340 = vmatpush.bf16.msra.mxu0 %v4514
        %7341 = vmatmul.bf16.gmra.mxu0 %v1015
        %v7342 = vpop.f32.mrf.mxu0
        %v7343 = vadd.f32 %v7324, %v7342
        %v7344 = vpop.f32.mrf.mxu0
        %v7345 = vadd.f32 %v7326, %v7344
        %7346 = vmatmul.bf16.gmra.mxu0 %v1031
        %v7347 = vpop.f32.mrf.mxu0
        %v7348 = vadd.f32 %v7329, %v7347
        %v7349 = vpop.f32.mrf.mxu0
        %v7350 = vadd.f32 %v7331, %v7349
        %7351 = vdwg.mxu0
        %7352 = vmatpush.bf16.msra.mxu0 %v4604
        %7353 = vmatpush.bf16.msra.mxu0 %v4598
        %7354 = vmatpush.bf16.msra.mxu0 %v4592
        %7355 = vmatpush.bf16.msra.mxu0 %v4586
        %7356 = vmatpush.bf16.msra.mxu0 %v4580
        %7357 = vmatpush.bf16.msra.mxu0 %v4574
        %7358 = vmatpush.bf16.msra.mxu0 %v4568
        %7359 = vmatpush.bf16.msra.mxu0 %v4562
        %7360 = vmatmul.bf16.gmra.mxu0 %v1016
        %v7361 = vpop.f32.mrf.mxu0
        %v7362 = vadd.f32 %v7343, %v7361
        %v7363 = vpop.f32.mrf.mxu0
        %v7364 = vadd.f32 %v7345, %v7363
        %7365 = vmatmul.bf16.gmra.mxu0 %v1032
        %v7366 = vpop.f32.mrf.mxu0
        %v7367 = vadd.f32 %v7348, %v7366
        %v7368 = vpop.f32.mrf.mxu0
        %v7369 = vadd.f32 %v7350, %v7368
        %7370 = vdwg.mxu0
        %7371 = vmatpush.bf16.msra.mxu0 %v4652
        %7372 = vmatpush.bf16.msra.mxu0 %v4646
        %7373 = vmatpush.bf16.msra.mxu0 %v4640
        %7374 = vmatpush.bf16.msra.mxu0 %v4634
        %7375 = vmatpush.bf16.msra.mxu0 %v4628
        %7376 = vmatpush.bf16.msra.mxu0 %v4622
        %7377 = vmatpush.bf16.msra.mxu0 %v4616
        %7378 = vmatpush.bf16.msra.mxu0 %v4610
        %7379 = vmatmul.bf16.gmra.mxu0 %v1017
        %v7380 = vpop.f32.mrf.mxu0
        %v7381 = vadd.f32 %v7362, %v7380
        %v7382 = vpop.f32.mrf.mxu0
        %v7383 = vadd.f32 %v7364, %v7382
        %7384 = vmatmul.bf16.gmra.mxu0 %v1033
        %v7385 = vpop.f32.mrf.mxu0
        %v7386 = vadd.f32 %v7367, %v7385
        %v7387 = vpop.f32.mrf.mxu0
        %v7388 = vadd.f32 %v7369, %v7387
        %7389 = vdwg.mxu0
        %7390 = vmatpush.bf16.msra.mxu0 %v4700
        %7391 = vmatpush.bf16.msra.mxu0 %v4694
        %7392 = vmatpush.bf16.msra.mxu0 %v4688
        %7393 = vmatpush.bf16.msra.mxu0 %v4682
        %7394 = vmatpush.bf16.msra.mxu0 %v4676
        %7395 = vmatpush.bf16.msra.mxu0 %v4670
        %7396 = vmatpush.bf16.msra.mxu0 %v4664
        %7397 = vmatpush.bf16.msra.mxu0 %v4658
        %7398 = vmatmul.bf16.gmra.mxu0 %v1018
        %v7399 = vpop.f32.mrf.mxu0
        %v7400 = vadd.f32 %v7381, %v7399
        %v7401 = vpop.f32.mrf.mxu0
        %v7402 = vadd.f32 %v7383, %v7401
        %7403 = vmatmul.bf16.gmra.mxu0 %v1034
        %v7404 = vpop.f32.mrf.mxu0
        %v7405 = vadd.f32 %v7386, %v7404
        %v7406 = vpop.f32.mrf.mxu0
        %v7407 = vadd.f32 %v7388, %v7406
        %7408 = vdwg.mxu0
        %7409 = vmatpush.bf16.msra.mxu0 %v4748
        %7410 = vmatpush.bf16.msra.mxu0 %v4742
        %7411 = vmatpush.bf16.msra.mxu0 %v4736
        %7412 = vmatpush.bf16.msra.mxu0 %v4730
        %7413 = vmatpush.bf16.msra.mxu0 %v4724
        %7414 = vmatpush.bf16.msra.mxu0 %v4718
        %7415 = vmatpush.bf16.msra.mxu0 %v4712
        %7416 = vmatpush.bf16.msra.mxu0 %v4706
        %7417 = vmatmul.bf16.gmra.mxu0 %v1019
        %v7418 = vpop.f32.mrf.mxu0
        %v7419 = vadd.f32 %v7400, %v7418
        %v7420 = vpop.f32.mrf.mxu0
        %v7421 = vadd.f32 %v7402, %v7420
        %7422 = vmatmul.bf16.gmra.mxu0 %v1035
        %v7423 = vpop.f32.mrf.mxu0
        %v7424 = vadd.f32 %v7405, %v7423
        %v7425 = vpop.f32.mrf.mxu0
        %v7426 = vadd.f32 %v7407, %v7425
        %7427 = vdwg.mxu0
        %7428 = vmatpush.bf16.msra.mxu0 %v4796
        %7429 = vmatpush.bf16.msra.mxu0 %v4790
        %7430 = vmatpush.bf16.msra.mxu0 %v4784
        %7431 = vmatpush.bf16.msra.mxu0 %v4778
        %7432 = vmatpush.bf16.msra.mxu0 %v4772
        %7433 = vmatpush.bf16.msra.mxu0 %v4766
        %7434 = vmatpush.bf16.msra.mxu0 %v4760
        %7435 = vmatpush.bf16.msra.mxu0 %v4754
        %7436 = vmatmul.bf16.gmra.mxu0 %v1020
        %v7437 = vpop.f32.mrf.mxu0
        %v7438 = vadd.f32 %v7419, %v7437
        %v7439 = vpop.f32.mrf.mxu0
        %v7440 = vadd.f32 %v7421, %v7439
        %7441 = vmatmul.bf16.gmra.mxu0 %v1036
        %v7442 = vpop.f32.mrf.mxu0
        %v7443 = vadd.f32 %v7424, %v7442
        %v7444 = vpop.f32.mrf.mxu0
        %v7445 = vadd.f32 %v7426, %v7444
        %7446 = vdwg.mxu0
        %7447 = vmatpush.bf16.msra.mxu0 %v4844
        %7448 = vmatpush.bf16.msra.mxu0 %v4838
        %7449 = vmatpush.bf16.msra.mxu0 %v4832
        %7450 = vmatpush.bf16.msra.mxu0 %v4826
        %7451 = vmatpush.bf16.msra.mxu0 %v4820
        %7452 = vmatpush.bf16.msra.mxu0 %v4814
        %7453 = vmatpush.bf16.msra.mxu0 %v4808
        %7454 = vmatpush.bf16.msra.mxu0 %v4802
        %7455 = vmatmul.bf16.gmra.mxu0 %v1021
        %v7456 = vpop.f32.mrf.mxu0
        %v7457 = vadd.f32 %v7438, %v7456
        %v7458 = vpop.f32.mrf.mxu0
        %v7459 = vadd.f32 %v7440, %v7458
        %7460 = vmatmul.bf16.gmra.mxu0 %v1037
        %v7461 = vpop.f32.mrf.mxu0
        %v7462 = vadd.f32 %v7443, %v7461
        %v7463 = vpop.f32.mrf.mxu0
        %v7464 = vadd.f32 %v7445, %v7463
        %7465 = vdwg.mxu0
        %7466 = vmatpush.bf16.msra.mxu0 %v4892
        %7467 = vmatpush.bf16.msra.mxu0 %v4886
        %7468 = vmatpush.bf16.msra.mxu0 %v4880
        %7469 = vmatpush.bf16.msra.mxu0 %v4874
        %7470 = vmatpush.bf16.msra.mxu0 %v4868
        %7471 = vmatpush.bf16.msra.mxu0 %v4862
        %7472 = vmatpush.bf16.msra.mxu0 %v4856
        %7473 = vmatpush.bf16.msra.mxu0 %v4850
        %7474 = vmatmul.bf16.gmra.mxu0 %v1022
        %v7475 = vpop.f32.mrf.mxu0
        %v7476 = vadd.f32 %v7457, %v7475
        %v7477 = vpop.f32.mrf.mxu0
        %v7478 = vadd.f32 %v7459, %v7477
        %7479 = vmatmul.bf16.gmra.mxu0 %v1038
        %v7480 = vpop.f32.mrf.mxu0
        %v7481 = vadd.f32 %v7462, %v7480
        %v7482 = vpop.f32.mrf.mxu0
        %v7483 = vadd.f32 %v7464, %v7482
        %7484 = vdwg.mxu0
        %v7485 = vmax.f32 %v5956, 0.0
        %v7486 = vmax.f32 %v6260, 0.0
        %v7487 = vmax.f32 %v6564, 0.0
        %v7488 = vmax.f32 %v6868, 0.0
        %v7489 = vmax.f32 %v7172, 0.0
        %v7490 = vmax.f32 %v7476, 0.0
        %v7491 = vmax.f32 %v5958, 0.0
        %v7492 = vmax.f32 %v6262, 0.0
        %v7493 = vmax.f32 %v6566, 0.0
        %v7494 = vmax.f32 %v6870, 0.0
        %v7495 = vmax.f32 %v7174, 0.0
        %v7496 = vmax.f32 %v7478, 0.0
        %v7497 = vmax.f32 %v5961, 0.0
        %v7498 = vmax.f32 %v6265, 0.0
        %v7499 = vmax.f32 %v6569, 0.0
        %v7500 = vmax.f32 %v6873, 0.0
        %v7501 = vmax.f32 %v7177, 0.0
        %v7502 = vmax.f32 %v7481, 0.0
        %v7503 = vmax.f32 %v5963, 0.0
        %v7504 = vmax.f32 %v6267, 0.0
        %v7505 = vmax.f32 %v6571, 0.0
        %v7506 = vmax.f32 %v6875, 0.0
        %v7507 = vmax.f32 %v7179, 0.0
        %v7508 = vmax.f32 %v7483, 0.0
        %v7509 = vpack.c.bf16 %v7486, %v7485
        %v7510 = vpack.c.bf16 %v7488, %v7487
        %v7511 = vpack.c.bf16 %v7490, %v7489
        %v7512 = vpack.c.bf16 %v7492, %v7491
        %v7513 = vpack.c.bf16 %v7494, %v7493
        %v7514 = vpack.c.bf16 %v7496, %v7495
        %v7515 = vpack.c.bf16 %v7498, %v7497
        %v7516 = vpack.c.bf16 %v7500, %v7499
        %v7517 = vpack.c.bf16 %v7502, %v7501
        %v7518 = vpack.c.bf16 %v7504, %v7503
        %v7519 = vpack.c.bf16 %v7506, %v7505
        %v7520 = vpack.c.bf16 %v7508, %v7507
        %7521 = vst [vmem:[%s291] sm:$0xff] %v7509
        %7522 = vst [vmem:[%s291 + $0x8] sm:$0xff] %v7510
        %7523 = vst [vmem:[%s291 + $0x10] sm:$0xff] %v7511
        %7524 = vst [vmem:[%s291 + $0x18] sm:$0xff] %v7512
        %7525 = vst [vmem:[%s291 + $0x20] sm:$0xff] %v7513
        %7526 = vst [vmem:[%s291 + $0x28] sm:$0xff] %v7514
        %7527 = vst [vmem:[%s291 + $0x30] sm:$0xff] %v7515
        %7528 = vst [vmem:[%s291 + $0x38] sm:$0xff] %v7516
        %7529 = vst [vmem:[%s291 + $0x40] sm:$0xff] %v7517
        %7530 = vst [vmem:[%s291 + $0x48] sm:$0xff] %v7518
        %7531 = vst [vmem:[%s291 + $0x50] sm:$0xff] %v7519
        %7532 = vst [vmem:[%s291 + $0x58] sm:$0xff] %v7520
        %s7533 = smul.u32 4, %s19
        %p7534 = scmp.lt.s32.totalorder %s7533, 7
        %s7535 = scalar_select %p7534, %s7533, 7
        %s7536 = smul.addr %s7535, 6
        %s7537 = smul.addr %s7536, 4
        %s7538 = scalar_lea.vmem %s5, %s7537
        // Predicated region
        $region57: #{dsta_forward.1} parent=39 // pred_check
          %p7539 = pneg %p147
        $region58: #{dsta_forward.1} parent=39 // pred_check_branch
          %7541 = sbr.rel (%p7539) target = $region60
        $region59: #{dsta_forward.1} parent=39 // pred_region
          %s7542 = smul.u32 4, %s19
        $region60: #{dsta_forward.1} parent=39 // pred_fallthru
          _
      $region40: #{dsta_forward.1} parent=5 // pred_fallthru
        _
      %p7543 = scmp.le.s32.totalorder 2, %s14
      // Predicated region
      $region61: #{dsta_forward.1} parent=5 // pred_check
        %p7544 = pneg %p7543
      $region62: #{dsta_forward.1} parent=5 // pred_check_branch
        %7546 = sbr.rel (%p7544) target = $region64
      $region63: #{dsta_forward.1} parent=5 // pred_region
        %s7547 = ssub.s32 %s14, 2
        // Predicated region
        $region65: #{dsta_forward.1} parent=63 // pred_check
          %p7548 = pneg %p153
        $region66: #{dsta_forward.1} parent=63 // pred_check_branch
          %7550 = sbr.rel (%p7548) target = $region68
        $region67: #{dsta_forward.1} parent=63 // pred_region
          %s7551 = smul.u32 4, %s20
          %p7552 = scmp.lt.s32.totalorder %s7551, 7
          %s7553 = scalar_select %p7552, %s7551, 7
          %s7554 = smul.addr %s7553, 6
          %s7555 = smul.addr %s7554, 4
          %s7556 = scalar_lea.vmem %s5, %s7555
        $region68: #{dsta_forward.1} parent=63 // pred_fallthru
          _
      $region64: #{dsta_forward.1} parent=5 // pred_fallthru
        _
    $region6: #{dsta_forward.1} parent=1 // loop_footer
      %s18 = sadd.s32 1, %s14
    $region7: #{dsta_forward.1} parent=1 // loop_footer_branch
      %13 = sbr.rel target = $region3
    $region8: #{dsta_forward.1} parent=1 // loop_exit
      _
    %7557 = vsyncpa [#allocation3], 1
    %s7558 = scalar_lea.sflag [#allocation3], 1
    %7559 = vsyncpa %s7558, 1
    %7560 = vsyncpa [#allocation5], 1
    %7561 = vsyncpa [#allocation8], 1

</llo_original>
